<compile_context>
chip_gen: v5e
topology: v5e:2x2
jax: 0.10.0
libtpu: 0.0.40
codegen_flags: <defaults>
</compile_context>

<pallas_src>
import functools

import jax
import jax.numpy as jnp
from jax import lax
from jax.experimental import pallas as pl
from jax.experimental.pallas import tpu as pltpu

_CK = 8                 # channel-reduction chunk (sublane granularity)
_LANE = 128             # TPU lane width
_MAX_LANE_TILE = 512    # lane-tile cap for the 1x1 / apply kernels
_BAND_TILE = 512        # in-kernel band tile for the 3x3 (bounds vreg pressure)
_EPS = 1e-5


def _round_up(x, m):
    return (x + m - 1) // m * m


def _pick_lane_tile(lp):
    """Largest multiple of 128 that divides Lp and is <= _MAX_LANE_TILE."""
    q = lp // _LANE
    for d in range(min(q, _MAX_LANE_TILE // _LANE), 0, -1):
        if q % d == 0:
            return _LANE * d
    return _LANE


def _cparams(n_axes):
    return pltpu.CompilerParams(
        dimension_semantics=("parallel",) * n_axes,
        vmem_limit_bytes=32 * 1024 * 1024,
    )


# ----------------------------------------------------------------------------
# Kernels
# ----------------------------------------------------------------------------
def _adder1x1_kernel(x_ref, w_ref, mask_ref, o_ref, stat_ref, *, n_chunks, ck):
    """1x1 SAD conv on a [C_in, TL] tile + fused partial BN stats.

    x_ref:    [C_in_pad, TL]
    w_ref:    [NC, 1, C_out_pad, CK]   (chunk-major, resident across the grid)
    mask_ref: [1, TL]                  1.0 at valid pixels, 0.0 at padding
    o_ref:    [C_out_pad, TL]          o = - sum_ci |x - w|
    stat_ref: [C_out_pad, 2]           per-tile (sum, sumsq) over valid pixels
    """
    cout, tl = o_ref.shape

    def chunk_body(c, acc):
        c0 = pl.multiple_of(c * ck, ck)
        xc = x_ref[pl.ds(c0, ck), :]          # [ck, TL]  (sublane-broadcast side)
        wc = w_ref[c, 0]                      # [Cout, ck] (lane-broadcast side)
        for j in range(ck):                   # bounded static unroll
            acc = acc - jnp.abs(xc[j:j + 1, :] - wc[:, j:j + 1])
        return acc

    acc = lax.fori_loop(0, n_chunks, chunk_body,
                        jnp.zeros((cout, tl), jnp.float32))
    o_ref[...] = acc

    am = acc * mask_ref[...]
    stat_ref[:, 0:1] = jnp.sum(am, axis=1, keepdims=True)
    stat_ref[:, 1:2] = jnp.sum(am * acc, axis=1, keepdims=True)


def _adder3x3_kernel(x_ref, w_ref, mask_ref, o_ref, stat_ref, *,
                     n_chunks, ck, wp, band0, band_len, band_tile):
    """3x3 SAD conv via implicit im2col (9 flat-shifted windows of the padded
    plane) for one image, plus fused partial BN stats.

    x_ref:    [C_in_pad, Lp]   padded flat plane (borders are exact zeros)
    w_ref:    [NC, 9, C_out_pad, CK]
    mask_ref: [1, Lp]
    o_ref:    [C_out_pad, Lp]
    stat_ref: [C_out_pad, 2]
    """
    cout, lp = o_ref.shape
    offsets = [(dy - 1) * wp + (dx - 1) for dy in range(3) for dx in range(3)]

    # Zero the plane; the computed band is overwritten below.  Positions
    # outside the valid interior are garbage/zero and are masked / cropped.
    o_ref[...] = jnp.zeros((cout, lp), jnp.float32)

    s1 = jnp.zeros((cout, 1), jnp.float32)
    s2 = jnp.zeros((cout, 1), jnp.float32)

    n_bt = -(-band_len // band_tile)
    for bt in range(n_bt):                    # static band tiling
        l0 = bt * band_tile
        w_cur = min(band_tile, band_len - l0)
        acc = jnp.zeros((cout, w_cur), jnp.float32)
        for t, off in enumerate(offsets):     # static: 9 taps
            base = band0 + off + l0

            def chunk_body(c, acc, _base=base, _t=t, _w=w_cur):
                c0 = pl.multiple_of(c * ck, ck)
                xc = x_ref[pl.ds(c0, ck), pl.ds(_base, _w)]   # [ck, w]
                wc = w_ref[c, _t]                             # [Cout, ck]
                for j in range(ck):
                    acc = acc - jnp.abs(xc[j:j + 1, :] - wc[:, j:j + 1])
                return acc

            acc = lax.fori_loop(0, n_chunks, chunk_body, acc)

        o_ref[:, pl.ds(band0 + l0, w_cur)] = acc
        mb = mask_ref[:, pl.ds(band0 + l0, w_cur)]            # [1, w]
        am = acc * mb
        s1 = s1 + jnp.sum(am, axis=1, keepdims=True)
        s2 = s2 + jnp.sum(am * acc, axis=1, keepdims=True)

    stat_ref[:, 0:1] = s1
    stat_ref[:, 1:2] = s2


def _bn_relu_mask_kernel(x_ref, scale_ref, shift_ref, mask_ref, o_ref):
    """y = relu(scale * x + shift) * mask  (mask re-creates the zero padding)."""
    y = x_ref[...] * scale_ref[...] + shift_ref[...]
    o_ref[...] = jnp.maximum(y, 0.0) * mask_ref[...]


def _bn_add_relu_kernel(x_ref, id_ref, scale_ref, shift_ref, o_ref):
    """Fused epilogue: y = relu(scale * x + shift + identity)."""
    y = x_ref[...] * scale_ref[...] + shift_ref[...] + id_ref[...]
    o_ref[...] = jnp.maximum(y, 0.0)


# ----------------------------------------------------------------------------
# pallas_call wrappers
# ----------------------------------------------------------------------------
def adder_conv1x1(x, w_chunks, mask, lane_tile):
    """x: [N, Cin_pad, Lp], w_chunks: [NC, 1, Cout_pad, CK], mask: [1, Lp]."""
    n, cinp, lp = x.shape
    nc, t, coutp, ck = w_chunks.shape
    nlt = lp // lane_tile
    flops = 3 * n * lp * cinp * coutp
    bytes_acc = 4 * (n * cinp * lp + w_chunks.size + n * coutp * lp
                     + n * nlt * coutp * 2)

    out, stats = pl.pallas_call(
        functools.partial(_adder1x1_kernel, n_chunks=nc, ck=ck),
        grid=(n, nlt),
        in_specs=[
            pl.BlockSpec((None, cinp, lane_tile), lambda i, l: (i, 0, l)),
            pl.BlockSpec((nc, t, coutp, ck), lambda i, l: (0, 0, 0, 0)),
            pl.BlockSpec((1, lane_tile), lambda i, l: (0, l)),
        ],
        out_specs=(
            pl.BlockSpec((None, coutp, lane_tile), lambda i, l: (i, 0, l)),
            pl.BlockSpec((None, None, coutp, 2), lambda i, l: (i, l, 0, 0)),
        ),
        out_shape=(
            jax.ShapeDtypeStruct((n, coutp, lp), jnp.float32),
            jax.ShapeDtypeStruct((n, nlt, coutp, 2), jnp.float32),
        ),
        compiler_params=_cparams(2),
        cost_estimate=pl.CostEstimate(flops=int(flops), transcendentals=0,
                                      bytes_accessed=int(bytes_acc)),
    )(x, w_chunks, mask)
    return out, jnp.sum(stats, axis=(0, 1))          # [Cout_pad, 2]


def adder_conv3x3(x, w_chunks, mask, hp, wp):
    """x: [N, Cin_pad, Lp] (padded planes), w_chunks: [NC, 9, Cout_pad, CK]."""
    n, cinp, lp = x.shape
    nc, t, coutp, ck = w_chunks.shape
    band0 = wp + 1
    band_len = hp * wp - 2 * (wp + 1)
    flops = 3 * n * band_len * 9 * cinp * coutp
    bytes_acc = 4 * (n * cinp * lp + w_chunks.size + n * coutp * lp
                     + n * coutp * 2)

    out, stats = pl.pallas_call(
        functools.partial(_adder3x3_kernel, n_chunks=nc, ck=ck, wp=wp,
                          band0=band0, band_len=band_len,
                          band_tile=_BAND_TILE),
        grid=(n,),
        in_specs=[
            pl.BlockSpec((None, cinp, lp), lambda i: (i, 0, 0)),
            pl.BlockSpec((nc, t, coutp, ck), lambda i: (0, 0, 0, 0)),
            pl.BlockSpec((1, lp), lambda i: (0, 0)),
        ],
        out_specs=(
            pl.BlockSpec((None, coutp, lp), lambda i: (i, 0, 0)),
            pl.BlockSpec((None, coutp, 2), lambda i: (i, 0, 0)),
        ),
        out_shape=(
            jax.ShapeDtypeStruct((n, coutp, lp), jnp.float32),
            jax.ShapeDtypeStruct((n, coutp, 2), jnp.float32),
        ),
        compiler_params=_cparams(1),
        cost_estimate=pl.CostEstimate(flops=int(flops), transcendentals=0,
                                      bytes_accessed=int(bytes_acc)),
    )(x, w_chunks, mask)
    return out, jnp.sum(stats, axis=0)               # [Cout_pad, 2]


def bn_relu_mask(x, scale, shift, mask, lane_tile):
    n, c, lp = x.shape
    nlt = lp // lane_tile
    return pl.pallas_call(
        _bn_relu_mask_kernel,
        grid=(n, nlt),
        in_specs=[
            pl.BlockSpec((None, c, lane_tile), lambda i, l: (i, 0, l)),
            pl.BlockSpec((c, 1), lambda i, l: (0, 0)),
            pl.BlockSpec((c, 1), lambda i, l: (0, 0)),
            pl.BlockSpec((1, lane_tile), lambda i, l: (0, l)),
        ],
        out_specs=pl.BlockSpec((None, c, lane_tile), lambda i, l: (i, 0, l)),
        out_shape=jax.ShapeDtypeStruct((n, c, lp), jnp.float32),
        compiler_params=_cparams(2),
    )(x, scale, shift, mask)


def bn_add_relu(x, identity, scale, shift, lane_tile):
    n, c, lp = x.shape
    nlt = lp // lane_tile
    return pl.pallas_call(
        _bn_add_relu_kernel,
        grid=(n, nlt),
        in_specs=[
            pl.BlockSpec((None, c, lane_tile), lambda i, l: (i, 0, l)),
            pl.BlockSpec((None, c, lane_tile), lambda i, l: (i, 0, l)),
            pl.BlockSpec((c, 1), lambda i, l: (0, 0)),
            pl.BlockSpec((c, 1), lambda i, l: (0, 0)),
        ],
        out_specs=pl.BlockSpec((None, c, lane_tile), lambda i, l: (i, 0, l)),
        out_shape=jax.ShapeDtypeStruct((n, c, lp), jnp.float32),
        compiler_params=_cparams(2),
    )(x, identity, scale, shift)


# ----------------------------------------------------------------------------
# Host-side glue: weight prep, BN affine, Bottleneck forward
# ----------------------------------------------------------------------------
def _prep_weight(w, cinp, coutp, ck):
    """[Cout, Cin, kh, kw] -> chunk-major [Cin_pad//ck, kh*kw, Cout_pad, ck]."""
    co, ci, kh, kw = w.shape
    taps = kh * kw
    w = jnp.pad(w, ((0, coutp - co), (0, cinp - ci), (0, 0), (0, 0)))
    return w.reshape(coutp, cinp // ck, ck, taps).transpose(1, 3, 0, 2)


def _bn_affine(stat_sums, gamma, beta, count, cpad, eps=_EPS):
    """Fold batch stats into per-channel scale/shift (padded channels -> 0)."""
    g = jnp.pad(gamma, (0, cpad - gamma.shape[0]))
    b = jnp.pad(beta, (0, cpad - beta.shape[0]))
    mean = stat_sums[:, 0] / count
    var = jnp.maximum(stat_sums[:, 1] / count - mean * mean, 0.0)
    scale = g * lax.rsqrt(var + eps)
    shift = b - mean * scale
    return scale.reshape(cpad, 1), shift.reshape(cpad, 1)


def init_bottleneck_params(key, inplanes, planes, expansion=4):
    k1, k2, k3 = jax.random.split(key, 3)
    return {
        # Adder2D weights, PyTorch layout [Cout, Cin, kh, kw]
        "w1": jax.random.normal(k1, (planes, inplanes, 1, 1), jnp.float32) * 0.1,
        "w2": jax.random.normal(k2, (planes, planes, 3, 3), jnp.float32) * 0.1,
        "w3": jax.random.normal(k3, (planes * expansion, planes, 1, 1),
                                jnp.float32) * 0.1,
        # BatchNorm2d defaults: gamma=1, beta=0
        "g1": jnp.ones((planes,), jnp.float32),
        "b1": jnp.zeros((planes,), jnp.float32),
        "g2": jnp.ones((planes,), jnp.float32),
        "b2": jnp.zeros((planes,), jnp.float32),
        "g3": jnp.ones((planes * expansion,), jnp.float32),
        "b3": jnp.zeros((planes * expansion,), jnp.float32),
    }


def bottleneck_forward(params, x_nchw, stride=1, eps=_EPS):
    """Bottleneck forward (downsample=None => inplanes == planes*4, stride=1)."""
    # TODO(synk): stride > 1 and the downsample branch are not implemented.
    assert stride == 1
    n, cin, h, w = x_nchw.shape
    planes = params["w2"].shape[0]
    c3 = planes * 4
    assert cin == c3, "downsample=None requires inplanes == planes * expansion"

    hp, wp = h + 2, w + 2
    hpwp = hp * wp
    lp = _round_up(hpwp, _LANE)
    lane_tile = _pick_lane_tile(lp)

    cinp = _round_up(cin, _CK)
    c1p = _round_up(planes, _CK)
    c2p = c1p
    c3p = _round_up(c3, _CK)
    count = float(n * h * w)

    # One layout for the whole block: [N, C_pad, Lp] (padded flat plane,
    # channels-first, lane-aligned).  NCHW order is preserved => no transposes.
    xp = jnp.pad(x_nchw, ((0, 0), (0, cinp - cin), (1, 1), (1, 1)))
    xp = xp.reshape(n, cinp, hpwp)
    xp = jnp.pad(xp, ((0, 0), (0, 0), (0, lp - hpwp)))

    ii = jnp.arange(hp)
    jj = jnp.arange(wp)
    valid = ((ii >= 1) & (ii <= h))[:, None] & ((jj >= 1) & (jj <= w))[None, :]
    mask = jnp.pad(valid.astype(jnp.float32).reshape(1, hpwp),
                   ((0, 0), (0, lp - hpwp)))

    w1 = _prep_weight(params["w1"], cinp, c1p, _CK)
    w2 = _prep_weight(params["w2"], c1p, c2p, _CK)
    w3 = _prep_weight(params["w3"], c2p, c3p, _CK)

    # conv1 (1x1) + fused partial batch stats -> bn1 + relu (+ re-zero padding)
    o1, st1 = adder_conv1x1(xp, w1, mask, lane_tile)
    s1, t1 = _bn_affine(st1, params["g1"], params["b1"], count, c1p, eps)
    a1 = bn_relu_mask(o1, s1, t1, mask, lane_tile)

    # conv2 (3x3, implicit im2col over the padded plane) -> bn2 + relu
    o2, st2 = adder_conv3x3(a1, w2, mask, hp, wp)
    s2, t2 = _bn_affine(st2, params["g2"], params["b2"], count, c2p, eps)
    a2 = bn_relu_mask(o2, s2, t2, mask, lane_tile)

    # conv3 (1x1) -> bn3 + residual add + relu (fused epilogue)
    o3, st3 = adder_conv1x1(a2, w3, mask, lane_tile)
    s3, t3 = _bn_affine(st3, params["g3"], params["b3"], count, c3p, eps)
    out = bn_add_relu(o3, xp, s3, t3, lane_tile)

    # Crop padded flat planes back to NCHW.
    out = out[:, :c3, :hpwp].reshape(n, c3, hp, wp)[:, :, 1:h + 1, 1:w + 1]
    return out


# ----------------------------------------------------------------------------
if __name__ == "__main__":
    # Small, residual-compatible config: inplanes = planes * expansion, stride=1
    batch, inplanes, planes, spatial = 2, 16, 4, 8
    key = jax.random.PRNGKey(0)
    kx, kp = jax.random.split(key)

    x = jax.random.normal(kx, (batch, inplanes, spatial, spatial), jnp.float32)
    params = init_bottleneck_params(kp, inplanes, planes)

    fwd = jax.jit(functools.partial(bottleneck_forward, stride=1))
    y = jax.block_until_ready(fwd(params, x))

    assert y.shape == (batch, planes * 4, spatial, spatial)
    assert bool(jnp.all(y >= 0.0))  # final ReLU
    print("KERNEL_OK")
</pallas_src>

<mosaic_0001>
module attributes {stable_mosaic.version = 11 : i64} {
  func.func @_adder1x1_kernel(%arg0: i32, %arg1: i32, %arg2: memref<1x16x128xf32, #tpu.memory_space<vmem>>, %arg3: memref<2x1x8x8xf32, #tpu.memory_space<vmem>>, %arg4: memref<1x128xf32, #tpu.memory_space<vmem>>, %arg5: memref<1x8x128xf32, #tpu.memory_space<vmem>>, %arg6: memref<1x1x8x2xf32, #tpu.memory_space<vmem>>) attributes {dimension_semantics = [#tpu.dimension_semantics<parallel>, #tpu.dimension_semantics<parallel>], iteration_bounds = array<i64: 2, 1>, scalar_prefetch = 0 : i64, scratch_operands = 0 : i64, tpu.core_type = #tpu.core_type<tc>, window_params = [{transform_indices = @transform_0, window_bounds = array<i64: 1, 16, 128>}, {pipeline_mode = #tpu.pipeline_mode<synchronous>, transform_indices = @transform_1, window_bounds = array<i64: 2, 1, 8, 8>}, {transform_indices = @transform_2, window_bounds = array<i64: 1, 128>}, {transform_indices = @transform_3, window_bounds = array<i64: 1, 8, 128>}, {transform_indices = @transform_4, window_bounds = array<i64: 1, 1, 8, 2>}]} {
    %cst = arith.constant 0.000000e+00 : f32
    %0 = vector.broadcast %cst : f32 to vector<8x128xf32>
    %c0_i32 = arith.constant 0 : i32
    %c2_i32 = arith.constant 2 : i32
    %1 = arith.addi %c0_i32, %c2_i32 : i32
    %c1_i32 = arith.constant 1 : i32
    %2 = scf.for %arg7 = %c0_i32 to %1 step %c1_i32 iter_args(%arg8 = %0) -> (vector<8x128xf32>)  : i32 {
      %c8_i32 = arith.constant 8 : i32
      %20 = arith.muli %arg7, %c8_i32 : i32
      %21 = tpu.assume_multiple %20, 8 : i32
      %c0_14 = arith.constant 0 : index
      %22 = arith.index_cast %21 : i32 to index
      %c0_15 = arith.constant 0 : index
      %23 = vector.load %arg2[%c0_14, %22, %c0_15] : memref<1x16x128xf32, #tpu.memory_space<vmem>>, vector<1x8x128xf32>
      %24 = vector.shape_cast %23 : vector<1x8x128xf32> to vector<8x128xf32>
      %25 = arith.index_cast %arg7 : i32 to index
      %c0_16 = arith.constant 0 : index
      %c0_17 = arith.constant 0 : index
      %c0_18 = arith.constant 0 : index
      %26 = vector.load %arg3[%25, %c0_16, %c0_17, %c0_18] : memref<2x1x8x8xf32, #tpu.memory_space<vmem>>, vector<1x1x8x8xf32>
      %27 = vector.shape_cast %26 : vector<1x1x8x8xf32> to vector<8x8xf32>
      %28 = vector.extract_strided_slice %24 {offsets = [0, 0], sizes = [1, 128], strides = [1, 1]} : vector<8x128xf32> to vector<1x128xf32>
      %29 = vector.extract_strided_slice %27 {offsets = [0, 0], sizes = [8, 1], strides = [1, 1]} : vector<8x8xf32> to vector<8x1xf32>
      %30 = vector.broadcast %28 : vector<1x128xf32> to vector<8x128xf32>
      %31 = vector.broadcast %29 : vector<8x1xf32> to vector<8x128xf32>
      %32 = arith.subf %30, %31 : vector<8x128xf32>
      %33 = math.absf %32 : vector<8x128xf32>
      %34 = arith.subf %arg8, %33 : vector<8x128xf32>
      %35 = vector.extract_strided_slice %24 {offsets = [1, 0], sizes = [1, 128], strides = [1, 1]} : vector<8x128xf32> to vector<1x128xf32>
      %36 = vector.extract_strided_slice %27 {offsets = [0, 1], sizes = [8, 1], strides = [1, 1]} : vector<8x8xf32> to vector<8x1xf32>
      %37 = vector.broadcast %35 : vector<1x128xf32> to vector<8x128xf32>
      %38 = vector.broadcast %36 : vector<8x1xf32> to vector<8x128xf32>
      %39 = arith.subf %37, %38 : vector<8x128xf32>
      %40 = math.absf %39 : vector<8x128xf32>
      %41 = arith.subf %34, %40 : vector<8x128xf32>
      %42 = vector.extract_strided_slice %24 {offsets = [2, 0], sizes = [1, 128], strides = [1, 1]} : vector<8x128xf32> to vector<1x128xf32>
      %43 = vector.extract_strided_slice %27 {offsets = [0, 2], sizes = [8, 1], strides = [1, 1]} : vector<8x8xf32> to vector<8x1xf32>
      %44 = vector.broadcast %42 : vector<1x128xf32> to vector<8x128xf32>
      %45 = vector.broadcast %43 : vector<8x1xf32> to vector<8x128xf32>
      %46 = arith.subf %44, %45 : vector<8x128xf32>
      %47 = math.absf %46 : vector<8x128xf32>
      %48 = arith.subf %41, %47 : vector<8x128xf32>
      %49 = vector.extract_strided_slice %24 {offsets = [3, 0], sizes = [1, 128], strides = [1, 1]} : vector<8x128xf32> to vector<1x128xf32>
      %50 = vector.extract_strided_slice %27 {offsets = [0, 3], sizes = [8, 1], strides = [1, 1]} : vector<8x8xf32> to vector<8x1xf32>
      %51 = vector.broadcast %49 : vector<1x128xf32> to vector<8x128xf32>
      %52 = vector.broadcast %50 : vector<8x1xf32> to vector<8x128xf32>
      %53 = arith.subf %51, %52 : vector<8x128xf32>
      %54 = math.absf %53 : vector<8x128xf32>
      %55 = arith.subf %48, %54 : vector<8x128xf32>
      %56 = vector.extract_strided_slice %24 {offsets = [4, 0], sizes = [1, 128], strides = [1, 1]} : vector<8x128xf32> to vector<1x128xf32>
      %57 = vector.extract_strided_slice %27 {offsets = [0, 4], sizes = [8, 1], strides = [1, 1]} : vector<8x8xf32> to vector<8x1xf32>
      %58 = vector.broadcast %56 : vector<1x128xf32> to vector<8x128xf32>
      %59 = vector.broadcast %57 : vector<8x1xf32> to vector<8x128xf32>
      %60 = arith.subf %58, %59 : vector<8x128xf32>
      %61 = math.absf %60 : vector<8x128xf32>
      %62 = arith.subf %55, %61 : vector<8x128xf32>
      %63 = vector.extract_strided_slice %24 {offsets = [5, 0], sizes = [1, 128], strides = [1, 1]} : vector<8x128xf32> to vector<1x128xf32>
      %64 = vector.extract_strided_slice %27 {offsets = [0, 5], sizes = [8, 1], strides = [1, 1]} : vector<8x8xf32> to vector<8x1xf32>
      %65 = vector.broadcast %63 : vector<1x128xf32> to vector<8x128xf32>
      %66 = vector.broadcast %64 : vector<8x1xf32> to vector<8x128xf32>
      %67 = arith.subf %65, %66 : vector<8x128xf32>
      %68 = math.absf %67 : vector<8x128xf32>
      %69 = arith.subf %62, %68 : vector<8x128xf32>
      %70 = vector.extract_strided_slice %24 {offsets = [6, 0], sizes = [1, 128], strides = [1, 1]} : vector<8x128xf32> to vector<1x128xf32>
      %71 = vector.extract_strided_slice %27 {offsets = [0, 6], sizes = [8, 1], strides = [1, 1]} : vector<8x8xf32> to vector<8x1xf32>
      %72 = vector.broadcast %70 : vector<1x128xf32> to vector<8x128xf32>
      %73 = vector.broadcast %71 : vector<8x1xf32> to vector<8x128xf32>
      %74 = arith.subf %72, %73 : vector<8x128xf32>
      %75 = math.absf %74 : vector<8x128xf32>
      %76 = arith.subf %69, %75 : vector<8x128xf32>
      %77 = vector.extract_strided_slice %24 {offsets = [7, 0], sizes = [1, 128], strides = [1, 1]} : vector<8x128xf32> to vector<1x128xf32>
      %78 = vector.extract_strided_slice %27 {offsets = [0, 7], sizes = [8, 1], strides = [1, 1]} : vector<8x8xf32> to vector<8x1xf32>
      %79 = vector.broadcast %77 : vector<1x128xf32> to vector<8x128xf32>
      %80 = vector.broadcast %78 : vector<8x1xf32> to vector<8x128xf32>
      %81 = arith.subf %79, %80 : vector<8x128xf32>
      %82 = math.absf %81 : vector<8x128xf32>
      %83 = arith.subf %76, %82 : vector<8x128xf32>
      scf.yield %83 : vector<8x128xf32>
    }
    %c2_i32_0 = arith.constant 2 : i32
    %c0 = arith.constant 0 : index
    %c0_1 = arith.constant 0 : index
    %c0_2 = arith.constant 0 : index
    %3 = vector.load %arg5[%c0, %c0_1, %c0_2] : memref<1x8x128xf32, #tpu.memory_space<vmem>>, vector<1x8x128xf32>
    %4 = vector.shape_cast %3 : vector<1x8x128xf32> to vector<8x128xf32>
    %5 = vector.shape_cast %2 : vector<8x128xf32> to vector<1x8x128xf32>
    tpu.vector_store %arg5[%c0, %c0_1, %c0_2], %5 {strides = array<i32>} : memref<1x8x128xf32, #tpu.memory_space<vmem>>, vector<1x8x128xf32>,
    %c0_3 = arith.constant 0 : index
    %c0_4 = arith.constant 0 : index
    %6 = vector.load %arg4[%c0_3, %c0_4] : memref<1x128xf32, #tpu.memory_space<vmem>>, vector<1x128xf32>
    %7 = vector.broadcast %6 : vector<1x128xf32> to vector<8x128xf32>
    %8 = arith.mulf %2, %7 : vector<8x128xf32>
    %cst_5 = arith.constant dense<0.000000e+00> : vector<8xf32>
    %9 = vector.multi_reduction <add>, %8, %cst_5 [1] : vector<8x128xf32> to vector<8xf32>
    %10 = vector.shape_cast %9 : vector<8xf32> to vector<8x1xf32>
    %c0_6 = arith.constant 0 : index
    %c0_7 = arith.constant 0 : index
    %c0_8 = arith.constant 0 : index
    %c0_9 = arith.constant 0 : index
    %11 = vector.load %arg6[%c0_6, %c0_7, %c0_8, %c0_9] : memref<1x1x8x2xf32, #tpu.memory_space<vmem>>, vector<1x1x8x1xf32>
    %12 = vector.shape_cast %11 : vector<1x1x8x1xf32> to vector<8x1xf32>
    %13 = vector.shape_cast %10 : vector<8x1xf32> to vector<1x1x8x1xf32>
    tpu.vector_store %arg6[%c0_6, %c0_7, %c0_8, %c0_9], %13 {strides = array<i32>} : memref<1x1x8x2xf32, #tpu.memory_space<vmem>>, vector<1x1x8x1xf32>,
    %14 = arith.mulf %8, %2 : vector<8x128xf32>
    %cst_10 = arith.constant dense<0.000000e+00> : vector<8xf32>
    %15 = vector.multi_reduction <add>, %14, %cst_10 [1] : vector<8x128xf32> to vector<8xf32>
    %16 = vector.shape_cast %15 : vector<8xf32> to vector<8x1xf32>
    %c0_11 = arith.constant 0 : index
    %c0_12 = arith.constant 0 : index
    %c0_13 = arith.constant 0 : index
    %c1 = arith.constant 1 : index
    %17 = vector.load %arg6[%c0_11, %c0_12, %c0_13, %c1] : memref<1x1x8x2xf32, #tpu.memory_space<vmem>>, vector<1x1x8x1xf32>
    %18 = vector.shape_cast %17 : vector<1x1x8x1xf32> to vector<8x1xf32>
    %19 = vector.shape_cast %16 : vector<8x1xf32> to vector<1x1x8x1xf32>
    tpu.vector_store %arg6[%c0_11, %c0_12, %c0_13, %c1], %19 {strides = array<i32>} : memref<1x1x8x2xf32, #tpu.memory_space<vmem>>, vector<1x1x8x1xf32>,
    return
  }
  func.func @transform_0(%arg0: i32, %arg1: i32) -> (i32, i32, i32) {
    %c0_i32 = arith.constant 0 : i32
    %c0_i32_0 = arith.constant 0 : i32
    return %arg0, %c0_i32, %arg1 : i32, i32, i32
  }
  func.func @transform_1(%arg0: i32, %arg1: i32) -> (i32, i32, i32, i32) {
    %c0_i32 = arith.constant 0 : i32
    %c0_i32_0 = arith.constant 0 : i32
    %c0_i32_1 = arith.constant 0 : i32
    %c0_i32_2 = arith.constant 0 : i32
    %c0_i32_3 = arith.constant 0 : i32
    return %c0_i32, %c0_i32_0, %c0_i32_1, %c0_i32_2 : i32, i32, i32, i32
  }
  func.func @transform_2(%arg0: i32, %arg1: i32) -> (i32, i32) {
    %c0_i32 = arith.constant 0 : i32
    %c0_i32_0 = arith.constant 0 : i32
    return %c0_i32, %arg1 : i32, i32
  }
  func.func @transform_3(%arg0: i32, %arg1: i32) -> (i32, i32, i32) {
    %c0_i32 = arith.constant 0 : i32
    %c0_i32_0 = arith.constant 0 : i32
    return %arg0, %c0_i32, %arg1 : i32, i32, i32
  }
  func.func @transform_4(%arg0: i32, %arg1: i32) -> (i32, i32, i32, i32) {
    %c0_i32 = arith.constant 0 : i32
    %c0_i32_0 = arith.constant 0 : i32
    %c0_i32_1 = arith.constant 0 : i32
    return %arg0, %arg1, %c0_i32, %c0_i32_0 : i32, i32, i32, i32
  }
}

module attributes {stable_mosaic.version = 11 : i64} {
  func.func @_bn_relu_mask_kernel(%arg0: i32, %arg1: i32, %arg2: memref<1x8x128xf32, #tpu.memory_space<vmem>>, %arg3: memref<8x1xf32, #tpu.memory_space<vmem>>, %arg4: memref<8x1xf32, #tpu.memory_space<vmem>>, %arg5: memref<1x128xf32, #tpu.memory_space<vmem>>, %arg6: memref<1x8x128xf32, #tpu.memory_space<vmem>>) attributes {dimension_semantics = [#tpu.dimension_semantics<parallel>, #tpu.dimension_semantics<parallel>], iteration_bounds = array<i64: 2, 1>, scalar_prefetch = 0 : i64, scratch_operands = 0 : i64, tpu.core_type = #tpu.core_type<tc>, window_params = [{transform_indices = @transform_0, window_bounds = array<i64: 1, 8, 128>}, {pipeline_mode = #tpu.pipeline_mode<synchronous>, transform_indices = @transform_1, window_bounds = array<i64: 8, 1>}, {pipeline_mode = #tpu.pipeline_mode<synchronous>, transform_indices = @transform_2, window_bounds = array<i64: 8, 1>}, {transform_indices = @transform_3, window_bounds = array<i64: 1, 128>}, {transform_indices = @transform_4, window_bounds = array<i64: 1, 8, 128>}]} {
    %c0 = arith.constant 0 : index
    %c0_0 = arith.constant 0 : index
    %c0_1 = arith.constant 0 : index
    %0 = vector.load %arg2[%c0, %c0_0, %c0_1] : memref<1x8x128xf32, #tpu.memory_space<vmem>>, vector<1x8x128xf32>
    %1 = vector.shape_cast %0 : vector<1x8x128xf32> to vector<8x128xf32>
    %c0_2 = arith.constant 0 : index
    %c0_3 = arith.constant 0 : index
    %2 = vector.load %arg3[%c0_2, %c0_3] : memref<8x1xf32, #tpu.memory_space<vmem>>, vector<8x1xf32>
    %3 = vector.broadcast %2 : vector<8x1xf32> to vector<8x128xf32>
    %4 = arith.mulf %1, %3 : vector<8x128xf32>
    %c0_4 = arith.constant 0 : index
    %c0_5 = arith.constant 0 : index
    %5 = vector.load %arg4[%c0_4, %c0_5] : memref<8x1xf32, #tpu.memory_space<vmem>>, vector<8x1xf32>
    %6 = vector.broadcast %5 : vector<8x1xf32> to vector<8x128xf32>
    %7 = arith.addf %4, %6 : vector<8x128xf32>
    %cst = arith.constant 0.000000e+00 : f32
    %8 = vector.broadcast %cst : f32 to vector<8x128xf32>
    %9 = arith.maximumf %7, %8 : vector<8x128xf32>
    %c0_6 = arith.constant 0 : index
    %c0_7 = arith.constant 0 : index
    %10 = vector.load %arg5[%c0_6, %c0_7] : memref<1x128xf32, #tpu.memory_space<vmem>>, vector<1x128xf32>
    %11 = vector.broadcast %10 : vector<1x128xf32> to vector<8x128xf32>
    %12 = arith.mulf %9, %11 : vector<8x128xf32>
    %c0_8 = arith.constant 0 : index
    %c0_9 = arith.constant 0 : index
    %c0_10 = arith.constant 0 : index
    %13 = vector.load %arg6[%c0_8, %c0_9, %c0_10] : memref<1x8x128xf32, #tpu.memory_space<vmem>>, vector<1x8x128xf32>
    %14 = vector.shape_cast %13 : vector<1x8x128xf32> to vector<8x128xf32>
    %15 = vector.shape_cast %12 : vector<8x128xf32> to vector<1x8x128xf32>
    tpu.vector_store %arg6[%c0_8, %c0_9, %c0_10], %15 {strides = array<i32>} : memref<1x8x128xf32, #tpu.memory_space<vmem>>, vector<1x8x128xf32>,
    return
  }
  func.func @transform_0(%arg0: i32, %arg1: i32) -> (i32, i32, i32) {
    %c0_i32 = arith.constant 0 : i32
    %c0_i32_0 = arith.constant 0 : i32
    return %arg0, %c0_i32, %arg1 : i32, i32, i32
  }
  func.func @transform_1(%arg0: i32, %arg1: i32) -> (i32, i32) {
    %c0_i32 = arith.constant 0 : i32
    %c0_i32_0 = arith.constant 0 : i32
    %c0_i32_1 = arith.constant 0 : i32
    return %c0_i32, %c0_i32_0 : i32, i32
  }
  func.func @transform_2(%arg0: i32, %arg1: i32) -> (i32, i32) {
    %c0_i32 = arith.constant 0 : i32
    %c0_i32_0 = arith.constant 0 : i32
    %c0_i32_1 = arith.constant 0 : i32
    return %c0_i32, %c0_i32_0 : i32, i32
  }
  func.func @transform_3(%arg0: i32, %arg1: i32) -> (i32, i32) {
    %c0_i32 = arith.constant 0 : i32
    %c0_i32_0 = arith.constant 0 : i32
    return %c0_i32, %arg1 : i32, i32
  }
  func.func @transform_4(%arg0: i32, %arg1: i32) -> (i32, i32, i32) {
    %c0_i32 = arith.constant 0 : i32
    %c0_i32_0 = arith.constant 0 : i32
    return %arg0, %c0_i32, %arg1 : i32, i32, i32
  }
}

module attributes {stable_mosaic.version = 11 : i64} {
  func.func @_adder3x3_kernel(%arg0: i32, %arg1: memref<1x8x128xf32, #tpu.memory_space<vmem>>, %arg2: memref<1x9x8x8xf32, #tpu.memory_space<vmem>>, %arg3: memref<1x128xf32, #tpu.memory_space<vmem>>, %arg4: memref<1x8x128xf32, #tpu.memory_space<vmem>>, %arg5: memref<1x8x2xf32, #tpu.memory_space<vmem>>) attributes {dimension_semantics = [#tpu.dimension_semantics<parallel>], iteration_bounds = array<i64: 2>, scalar_prefetch = 0 : i64, scratch_operands = 0 : i64, tpu.core_type = #tpu.core_type<tc>, window_params = [{transform_indices = @transform_0, window_bounds = array<i64: 1, 8, 128>}, {pipeline_mode = #tpu.pipeline_mode<synchronous>, transform_indices = @transform_1, window_bounds = array<i64: 1, 9, 8, 8>}, {pipeline_mode = #tpu.pipeline_mode<synchronous>, transform_indices = @transform_2, window_bounds = array<i64: 1, 128>}, {transform_indices = @transform_3, window_bounds = array<i64: 1, 8, 128>}, {transform_indices = @transform_4, window_bounds = array<i64: 1, 8, 2>}]} {
    %cst = arith.constant 0.000000e+00 : f32
    %0 = vector.broadcast %cst : f32 to vector<8x128xf32>
    %c0 = arith.constant 0 : index
    %c0_0 = arith.constant 0 : index
    %c0_1 = arith.constant 0 : index
    %1 = vector.load %arg4[%c0, %c0_0, %c0_1] : memref<1x8x128xf32, #tpu.memory_space<vmem>>, vector<1x8x128xf32>
    %2 = vector.shape_cast %1 : vector<1x8x128xf32> to vector<8x128xf32>
    %3 = vector.shape_cast %0 : vector<8x128xf32> to vector<1x8x128xf32>
    tpu.vector_store %arg4[%c0, %c0_0, %c0_1], %3 {strides = array<i32>} : memref<1x8x128xf32, #tpu.memory_space<vmem>>, vector<1x8x128xf32>,
    %cst_2 = arith.constant 0.000000e+00 : f32
    %4 = vector.broadcast %cst_2 : f32 to vector<8x1xf32>
    %cst_3 = arith.constant 0.000000e+00 : f32
    %5 = vector.broadcast %cst_3 : f32 to vector<8x1xf32>
    %cst_4 = arith.constant 0.000000e+00 : f32
    %6 = vector.broadcast %cst_4 : f32 to vector<8x78xf32>
    %c0_i32 = arith.constant 0 : i32
    %c8_i32 = arith.constant 8 : i32
    %7 = arith.muli %c0_i32, %c8_i32 : i32
    %8 = tpu.assume_multiple %7, 8 : i32
    %c0_5 = arith.constant 0 : index
    %9 = arith.index_cast %8 : i32 to index
    %c0_6 = arith.constant 0 : index
    %10 = vector.load %arg1[%c0_5, %9, %c0_6] : memref<1x8x128xf32, #tpu.memory_space<vmem>>, vector<1x8x78xf32>
    %11 = vector.shape_cast %10 : vector<1x8x78xf32> to vector<8x78xf32>
    %12 = arith.index_cast %c0_i32 : i32 to index
    %c0_7 = arith.constant 0 : index
    %c0_8 = arith.constant 0 : index
    %c0_9 = arith.constant 0 : index
    %13 = vector.load %arg2[%12, %c0_7, %c0_8, %c0_9] : memref<1x9x8x8xf32, #tpu.memory_space<vmem>>, vector<1x1x8x8xf32>
    %14 = vector.shape_cast %13 : vector<1x1x8x8xf32> to vector<8x8xf32>
    %15 = vector.extract_strided_slice %11 {offsets = [0, 0], sizes = [1, 78], strides = [1, 1]} : vector<8x78xf32> to vector<1x78xf32>
    %16 = vector.extract_strided_slice %14 {offsets = [0, 0], sizes = [8, 1], strides = [1, 1]} : vector<8x8xf32> to vector<8x1xf32>
    %17 = vector.broadcast %15 : vector<1x78xf32> to vector<8x78xf32>
    %18 = vector.broadcast %16 : vector<8x1xf32> to vector<8x78xf32>
    %19 = arith.subf %17, %18 : vector<8x78xf32>
    %20 = math.absf %19 : vector<8x78xf32>
    %21 = arith.subf %6, %20 : vector<8x78xf32>
    %22 = vector.extract_strided_slice %11 {offsets = [1, 0], sizes = [1, 78], strides = [1, 1]} : vector<8x78xf32> to vector<1x78xf32>
    %23 = vector.extract_strided_slice %14 {offsets = [0, 1], sizes = [8, 1], strides = [1, 1]} : vector<8x8xf32> to vector<8x1xf32>
    %24 = vector.broadcast %22 : vector<1x78xf32> to vector<8x78xf32>
    %25 = vector.broadcast %23 : vector<8x1xf32> to vector<8x78xf32>
    %26 = arith.subf %24, %25 : vector<8x78xf32>
    %27 = math.absf %26 : vector<8x78xf32>
    %28 = arith.subf %21, %27 : vector<8x78xf32>
    %29 = vector.extract_strided_slice %11 {offsets = [2, 0], sizes = [1, 78], strides = [1, 1]} : vector<8x78xf32> to vector<1x78xf32>
    %30 = vector.extract_strided_slice %14 {offsets = [0, 2], sizes = [8, 1], strides = [1, 1]} : vector<8x8xf32> to vector<8x1xf32>
    %31 = vector.broadcast %29 : vector<1x78xf32> to vector<8x78xf32>
    %32 = vector.broadcast %30 : vector<8x1xf32> to vector<8x78xf32>
    %33 = arith.subf %31, %32 : vector<8x78xf32>
    %34 = math.absf %33 : vector<8x78xf32>
    %35 = arith.subf %28, %34 : vector<8x78xf32>
    %36 = vector.extract_strided_slice %11 {offsets = [3, 0], sizes = [1, 78], strides = [1, 1]} : vector<8x78xf32> to vector<1x78xf32>
    %37 = vector.extract_strided_slice %14 {offsets = [0, 3], sizes = [8, 1], strides = [1, 1]} : vector<8x8xf32> to vector<8x1xf32>
    %38 = vector.broadcast %36 : vector<1x78xf32> to vector<8x78xf32>
    %39 = vector.broadcast %37 : vector<8x1xf32> to vector<8x78xf32>
    %40 = arith.subf %38, %39 : vector<8x78xf32>
    %41 = math.absf %40 : vector<8x78xf32>
    %42 = arith.subf %35, %41 : vector<8x78xf32>
    %43 = vector.extract_strided_slice %11 {offsets = [4, 0], sizes = [1, 78], strides = [1, 1]} : vector<8x78xf32> to vector<1x78xf32>
    %44 = vector.extract_strided_slice %14 {offsets = [0, 4], sizes = [8, 1], strides = [1, 1]} : vector<8x8xf32> to vector<8x1xf32>
    %45 = vector.broadcast %43 : vector<1x78xf32> to vector<8x78xf32>
    %46 = vector.broadcast %44 : vector<8x1xf32> to vector<8x78xf32>
    %47 = arith.subf %45, %46 : vector<8x78xf32>
    %48 = math.absf %47 : vector<8x78xf32>
    %49 = arith.subf %42, %48 : vector<8x78xf32>
    %50 = vector.extract_strided_slice %11 {offsets = [5, 0], sizes = [1, 78], strides = [1, 1]} : vector<8x78xf32> to vector<1x78xf32>
    %51 = vector.extract_strided_slice %14 {offsets = [0, 5], sizes = [8, 1], strides = [1, 1]} : vector<8x8xf32> to vector<8x1xf32>
    %52 = vector.broadcast %50 : vector<1x78xf32> to vector<8x78xf32>
    %53 = vector.broadcast %51 : vector<8x1xf32> to vector<8x78xf32>
    %54 = arith.subf %52, %53 : vector<8x78xf32>
    %55 = math.absf %54 : vector<8x78xf32>
    %56 = arith.subf %49, %55 : vector<8x78xf32>
    %57 = vector.extract_strided_slice %11 {offsets = [6, 0], sizes = [1, 78], strides = [1, 1]} : vector<8x78xf32> to vector<1x78xf32>
    %58 = vector.extract_strided_slice %14 {offsets = [0, 6], sizes = [8, 1], strides = [1, 1]} : vector<8x8xf32> to vector<8x1xf32>
    %59 = vector.broadcast %57 : vector<1x78xf32> to vector<8x78xf32>
    %60 = vector.broadcast %58 : vector<8x1xf32> to vector<8x78xf32>
    %61 = arith.subf %59, %60 : vector<8x78xf32>
    %62 = math.absf %61 : vector<8x78xf32>
    %63 = arith.subf %56, %62 : vector<8x78xf32>
    %64 = vector.extract_strided_slice %11 {offsets = [7, 0], sizes = [1, 78], strides = [1, 1]} : vector<8x78xf32> to vector<1x78xf32>
    %65 = vector.extract_strided_slice %14 {offsets = [0, 7], sizes = [8, 1], strides = [1, 1]} : vector<8x8xf32> to vector<8x1xf32>
    %66 = vector.broadcast %64 : vector<1x78xf32> to vector<8x78xf32>
    %67 = vector.broadcast %65 : vector<8x1xf32> to vector<8x78xf32>
    %68 = arith.subf %66, %67 : vector<8x78xf32>
    %69 = math.absf %68 : vector<8x78xf32>
    %70 = arith.subf %63, %69 : vector<8x78xf32>
    %c1_i32 = arith.constant 1 : i32
    %c0_i32_10 = arith.constant 0 : i32
    %c8_i32_11 = arith.constant 8 : i32
    %71 = arith.muli %c0_i32_10, %c8_i32_11 : i32
    %72 = tpu.assume_multiple %71, 8 : i32
    %c0_12 = arith.constant 0 : index
    %73 = arith.index_cast %72 : i32 to index
    %c1 = arith.constant 1 : index
    %74 = vector.load %arg1[%c0_12, %73, %c1] : memref<1x8x128xf32, #tpu.memory_space<vmem>>, vector<1x8x78xf32>
    %75 = vector.shape_cast %74 : vector<1x8x78xf32> to vector<8x78xf32>
    %76 = arith.index_cast %c0_i32_10 : i32 to index
    %c1_13 = arith.constant 1 : index
    %c0_14 = arith.constant 0 : index
    %c0_15 = arith.constant 0 : index
    %77 = vector.load %arg2[%76, %c1_13, %c0_14, %c0_15] : memref<1x9x8x8xf32, #tpu.memory_space<vmem>>, vector<1x1x8x8xf32>
    %78 = vector.shape_cast %77 : vector<1x1x8x8xf32> to vector<8x8xf32>
    %79 = vector.extract_strided_slice %75 {offsets = [0, 0], sizes = [1, 78], strides = [1, 1]} : vector<8x78xf32> to vector<1x78xf32>
    %80 = vector.extract_strided_slice %78 {offsets = [0, 0], sizes = [8, 1], strides = [1, 1]} : vector<8x8xf32> to vector<8x1xf32>
    %81 = vector.broadcast %79 : vector<1x78xf32> to vector<8x78xf32>
    %82 = vector.broadcast %80 : vector<8x1xf32> to vector<8x78xf32>
    %83 = arith.subf %81, %82 : vector<8x78xf32>
    %84 = math.absf %83 : vector<8x78xf32>
    %85 = arith.subf %70, %84 : vector<8x78xf32>
    %86 = vector.extract_strided_slice %75 {offsets = [1, 0], sizes = [1, 78], strides = [1, 1]} : vector<8x78xf32> to vector<1x78xf32>
    %87 = vector.extract_strided_slice %78 {offsets = [0, 1], sizes = [8, 1], strides = [1, 1]} : vector<8x8xf32> to vector<8x1xf32>
    %88 = vector.broadcast %86 : vector<1x78xf32> to vector<8x78xf32>
    %89 = vector.broadcast %87 : vector<8x1xf32> to vector<8x78xf32>
    %90 = arith.subf %88, %89 : vector<8x78xf32>
    %91 = math.absf %90 : vector<8x78xf32>
    %92 = arith.subf %85, %91 : vector<8x78xf32>
    %93 = vector.extract_strided_slice %75 {offsets = [2, 0], sizes = [1, 78], strides = [1, 1]} : vector<8x78xf32> to vector<1x78xf32>
    %94 = vector.extract_strided_slice %78 {offsets = [0, 2], sizes = [8, 1], strides = [1, 1]} : vector<8x8xf32> to vector<8x1xf32>
    %95 = vector.broadcast %93 : vector<1x78xf32> to vector<8x78xf32>
    %96 = vector.broadcast %94 : vector<8x1xf32> to vector<8x78xf32>
    %97 = arith.subf %95, %96 : vector<8x78xf32>
    %98 = math.absf %97 : vector<8x78xf32>
    %99 = arith.subf %92, %98 : vector<8x78xf32>
    %100 = vector.extract_strided_slice %75 {offsets = [3, 0], sizes = [1, 78], strides = [1, 1]} : vector<8x78xf32> to vector<1x78xf32>
    %101 = vector.extract_strided_slice %78 {offsets = [0, 3], sizes = [8, 1], strides = [1, 1]} : vector<8x8xf32> to vector<8x1xf32>
    %102 = vector.broadcast %100 : vector<1x78xf32> to vector<8x78xf32>
    %103 = vector.broadcast %101 : vector<8x1xf32> to vector<8x78xf32>
    %104 = arith.subf %102, %103 : vector<8x78xf32>
    %105 = math.absf %104 : vector<8x78xf32>
    %106 = arith.subf %99, %105 : vector<8x78xf32>
    %107 = vector.extract_strided_slice %75 {offsets = [4, 0], sizes = [1, 78], strides = [1, 1]} : vector<8x78xf32> to vector<1x78xf32>
    %108 = vector.extract_strided_slice %78 {offsets = [0, 4], sizes = [8, 1], strides = [1, 1]} : vector<8x8xf32> to vector<8x1xf32>
    %109 = vector.broadcast %107 : vector<1x78xf32> to vector<8x78xf32>
    %110 = vector.broadcast %108 : vector<8x1xf32> to vector<8x78xf32>
    %111 = arith.subf %109, %110 : vector<8x78xf32>
    %112 = math.absf %111 : vector<8x78xf32>
    %113 = arith.subf %106, %112 : vector<8x78xf32>
    %114 = vector.extract_strided_slice %75 {offsets = [5, 0], sizes = [1, 78], strides = [1, 1]} : vector<8x78xf32> to vector<1x78xf32>
    %115 = vector.extract_strided_slice %78 {offsets = [0, 5], sizes = [8, 1], strides = [1, 1]} : vector<8x8xf32> to vector<8x1xf32>
    %116 = vector.broadcast %114 : vector<1x78xf32> to vector<8x78xf32>
    %117 = vector.broadcast %115 : vector<8x1xf32> to vector<8x78xf32>
    %118 = arith.subf %116, %117 : vector<8x78xf32>
    %119 = math.absf %118 : vector<8x78xf32>
    %120 = arith.subf %113, %119 : vector<8x78xf32>
    %121 = vector.extract_strided_slice %75 {offsets = [6, 0], sizes = [1, 78], strides = [1, 1]} : vector<8x78xf32> to vector<1x78xf32>
    %122 = vector.extract_strided_slice %78 {offsets = [0, 6], sizes = [8, 1], strides = [1, 1]} : vector<8x8xf32> to vector<8x1xf32>
    %123 = vector.broadcast %121 : vector<1x78xf32> to vector<8x78xf32>
    %124 = vector.broadcast %122 : vector<8x1xf32> to vector<8x78xf32>
    %125 = arith.subf %123, %124 : vector<8x78xf32>
    %126 = math.absf %125 : vector<8x78xf32>
    %127 = arith.subf %120, %126 : vector<8x78xf32>
    %128 = vector.extract_strided_slice %75 {offsets = [7, 0], sizes = [1, 78], strides = [1, 1]} : vector<8x78xf32> to vector<1x78xf32>
    %129 = vector.extract_strided_slice %78 {offsets = [0, 7], sizes = [8, 1], strides = [1, 1]} : vector<8x8xf32> to vector<8x1xf32>
    %130 = vector.broadcast %128 : vector<1x78xf32> to vector<8x78xf32>
    %131 = vector.broadcast %129 : vector<8x1xf32> to vector<8x78xf32>
    %132 = arith.subf %130, %131 : vector<8x78xf32>
    %133 = math.absf %132 : vector<8x78xf32>
    %134 = arith.subf %127, %133 : vector<8x78xf32>
    %c1_i32_16 = arith.constant 1 : i32
    %c0_i32_17 = arith.constant 0 : i32
    %c8_i32_18 = arith.constant 8 : i32
    %135 = arith.muli %c0_i32_17, %c8_i32_18 : i32
    %136 = tpu.assume_multiple %135, 8 : i32
    %c0_19 = arith.constant 0 : index
    %137 = arith.index_cast %136 : i32 to index
    %c2 = arith.constant 2 : index
    %138 = vector.load %arg1[%c0_19, %137, %c2] : memref<1x8x128xf32, #tpu.memory_space<vmem>>, vector<1x8x78xf32>
    %139 = vector.shape_cast %138 : vector<1x8x78xf32> to vector<8x78xf32>
    %140 = arith.index_cast %c0_i32_17 : i32 to index
    %c2_20 = arith.constant 2 : index
    %c0_21 = arith.constant 0 : index
    %c0_22 = arith.constant 0 : index
    %141 = vector.load %arg2[%140, %c2_20, %c0_21, %c0_22] : memref<1x9x8x8xf32, #tpu.memory_space<vmem>>, vector<1x1x8x8xf32>
    %142 = vector.shape_cast %141 : vector<1x1x8x8xf32> to vector<8x8xf32>
    %143 = vector.extract_strided_slice %139 {offsets = [0, 0], sizes = [1, 78], strides = [1, 1]} : vector<8x78xf32> to vector<1x78xf32>
    %144 = vector.extract_strided_slice %142 {offsets = [0, 0], sizes = [8, 1], strides = [1, 1]} : vector<8x8xf32> to vector<8x1xf32>
    %145 = vector.broadcast %143 : vector<1x78xf32> to vector<8x78xf32>
    %146 = vector.broadcast %144 : vector<8x1xf32> to vector<8x78xf32>
    %147 = arith.subf %145, %146 : vector<8x78xf32>
    %148 = math.absf %147 : vector<8x78xf32>
    %149 = arith.subf %134, %148 : vector<8x78xf32>
    %150 = vector.extract_strided_slice %139 {offsets = [1, 0], sizes = [1, 78], strides = [1, 1]} : vector<8x78xf32> to vector<1x78xf32>
    %151 = vector.extract_strided_slice %142 {offsets = [0, 1], sizes = [8, 1], strides = [1, 1]} : vector<8x8xf32> to vector<8x1xf32>
    %152 = vector.broadcast %150 : vector<1x78xf32> to vector<8x78xf32>
    %153 = vector.broadcast %151 : vector<8x1xf32> to vector<8x78xf32>
    %154 = arith.subf %152, %153 : vector<8x78xf32>
    %155 = math.absf %154 : vector<8x78xf32>
    %156 = arith.subf %149, %155 : vector<8x78xf32>
    %157 = vector.extract_strided_slice %139 {offsets = [2, 0], sizes = [1, 78], strides = [1, 1]} : vector<8x78xf32> to vector<1x78xf32>
    %158 = vector.extract_strided_slice %142 {offsets = [0, 2], sizes = [8, 1], strides = [1, 1]} : vector<8x8xf32> to vector<8x1xf32>
    %159 = vector.broadcast %157 : vector<1x78xf32> to vector<8x78xf32>
    %160 = vector.broadcast %158 : vector<8x1xf32> to vector<8x78xf32>
    %161 = arith.subf %159, %160 : vector<8x78xf32>
    %162 = math.absf %161 : vector<8x78xf32>
    %163 = arith.subf %156, %162 : vector<8x78xf32>
    %164 = vector.extract_strided_slice %139 {offsets = [3, 0], sizes = [1, 78], strides = [1, 1]} : vector<8x78xf32> to vector<1x78xf32>
    %165 = vector.extract_strided_slice %142 {offsets = [0, 3], sizes = [8, 1], strides = [1, 1]} : vector<8x8xf32> to vector<8x1xf32>
    %166 = vector.broadcast %164 : vector<1x78xf32> to vector<8x78xf32>
    %167 = vector.broadcast %165 : vector<8x1xf32> to vector<8x78xf32>
    %168 = arith.subf %166, %167 : vector<8x78xf32>
    %169 = math.absf %168 : vector<8x78xf32>
    %170 = arith.subf %163, %169 : vector<8x78xf32>
    %171 = vector.extract_strided_slice %139 {offsets = [4, 0], sizes = [1, 78], strides = [1, 1]} : vector<8x78xf32> to vector<1x78xf32>
    %172 = vector.extract_strided_slice %142 {offsets = [0, 4], sizes = [8, 1], strides = [1, 1]} : vector<8x8xf32> to vector<8x1xf32>
    %173 = vector.broadcast %171 : vector<1x78xf32> to vector<8x78xf32>
    %174 = vector.broadcast %172 : vector<8x1xf32> to vector<8x78xf32>
    %175 = arith.subf %173, %174 : vector<8x78xf32>
    %176 = math.absf %175 : vector<8x78xf32>
    %177 = arith.subf %170, %176 : vector<8x78xf32>
    %178 = vector.extract_strided_slice %139 {offsets = [5, 0], sizes = [1, 78], strides = [1, 1]} : vector<8x78xf32> to vector<1x78xf32>
    %179 = vector.extract_strided_slice %142 {offsets = [0, 5], sizes = [8, 1], strides = [1, 1]} : vector<8x8xf32> to vector<8x1xf32>
    %180 = vector.broadcast %178 : vector<1x78xf32> to vector<8x78xf32>
    %181 = vector.broadcast %179 : vector<8x1xf32> to vector<8x78xf32>
    %182 = arith.subf %180, %181 : vector<8x78xf32>
    %183 = math.absf %182 : vector<8x78xf32>
    %184 = arith.subf %177, %183 : vector<8x78xf32>
    %185 = vector.extract_strided_slice %139 {offsets = [6, 0], sizes = [1, 78], strides = [1, 1]} : vector<8x78xf32> to vector<1x78xf32>
    %186 = vector.extract_strided_slice %142 {offsets = [0, 6], sizes = [8, 1], strides = [1, 1]} : vector<8x8xf32> to vector<8x1xf32>
    %187 = vector.broadcast %185 : vector<1x78xf32> to vector<8x78xf32>
    %188 = vector.broadcast %186 : vector<8x1xf32> to vector<8x78xf32>
    %189 = arith.subf %187, %188 : vector<8x78xf32>
    %190 = math.absf %189 : vector<8x78xf32>
    %191 = arith.subf %184, %190 : vector<8x78xf32>
    %192 = vector.extract_strided_slice %139 {offsets = [7, 0], sizes = [1, 78], strides = [1, 1]} : vector<8x78xf32> to vector<1x78xf32>
    %193 = vector.extract_strided_slice %142 {offsets = [0, 7], sizes = [8, 1], strides = [1, 1]} : vector<8x8xf32> to vector<8x1xf32>
    %194 = vector.broadcast %192 : vector<1x78xf32> to vector<8x78xf32>
    %195 = vector.broadcast %193 : vector<8x1xf32> to vector<8x78xf32>
    %196 = arith.subf %194, %195 : vector<8x78xf32>
    %197 = math.absf %196 : vector<8x78xf32>
    %198 = arith.subf %191, %197 : vector<8x78xf32>
    %c1_i32_23 = arith.constant 1 : i32
    %c0_i32_24 = arith.constant 0 : i32
    %c8_i32_25 = arith.constant 8 : i32
    %199 = arith.muli %c0_i32_24, %c8_i32_25 : i32
    %200 = tpu.assume_multiple %199, 8 : i32
    %c0_26 = arith.constant 0 : index
    %201 = arith.index_cast %200 : i32 to index
    %c10 = arith.constant 10 : index
    %202 = vector.load %arg1[%c0_26, %201, %c10] : memref<1x8x128xf32, #tpu.memory_space<vmem>>, vector<1x8x78xf32>
    %203 = vector.shape_cast %202 : vector<1x8x78xf32> to vector<8x78xf32>
    %204 = arith.index_cast %c0_i32_24 : i32 to index
    %c3 = arith.constant 3 : index
    %c0_27 = arith.constant 0 : index
    %c0_28 = arith.constant 0 : index
    %205 = vector.load %arg2[%204, %c3, %c0_27, %c0_28] : memref<1x9x8x8xf32, #tpu.memory_space<vmem>>, vector<1x1x8x8xf32>
    %206 = vector.shape_cast %205 : vector<1x1x8x8xf32> to vector<8x8xf32>
    %207 = vector.extract_strided_slice %203 {offsets = [0, 0], sizes = [1, 78], strides = [1, 1]} : vector<8x78xf32> to vector<1x78xf32>
    %208 = vector.extract_strided_slice %206 {offsets = [0, 0], sizes = [8, 1], strides = [1, 1]} : vector<8x8xf32> to vector<8x1xf32>
    %209 = vector.broadcast %207 : vector<1x78xf32> to vector<8x78xf32>
    %210 = vector.broadcast %208 : vector<8x1xf32> to vector<8x78xf32>
    %211 = arith.subf %209, %210 : vector<8x78xf32>
    %212 = math.absf %211 : vector<8x78xf32>
    %213 = arith.subf %198, %212 : vector<8x78xf32>
    %214 = vector.extract_strided_slice %203 {offsets = [1, 0], sizes = [1, 78], strides = [1, 1]} : vector<8x78xf32> to vector<1x78xf32>
    %215 = vector.extract_strided_slice %206 {offsets = [0, 1], sizes = [8, 1], strides = [1, 1]} : vector<8x8xf32> to vector<8x1xf32>
    %216 = vector.broadcast %214 : vector<1x78xf32> to vector<8x78xf32>
    %217 = vector.broadcast %215 : vector<8x1xf32> to vector<8x78xf32>
    %218 = arith.subf %216, %217 : vector<8x78xf32>
    %219 = math.absf %218 : vector<8x78xf32>
    %220 = arith.subf %213, %219 : vector<8x78xf32>
    %221 = vector.extract_strided_slice %203 {offsets = [2, 0], sizes = [1, 78], strides = [1, 1]} : vector<8x78xf32> to vector<1x78xf32>
    %222 = vector.extract_strided_slice %206 {offsets = [0, 2], sizes = [8, 1], strides = [1, 1]} : vector<8x8xf32> to vector<8x1xf32>
    %223 = vector.broadcast %221 : vector<1x78xf32> to vector<8x78xf32>
    %224 = vector.broadcast %222 : vector<8x1xf32> to vector<8x78xf32>
    %225 = arith.subf %223, %224 : vector<8x78xf32>
    %226 = math.absf %225 : vector<8x78xf32>
    %227 = arith.subf %220, %226 : vector<8x78xf32>
    %228 = vector.extract_strided_slice %203 {offsets = [3, 0], sizes = [1, 78], strides = [1, 1]} : vector<8x78xf32> to vector<1x78xf32>
    %229 = vector.extract_strided_slice %206 {offsets = [0, 3], sizes = [8, 1], strides = [1, 1]} : vector<8x8xf32> to vector<8x1xf32>
    %230 = vector.broadcast %228 : vector<1x78xf32> to vector<8x78xf32>
    %231 = vector.broadcast %229 : vector<8x1xf32> to vector<8x78xf32>
    %232 = arith.subf %230, %231 : vector<8x78xf32>
    %233 = math.absf %232 : vector<8x78xf32>
    %234 = arith.subf %227, %233 : vector<8x78xf32>
    %235 = vector.extract_strided_slice %203 {offsets = [4, 0], sizes = [1, 78], strides = [1, 1]} : vector<8x78xf32> to vector<1x78xf32>
    %236 = vector.extract_strided_slice %206 {offsets = [0, 4], sizes = [8, 1], strides = [1, 1]} : vector<8x8xf32> to vector<8x1xf32>
    %237 = vector.broadcast %235 : vector<1x78xf32> to vector<8x78xf32>
    %238 = vector.broadcast %236 : vector<8x1xf32> to vector<8x78xf32>
    %239 = arith.subf %237, %238 : vector<8x78xf32>
    %240 = math.absf %239 : vector<8x78xf32>
    %241 = arith.subf %234, %240 : vector<8x78xf32>
    %242 = vector.extract_strided_slice %203 {offsets = [5, 0], sizes = [1, 78], strides = [1, 1]} : vector<8x78xf32> to vector<1x78xf32>
    %243 = vector.extract_strided_slice %206 {offsets = [0, 5], sizes = [8, 1], strides = [1, 1]} : vector<8x8xf32> to vector<8x1xf32>
    %244 = vector.broadcast %242 : vector<1x78xf32> to vector<8x78xf32>
    %245 = vector.broadcast %243 : vector<8x1xf32> to vector<8x78xf32>
    %246 = arith.subf %244, %245 : vector<8x78xf32>
    %247 = math.absf %246 : vector<8x78xf32>
    %248 = arith.subf %241, %247 : vector<8x78xf32>
    %249 = vector.extract_strided_slice %203 {offsets = [6, 0], sizes = [1, 78], strides = [1, 1]} : vector<8x78xf32> to vector<1x78xf32>
    %250 = vector.extract_strided_slice %206 {offsets = [0, 6], sizes = [8, 1], strides = [1, 1]} : vector<8x8xf32> to vector<8x1xf32>
    %251 = vector.broadcast %249 : vector<1x78xf32> to vector<8x78xf32>
    %252 = vector.broadcast %250 : vector<8x1xf32> to vector<8x78xf32>
    %253 = arith.subf %251, %252 : vector<8x78xf32>
    %254 = math.absf %253 : vector<8x78xf32>
    %255 = arith.subf %248, %254 : vector<8x78xf32>
    %256 = vector.extract_strided_slice %203 {offsets = [7, 0], sizes = [1, 78], strides = [1, 1]} : vector<8x78xf32> to vector<1x78xf32>
    %257 = vector.extract_strided_slice %206 {offsets = [0, 7], sizes = [8, 1], strides = [1, 1]} : vector<8x8xf32> to vector<8x1xf32>
    %258 = vector.broadcast %256 : vector<1x78xf32> to vector<8x78xf32>
    %259 = vector.broadcast %257 : vector<8x1xf32> to vector<8x78xf32>
    %260 = arith.subf %258, %259 : vector<8x78xf32>
    %261 = math.absf %260 : vector<8x78xf32>
    %262 = arith.subf %255, %261 : vector<8x78xf32>
    %c1_i32_29 = arith.constant 1 : i32
    %c0_i32_30 = arith.constant 0 : i32
    %c8_i32_31 = arith.constant 8 : i32
    %263 = arith.muli %c0_i32_30, %c8_i32_31 : i32
    %264 = tpu.assume_multiple %263, 8 : i32
    %c0_32 = arith.constant 0 : index
    %265 = arith.index_cast %264 : i32 to index
    %c11 = arith.constant 11 : index
    %266 = vector.load %arg1[%c0_32, %265, %c11] : memref<1x8x128xf32, #tpu.memory_space<vmem>>, vector<1x8x78xf32>
    %267 = vector.shape_cast %266 : vector<1x8x78xf32> to vector<8x78xf32>
    %268 = arith.index_cast %c0_i32_30 : i32 to index
    %c4 = arith.constant 4 : index
    %c0_33 = arith.constant 0 : index
    %c0_34 = arith.constant 0 : index
    %269 = vector.load %arg2[%268, %c4, %c0_33, %c0_34] : memref<1x9x8x8xf32, #tpu.memory_space<vmem>>, vector<1x1x8x8xf32>
    %270 = vector.shape_cast %269 : vector<1x1x8x8xf32> to vector<8x8xf32>
    %271 = vector.extract_strided_slice %267 {offsets = [0, 0], sizes = [1, 78], strides = [1, 1]} : vector<8x78xf32> to vector<1x78xf32>
    %272 = vector.extract_strided_slice %270 {offsets = [0, 0], sizes = [8, 1], strides = [1, 1]} : vector<8x8xf32> to vector<8x1xf32>
    %273 = vector.broadcast %271 : vector<1x78xf32> to vector<8x78xf32>
    %274 = vector.broadcast %272 : vector<8x1xf32> to vector<8x78xf32>
    %275 = arith.subf %273, %274 : vector<8x78xf32>
    %276 = math.absf %275 : vector<8x78xf32>
    %277 = arith.subf %262, %276 : vector<8x78xf32>
    %278 = vector.extract_strided_slice %267 {offsets = [1, 0], sizes = [1, 78], strides = [1, 1]} : vector<8x78xf32> to vector<1x78xf32>
    %279 = vector.extract_strided_slice %270 {offsets = [0, 1], sizes = [8, 1], strides = [1, 1]} : vector<8x8xf32> to vector<8x1xf32>
    %280 = vector.broadcast %278 : vector<1x78xf32> to vector<8x78xf32>
    %281 = vector.broadcast %279 : vector<8x1xf32> to vector<8x78xf32>
    %282 = arith.subf %280, %281 : vector<8x78xf32>
    %283 = math.absf %282 : vector<8x78xf32>
    %284 = arith.subf %277, %283 : vector<8x78xf32>
    %285 = vector.extract_strided_slice %267 {offsets = [2, 0], sizes = [1, 78], strides = [1, 1]} : vector<8x78xf32> to vector<1x78xf32>
    %286 = vector.extract_strided_slice %270 {offsets = [0, 2], sizes = [8, 1], strides = [1, 1]} : vector<8x8xf32> to vector<8x1xf32>
    %287 = vector.broadcast %285 : vector<1x78xf32> to vector<8x78xf32>
    %288 = vector.broadcast %286 : vector<8x1xf32> to vector<8x78xf32>
    %289 = arith.subf %287, %288 : vector<8x78xf32>
    %290 = math.absf %289 : vector<8x78xf32>
    %291 = arith.subf %284, %290 : vector<8x78xf32>
    %292 = vector.extract_strided_slice %267 {offsets = [3, 0], sizes = [1, 78], strides = [1, 1]} : vector<8x78xf32> to vector<1x78xf32>
    %293 = vector.extract_strided_slice %270 {offsets = [0, 3], sizes = [8, 1], strides = [1, 1]} : vector<8x8xf32> to vector<8x1xf32>
    %294 = vector.broadcast %292 : vector<1x78xf32> to vector<8x78xf32>
    %295 = vector.broadcast %293 : vector<8x1xf32> to vector<8x78xf32>
    %296 = arith.subf %294, %295 : vector<8x78xf32>
    %297 = math.absf %296 : vector<8x78xf32>
    %298 = arith.subf %291, %297 : vector<8x78xf32>
    %299 = vector.extract_strided_slice %267 {offsets = [4, 0], sizes = [1, 78], strides = [1, 1]} : vector<8x78xf32> to vector<1x78xf32>
    %300 = vector.extract_strided_slice %270 {offsets = [0, 4], sizes = [8, 1], strides = [1, 1]} : vector<8x8xf32> to vector<8x1xf32>
    %301 = vector.broadcast %299 : vector<1x78xf32> to vector<8x78xf32>
    %302 = vector.broadcast %300 : vector<8x1xf32> to vector<8x78xf32>
    %303 = arith.subf %301, %302 : vector<8x78xf32>
    %304 = math.absf %303 : vector<8x78xf32>
    %305 = arith.subf %298, %304 : vector<8x78xf32>
    %306 = vector.extract_strided_slice %267 {offsets = [5, 0], sizes = [1, 78], strides = [1, 1]} : vector<8x78xf32> to vector<1x78xf32>
    %307 = vector.extract_strided_slice %270 {offsets = [0, 5], sizes = [8, 1], strides = [1, 1]} : vector<8x8xf32> to vector<8x1xf32>
    %308 = vector.broadcast %306 : vector<1x78xf32> to vector<8x78xf32>
    %309 = vector.broadcast %307 : vector<8x1xf32> to vector<8x78xf32>
    %310 = arith.subf %308, %309 : vector<8x78xf32>
    %311 = math.absf %310 : vector<8x78xf32>
    %312 = arith.subf %305, %311 : vector<8x78xf32>
    %313 = vector.extract_strided_slice %267 {offsets = [6, 0], sizes = [1, 78], strides = [1, 1]} : vector<8x78xf32> to vector<1x78xf32>
    %314 = vector.extract_strided_slice %270 {offsets = [0, 6], sizes = [8, 1], strides = [1, 1]} : vector<8x8xf32> to vector<8x1xf32>
    %315 = vector.broadcast %313 : vector<1x78xf32> to vector<8x78xf32>
    %316 = vector.broadcast %314 : vector<8x1xf32> to vector<8x78xf32>
    %317 = arith.subf %315, %316 : vector<8x78xf32>
    %318 = math.absf %317 : vector<8x78xf32>
    %319 = arith.subf %312, %318 : vector<8x78xf32>
    %320 = vector.extract_strided_slice %267 {offsets = [7, 0], sizes = [1, 78], strides = [1, 1]} : vector<8x78xf32> to vector<1x78xf32>
    %321 = vector.extract_strided_slice %270 {offsets = [0, 7], sizes = [8, 1], strides = [1, 1]} : vector<8x8xf32> to vector<8x1xf32>
    %322 = vector.broadcast %320 : vector<1x78xf32> to vector<8x78xf32>
    %323 = vector.broadcast %321 : vector<8x1xf32> to vector<8x78xf32>
    %324 = arith.subf %322, %323 : vector<8x78xf32>
    %325 = math.absf %324 : vector<8x78xf32>
    %326 = arith.subf %319, %325 : vector<8x78xf32>
    %c1_i32_35 = arith.constant 1 : i32
    %c0_i32_36 = arith.constant 0 : i32
    %c8_i32_37 = arith.constant 8 : i32
    %327 = arith.muli %c0_i32_36, %c8_i32_37 : i32
    %328 = tpu.assume_multiple %327, 8 : i32
    %c0_38 = arith.constant 0 : index
    %329 = arith.index_cast %328 : i32 to index
    %c12 = arith.constant 12 : index
    %330 = vector.load %arg1[%c0_38, %329, %c12] : memref<1x8x128xf32, #tpu.memory_space<vmem>>, vector<1x8x78xf32>
    %331 = vector.shape_cast %330 : vector<1x8x78xf32> to vector<8x78xf32>
    %332 = arith.index_cast %c0_i32_36 : i32 to index
    %c5 = arith.constant 5 : index
    %c0_39 = arith.constant 0 : index
    %c0_40 = arith.constant 0 : index
    %333 = vector.load %arg2[%332, %c5, %c0_39, %c0_40] : memref<1x9x8x8xf32, #tpu.memory_space<vmem>>, vector<1x1x8x8xf32>
    %334 = vector.shape_cast %333 : vector<1x1x8x8xf32> to vector<8x8xf32>
    %335 = vector.extract_strided_slice %331 {offsets = [0, 0], sizes = [1, 78], strides = [1, 1]} : vector<8x78xf32> to vector<1x78xf32>
    %336 = vector.extract_strided_slice %334 {offsets = [0, 0], sizes = [8, 1], strides = [1, 1]} : vector<8x8xf32> to vector<8x1xf32>
    %337 = vector.broadcast %335 : vector<1x78xf32> to vector<8x78xf32>
    %338 = vector.broadcast %336 : vector<8x1xf32> to vector<8x78xf32>
    %339 = arith.subf %337, %338 : vector<8x78xf32>
    %340 = math.absf %339 : vector<8x78xf32>
    %341 = arith.subf %326, %340 : vector<8x78xf32>
    %342 = vector.extract_strided_slice %331 {offsets = [1, 0], sizes = [1, 78], strides = [1, 1]} : vector<8x78xf32> to vector<1x78xf32>
    %343 = vector.extract_strided_slice %334 {offsets = [0, 1], sizes = [8, 1], strides = [1, 1]} : vector<8x8xf32> to vector<8x1xf32>
    %344 = vector.broadcast %342 : vector<1x78xf32> to vector<8x78xf32>
    %345 = vector.broadcast %343 : vector<8x1xf32> to vector<8x78xf32>
    %346 = arith.subf %344, %345 : vector<8x78xf32>
    %347 = math.absf %346 : vector<8x78xf32>
    %348 = arith.subf %341, %347 : vector<8x78xf32>
    %349 = vector.extract_strided_slice %331 {offsets = [2, 0], sizes = [1, 78], strides = [1, 1]} : vector<8x78xf32> to vector<1x78xf32>
    %350 = vector.extract_strided_slice %334 {offsets = [0, 2], sizes = [8, 1], strides = [1, 1]} : vector<8x8xf32> to vector<8x1xf32>
    %351 = vector.broadcast %349 : vector<1x78xf32> to vector<8x78xf32>
    %352 = vector.broadcast %350 : vector<8x1xf32> to vector<8x78xf32>
    %353 = arith.subf %351, %352 : vector<8x78xf32>
    %354 = math.absf %353 : vector<8x78xf32>
    %355 = arith.subf %348, %354 : vector<8x78xf32>
    %356 = vector.extract_strided_slice %331 {offsets = [3, 0], sizes = [1, 78], strides = [1, 1]} : vector<8x78xf32> to vector<1x78xf32>
    %357 = vector.extract_strided_slice %334 {offsets = [0, 3], sizes = [8, 1], strides = [1, 1]} : vector<8x8xf32> to vector<8x1xf32>
    %358 = vector.broadcast %356 : vector<1x78xf32> to vector<8x78xf32>
    %359 = vector.broadcast %357 : vector<8x1xf32> to vector<8x78xf32>
    %360 = arith.subf %358, %359 : vector<8x78xf32>
    %361 = math.absf %360 : vector<8x78xf32>
    %362 = arith.subf %355, %361 : vector<8x78xf32>
    %363 = vector.extract_strided_slice %331 {offsets = [4, 0], sizes = [1, 78], strides = [1, 1]} : vector<8x78xf32> to vector<1x78xf32>
    %364 = vector.extract_strided_slice %334 {offsets = [0, 4], sizes = [8, 1], strides = [1, 1]} : vector<8x8xf32> to vector<8x1xf32>
    %365 = vector.broadcast %363 : vector<1x78xf32> to vector<8x78xf32>
    %366 = vector.broadcast %364 : vector<8x1xf32> to vector<8x78xf32>
    %367 = arith.subf %365, %366 : vector<8x78xf32>
    %368 = math.absf %367 : vector<8x78xf32>
    %369 = arith.subf %362, %368 : vector<8x78xf32>
    %370 = vector.extract_strided_slice %331 {offsets = [5, 0], sizes = [1, 78], strides = [1, 1]} : vector<8x78xf32> to vector<1x78xf32>
    %371 = vector.extract_strided_slice %334 {offsets = [0, 5], sizes = [8, 1], strides = [1, 1]} : vector<8x8xf32> to vector<8x1xf32>
    %372 = vector.broadcast %370 : vector<1x78xf32> to vector<8x78xf32>
    %373 = vector.broadcast %371 : vector<8x1xf32> to vector<8x78xf32>
    %374 = arith.subf %372, %373 : vector<8x78xf32>
    %375 = math.absf %374 : vector<8x78xf32>
    %376 = arith.subf %369, %375 : vector<8x78xf32>
    %377 = vector.extract_strided_slice %331 {offsets = [6, 0], sizes = [1, 78], strides = [1, 1]} : vector<8x78xf32> to vector<1x78xf32>
    %378 = vector.extract_strided_slice %334 {offsets = [0, 6], sizes = [8, 1], strides = [1, 1]} : vector<8x8xf32> to vector<8x1xf32>
    %379 = vector.broadcast %377 : vector<1x78xf32> to vector<8x78xf32>
    %380 = vector.broadcast %378 : vector<8x1xf32> to vector<8x78xf32>
    %381 = arith.subf %379, %380 : vector<8x78xf32>
    %382 = math.absf %381 : vector<8x78xf32>
    %383 = arith.subf %376, %382 : vector<8x78xf32>
    %384 = vector.extract_strided_slice %331 {offsets = [7, 0], sizes = [1, 78], strides = [1, 1]} : vector<8x78xf32> to vector<1x78xf32>
    %385 = vector.extract_strided_slice %334 {offsets = [0, 7], sizes = [8, 1], strides = [1, 1]} : vector<8x8xf32> to vector<8x1xf32>
    %386 = vector.broadcast %384 : vector<1x78xf32> to vector<8x78xf32>
    %387 = vector.broadcast %385 : vector<8x1xf32> to vector<8x78xf32>
    %388 = arith.subf %386, %387 : vector<8x78xf32>
    %389 = math.absf %388 : vector<8x78xf32>
    %390 = arith.subf %383, %389 : vector<8x78xf32>
    %c1_i32_41 = arith.constant 1 : i32
    %c0_i32_42 = arith.constant 0 : i32
    %c8_i32_43 = arith.constant 8 : i32
    %391 = arith.muli %c0_i32_42, %c8_i32_43 : i32
    %392 = tpu.assume_multiple %391, 8 : i32
    %c0_44 = arith.constant 0 : index
    %393 = arith.index_cast %392 : i32 to index
    %c20 = arith.constant 20 : index
    %394 = vector.load %arg1[%c0_44, %393, %c20] : memref<1x8x128xf32, #tpu.memory_space<vmem>>, vector<1x8x78xf32>
    %395 = vector.shape_cast %394 : vector<1x8x78xf32> to vector<8x78xf32>
    %396 = arith.index_cast %c0_i32_42 : i32 to index
    %c6 = arith.constant 6 : index
    %c0_45 = arith.constant 0 : index
    %c0_46 = arith.constant 0 : index
    %397 = vector.load %arg2[%396, %c6, %c0_45, %c0_46] : memref<1x9x8x8xf32, #tpu.memory_space<vmem>>, vector<1x1x8x8xf32>
    %398 = vector.shape_cast %397 : vector<1x1x8x8xf32> to vector<8x8xf32>
    %399 = vector.extract_strided_slice %395 {offsets = [0, 0], sizes = [1, 78], strides = [1, 1]} : vector<8x78xf32> to vector<1x78xf32>
    %400 = vector.extract_strided_slice %398 {offsets = [0, 0], sizes = [8, 1], strides = [1, 1]} : vector<8x8xf32> to vector<8x1xf32>
    %401 = vector.broadcast %399 : vector<1x78xf32> to vector<8x78xf32>
    %402 = vector.broadcast %400 : vector<8x1xf32> to vector<8x78xf32>
    %403 = arith.subf %401, %402 : vector<8x78xf32>
    %404 = math.absf %403 : vector<8x78xf32>
    %405 = arith.subf %390, %404 : vector<8x78xf32>
    %406 = vector.extract_strided_slice %395 {offsets = [1, 0], sizes = [1, 78], strides = [1, 1]} : vector<8x78xf32> to vector<1x78xf32>
    %407 = vector.extract_strided_slice %398 {offsets = [0, 1], sizes = [8, 1], strides = [1, 1]} : vector<8x8xf32> to vector<8x1xf32>
    %408 = vector.broadcast %406 : vector<1x78xf32> to vector<8x78xf32>
    %409 = vector.broadcast %407 : vector<8x1xf32> to vector<8x78xf32>
    %410 = arith.subf %408, %409 : vector<8x78xf32>
    %411 = math.absf %410 : vector<8x78xf32>
    %412 = arith.subf %405, %411 : vector<8x78xf32>
    %413 = vector.extract_strided_slice %395 {offsets = [2, 0], sizes = [1, 78], strides = [1, 1]} : vector<8x78xf32> to vector<1x78xf32>
    %414 = vector.extract_strided_slice %398 {offsets = [0, 2], sizes = [8, 1], strides = [1, 1]} : vector<8x8xf32> to vector<8x1xf32>
    %415 = vector.broadcast %413 : vector<1x78xf32> to vector<8x78xf32>
    %416 = vector.broadcast %414 : vector<8x1xf32> to vector<8x78xf32>
    %417 = arith.subf %415, %416 : vector<8x78xf32>
    %418 = math.absf %417 : vector<8x78xf32>
    %419 = arith.subf %412, %418 : vector<8x78xf32>
    %420 = vector.extract_strided_slice %395 {offsets = [3, 0], sizes = [1, 78], strides = [1, 1]} : vector<8x78xf32> to vector<1x78xf32>
    %421 = vector.extract_strided_slice %398 {offsets = [0, 3], sizes = [8, 1], strides = [1, 1]} : vector<8x8xf32> to vector<8x1xf32>
    %422 = vector.broadcast %420 : vector<1x78xf32> to vector<8x78xf32>
    %423 = vector.broadcast %421 : vector<8x1xf32> to vector<8x78xf32>
    %424 = arith.subf %422, %423 : vector<8x78xf32>
    %425 = math.absf %424 : vector<8x78xf32>
    %426 = arith.subf %419, %425 : vector<8x78xf32>
    %427 = vector.extract_strided_slice %395 {offsets = [4, 0], sizes = [1, 78], strides = [1, 1]} : vector<8x78xf32> to vector<1x78xf32>
    %428 = vector.extract_strided_slice %398 {offsets = [0, 4], sizes = [8, 1], strides = [1, 1]} : vector<8x8xf32> to vector<8x1xf32>
    %429 = vector.broadcast %427 : vector<1x78xf32> to vector<8x78xf32>
    %430 = vector.broadcast %428 : vector<8x1xf32> to vector<8x78xf32>
    %431 = arith.subf %429, %430 : vector<8x78xf32>
    %432 = math.absf %431 : vector<8x78xf32>
    %433 = arith.subf %426, %432 : vector<8x78xf32>
    %434 = vector.extract_strided_slice %395 {offsets = [5, 0], sizes = [1, 78], strides = [1, 1]} : vector<8x78xf32> to vector<1x78xf32>
    %435 = vector.extract_strided_slice %398 {offsets = [0, 5], sizes = [8, 1], strides = [1, 1]} : vector<8x8xf32> to vector<8x1xf32>
    %436 = vector.broadcast %434 : vector<1x78xf32> to vector<8x78xf32>
    %437 = vector.broadcast %435 : vector<8x1xf32> to vector<8x78xf32>
    %438 = arith.subf %436, %437 : vector<8x78xf32>
    %439 = math.absf %438 : vector<8x78xf32>
    %440 = arith.subf %433, %439 : vector<8x78xf32>
    %441 = vector.extract_strided_slice %395 {offsets = [6, 0], sizes = [1, 78], strides = [1, 1]} : vector<8x78xf32> to vector<1x78xf32>
    %442 = vector.extract_strided_slice %398 {offsets = [0, 6], sizes = [8, 1], strides = [1, 1]} : vector<8x8xf32> to vector<8x1xf32>
    %443 = vector.broadcast %441 : vector<1x78xf32> to vector<8x78xf32>
    %444 = vector.broadcast %442 : vector<8x1xf32> to vector<8x78xf32>
    %445 = arith.subf %443, %444 : vector<8x78xf32>
    %446 = math.absf %445 : vector<8x78xf32>
    %447 = arith.subf %440, %446 : vector<8x78xf32>
    %448 = vector.extract_strided_slice %395 {offsets = [7, 0], sizes = [1, 78], strides = [1, 1]} : vector<8x78xf32> to vector<1x78xf32>
    %449 = vector.extract_strided_slice %398 {offsets = [0, 7], sizes = [8, 1], strides = [1, 1]} : vector<8x8xf32> to vector<8x1xf32>
    %450 = vector.broadcast %448 : vector<1x78xf32> to vector<8x78xf32>
    %451 = vector.broadcast %449 : vector<8x1xf32> to vector<8x78xf32>
    %452 = arith.subf %450, %451 : vector<8x78xf32>
    %453 = math.absf %452 : vector<8x78xf32>
    %454 = arith.subf %447, %453 : vector<8x78xf32>
    %c1_i32_47 = arith.constant 1 : i32
    %c0_i32_48 = arith.constant 0 : i32
    %c8_i32_49 = arith.constant 8 : i32
    %455 = arith.muli %c0_i32_48, %c8_i32_49 : i32
    %456 = tpu.assume_multiple %455, 8 : i32
    %c0_50 = arith.constant 0 : index
    %457 = arith.index_cast %456 : i32 to index
    %c21 = arith.constant 21 : index
    %458 = vector.load %arg1[%c0_50, %457, %c21] : memref<1x8x128xf32, #tpu.memory_space<vmem>>, vector<1x8x78xf32>
    %459 = vector.shape_cast %458 : vector<1x8x78xf32> to vector<8x78xf32>
    %460 = arith.index_cast %c0_i32_48 : i32 to index
    %c7 = arith.constant 7 : index
    %c0_51 = arith.constant 0 : index
    %c0_52 = arith.constant 0 : index
    %461 = vector.load %arg2[%460, %c7, %c0_51, %c0_52] : memref<1x9x8x8xf32, #tpu.memory_space<vmem>>, vector<1x1x8x8xf32>
    %462 = vector.shape_cast %461 : vector<1x1x8x8xf32> to vector<8x8xf32>
    %463 = vector.extract_strided_slice %459 {offsets = [0, 0], sizes = [1, 78], strides = [1, 1]} : vector<8x78xf32> to vector<1x78xf32>
    %464 = vector.extract_strided_slice %462 {offsets = [0, 0], sizes = [8, 1], strides = [1, 1]} : vector<8x8xf32> to vector<8x1xf32>
    %465 = vector.broadcast %463 : vector<1x78xf32> to vector<8x78xf32>
    %466 = vector.broadcast %464 : vector<8x1xf32> to vector<8x78xf32>
    %467 = arith.subf %465, %466 : vector<8x78xf32>
    %468 = math.absf %467 : vector<8x78xf32>
    %469 = arith.subf %454, %468 : vector<8x78xf32>
    %470 = vector.extract_strided_slice %459 {offsets = [1, 0], sizes = [1, 78], strides = [1, 1]} : vector<8x78xf32> to vector<1x78xf32>
    %471 = vector.extract_strided_slice %462 {offsets = [0, 1], sizes = [8, 1], strides = [1, 1]} : vector<8x8xf32> to vector<8x1xf32>
    %472 = vector.broadcast %470 : vector<1x78xf32> to vector<8x78xf32>
    %473 = vector.broadcast %471 : vector<8x1xf32> to vector<8x78xf32>
    %474 = arith.subf %472, %473 : vector<8x78xf32>
    %475 = math.absf %474 : vector<8x78xf32>
    %476 = arith.subf %469, %475 : vector<8x78xf32>
    %477 = vector.extract_strided_slice %459 {offsets = [2, 0], sizes = [1, 78], strides = [1, 1]} : vector<8x78xf32> to vector<1x78xf32>
    %478 = vector.extract_strided_slice %462 {offsets = [0, 2], sizes = [8, 1], strides = [1, 1]} : vector<8x8xf32> to vector<8x1xf32>
    %479 = vector.broadcast %477 : vector<1x78xf32> to vector<8x78xf32>
    %480 = vector.broadcast %478 : vector<8x1xf32> to vector<8x78xf32>
    %481 = arith.subf %479, %480 : vector<8x78xf32>
    %482 = math.absf %481 : vector<8x78xf32>
    %483 = arith.subf %476, %482 : vector<8x78xf32>
    %484 = vector.extract_strided_slice %459 {offsets = [3, 0], sizes = [1, 78], strides = [1, 1]} : vector<8x78xf32> to vector<1x78xf32>
    %485 = vector.extract_strided_slice %462 {offsets = [0, 3], sizes = [8, 1], strides = [1, 1]} : vector<8x8xf32> to vector<8x1xf32>
    %486 = vector.broadcast %484 : vector<1x78xf32> to vector<8x78xf32>
    %487 = vector.broadcast %485 : vector<8x1xf32> to vector<8x78xf32>
    %488 = arith.subf %486, %487 : vector<8x78xf32>
    %489 = math.absf %488 : vector<8x78xf32>
    %490 = arith.subf %483, %489 : vector<8x78xf32>
    %491 = vector.extract_strided_slice %459 {offsets = [4, 0], sizes = [1, 78], strides = [1, 1]} : vector<8x78xf32> to vector<1x78xf32>
    %492 = vector.extract_strided_slice %462 {offsets = [0, 4], sizes = [8, 1], strides = [1, 1]} : vector<8x8xf32> to vector<8x1xf32>
    %493 = vector.broadcast %491 : vector<1x78xf32> to vector<8x78xf32>
    %494 = vector.broadcast %492 : vector<8x1xf32> to vector<8x78xf32>
    %495 = arith.subf %493, %494 : vector<8x78xf32>
    %496 = math.absf %495 : vector<8x78xf32>
    %497 = arith.subf %490, %496 : vector<8x78xf32>
    %498 = vector.extract_strided_slice %459 {offsets = [5, 0], sizes = [1, 78], strides = [1, 1]} : vector<8x78xf32> to vector<1x78xf32>
    %499 = vector.extract_strided_slice %462 {offsets = [0, 5], sizes = [8, 1], strides = [1, 1]} : vector<8x8xf32> to vector<8x1xf32>
    %500 = vector.broadcast %498 : vector<1x78xf32> to vector<8x78xf32>
    %501 = vector.broadcast %499 : vector<8x1xf32> to vector<8x78xf32>
    %502 = arith.subf %500, %501 : vector<8x78xf32>
    %503 = math.absf %502 : vector<8x78xf32>
    %504 = arith.subf %497, %503 : vector<8x78xf32>
    %505 = vector.extract_strided_slice %459 {offsets = [6, 0], sizes = [1, 78], strides = [1, 1]} : vector<8x78xf32> to vector<1x78xf32>
    %506 = vector.extract_strided_slice %462 {offsets = [0, 6], sizes = [8, 1], strides = [1, 1]} : vector<8x8xf32> to vector<8x1xf32>
    %507 = vector.broadcast %505 : vector<1x78xf32> to vector<8x78xf32>
    %508 = vector.broadcast %506 : vector<8x1xf32> to vector<8x78xf32>
    %509 = arith.subf %507, %508 : vector<8x78xf32>
    %510 = math.absf %509 : vector<8x78xf32>
    %511 = arith.subf %504, %510 : vector<8x78xf32>
    %512 = vector.extract_strided_slice %459 {offsets = [7, 0], sizes = [1, 78], strides = [1, 1]} : vector<8x78xf32> to vector<1x78xf32>
    %513 = vector.extract_strided_slice %462 {offsets = [0, 7], sizes = [8, 1], strides = [1, 1]} : vector<8x8xf32> to vector<8x1xf32>
    %514 = vector.broadcast %512 : vector<1x78xf32> to vector<8x78xf32>
    %515 = vector.broadcast %513 : vector<8x1xf32> to vector<8x78xf32>
    %516 = arith.subf %514, %515 : vector<8x78xf32>
    %517 = math.absf %516 : vector<8x78xf32>
    %518 = arith.subf %511, %517 : vector<8x78xf32>
    %c1_i32_53 = arith.constant 1 : i32
    %c0_i32_54 = arith.constant 0 : i32
    %c8_i32_55 = arith.constant 8 : i32
    %519 = arith.muli %c0_i32_54, %c8_i32_55 : i32
    %520 = tpu.assume_multiple %519, 8 : i32
    %c0_56 = arith.constant 0 : index
    %521 = arith.index_cast %520 : i32 to index
    %c22 = arith.constant 22 : index
    %522 = vector.load %arg1[%c0_56, %521, %c22] : memref<1x8x128xf32, #tpu.memory_space<vmem>>, vector<1x8x78xf32>
    %523 = vector.shape_cast %522 : vector<1x8x78xf32> to vector<8x78xf32>
    %524 = arith.index_cast %c0_i32_54 : i32 to index
    %c8 = arith.constant 8 : index
    %c0_57 = arith.constant 0 : index
    %c0_58 = arith.constant 0 : index
    %525 = vector.load %arg2[%524, %c8, %c0_57, %c0_58] : memref<1x9x8x8xf32, #tpu.memory_space<vmem>>, vector<1x1x8x8xf32>
    %526 = vector.shape_cast %525 : vector<1x1x8x8xf32> to vector<8x8xf32>
    %527 = vector.extract_strided_slice %523 {offsets = [0, 0], sizes = [1, 78], strides = [1, 1]} : vector<8x78xf32> to vector<1x78xf32>
    %528 = vector.extract_strided_slice %526 {offsets = [0, 0], sizes = [8, 1], strides = [1, 1]} : vector<8x8xf32> to vector<8x1xf32>
    %529 = vector.broadcast %527 : vector<1x78xf32> to vector<8x78xf32>
    %530 = vector.broadcast %528 : vector<8x1xf32> to vector<8x78xf32>
    %531 = arith.subf %529, %530 : vector<8x78xf32>
    %532 = math.absf %531 : vector<8x78xf32>
    %533 = arith.subf %518, %532 : vector<8x78xf32>
    %534 = vector.extract_strided_slice %523 {offsets = [1, 0], sizes = [1, 78], strides = [1, 1]} : vector<8x78xf32> to vector<1x78xf32>
    %535 = vector.extract_strided_slice %526 {offsets = [0, 1], sizes = [8, 1], strides = [1, 1]} : vector<8x8xf32> to vector<8x1xf32>
    %536 = vector.broadcast %534 : vector<1x78xf32> to vector<8x78xf32>
    %537 = vector.broadcast %535 : vector<8x1xf32> to vector<8x78xf32>
    %538 = arith.subf %536, %537 : vector<8x78xf32>
    %539 = math.absf %538 : vector<8x78xf32>
    %540 = arith.subf %533, %539 : vector<8x78xf32>
    %541 = vector.extract_strided_slice %523 {offsets = [2, 0], sizes = [1, 78], strides = [1, 1]} : vector<8x78xf32> to vector<1x78xf32>
    %542 = vector.extract_strided_slice %526 {offsets = [0, 2], sizes = [8, 1], strides = [1, 1]} : vector<8x8xf32> to vector<8x1xf32>
    %543 = vector.broadcast %541 : vector<1x78xf32> to vector<8x78xf32>
    %544 = vector.broadcast %542 : vector<8x1xf32> to vector<8x78xf32>
    %545 = arith.subf %543, %544 : vector<8x78xf32>
    %546 = math.absf %545 : vector<8x78xf32>
    %547 = arith.subf %540, %546 : vector<8x78xf32>
    %548 = vector.extract_strided_slice %523 {offsets = [3, 0], sizes = [1, 78], strides = [1, 1]} : vector<8x78xf32> to vector<1x78xf32>
    %549 = vector.extract_strided_slice %526 {offsets = [0, 3], sizes = [8, 1], strides = [1, 1]} : vector<8x8xf32> to vector<8x1xf32>
    %550 = vector.broadcast %548 : vector<1x78xf32> to vector<8x78xf32>
    %551 = vector.broadcast %549 : vector<8x1xf32> to vector<8x78xf32>
    %552 = arith.subf %550, %551 : vector<8x78xf32>
    %553 = math.absf %552 : vector<8x78xf32>
    %554 = arith.subf %547, %553 : vector<8x78xf32>
    %555 = vector.extract_strided_slice %523 {offsets = [4, 0], sizes = [1, 78], strides = [1, 1]} : vector<8x78xf32> to vector<1x78xf32>
    %556 = vector.extract_strided_slice %526 {offsets = [0, 4], sizes = [8, 1], strides = [1, 1]} : vector<8x8xf32> to vector<8x1xf32>
    %557 = vector.broadcast %555 : vector<1x78xf32> to vector<8x78xf32>
    %558 = vector.broadcast %556 : vector<8x1xf32> to vector<8x78xf32>
    %559 = arith.subf %557, %558 : vector<8x78xf32>
    %560 = math.absf %559 : vector<8x78xf32>
    %561 = arith.subf %554, %560 : vector<8x78xf32>
    %562 = vector.extract_strided_slice %523 {offsets = [5, 0], sizes = [1, 78], strides = [1, 1]} : vector<8x78xf32> to vector<1x78xf32>
    %563 = vector.extract_strided_slice %526 {offsets = [0, 5], sizes = [8, 1], strides = [1, 1]} : vector<8x8xf32> to vector<8x1xf32>
    %564 = vector.broadcast %562 : vector<1x78xf32> to vector<8x78xf32>
    %565 = vector.broadcast %563 : vector<8x1xf32> to vector<8x78xf32>
    %566 = arith.subf %564, %565 : vector<8x78xf32>
    %567 = math.absf %566 : vector<8x78xf32>
    %568 = arith.subf %561, %567 : vector<8x78xf32>
    %569 = vector.extract_strided_slice %523 {offsets = [6, 0], sizes = [1, 78], strides = [1, 1]} : vector<8x78xf32> to vector<1x78xf32>
    %570 = vector.extract_strided_slice %526 {offsets = [0, 6], sizes = [8, 1], strides = [1, 1]} : vector<8x8xf32> to vector<8x1xf32>
    %571 = vector.broadcast %569 : vector<1x78xf32> to vector<8x78xf32>
    %572 = vector.broadcast %570 : vector<8x1xf32> to vector<8x78xf32>
    %573 = arith.subf %571, %572 : vector<8x78xf32>
    %574 = math.absf %573 : vector<8x78xf32>
    %575 = arith.subf %568, %574 : vector<8x78xf32>
    %576 = vector.extract_strided_slice %523 {offsets = [7, 0], sizes = [1, 78], strides = [1, 1]} : vector<8x78xf32> to vector<1x78xf32>
    %577 = vector.extract_strided_slice %526 {offsets = [0, 7], sizes = [8, 1], strides = [1, 1]} : vector<8x8xf32> to vector<8x1xf32>
    %578 = vector.broadcast %576 : vector<1x78xf32> to vector<8x78xf32>
    %579 = vector.broadcast %577 : vector<8x1xf32> to vector<8x78xf32>
    %580 = arith.subf %578, %579 : vector<8x78xf32>
    %581 = math.absf %580 : vector<8x78xf32>
    %582 = arith.subf %575, %581 : vector<8x78xf32>
    %c1_i32_59 = arith.constant 1 : i32
    %c0_60 = arith.constant 0 : index
    %c0_61 = arith.constant 0 : index
    %c11_62 = arith.constant 11 : index
    %583 = vector.load %arg4[%c0_60, %c0_61, %c11_62] : memref<1x8x128xf32, #tpu.memory_space<vmem>>, vector<1x8x78xf32>
    %584 = vector.shape_cast %583 : vector<1x8x78xf32> to vector<8x78xf32>
    %585 = vector.shape_cast %582 : vector<8x78xf32> to vector<1x8x78xf32>
    tpu.vector_store %arg4[%c0_60, %c0_61, %c11_62], %585 {strides = array<i32>} : memref<1x8x128xf32, #tpu.memory_space<vmem>>, vector<1x8x78xf32>,
    %c0_63 = arith.constant 0 : index
    %c11_64 = arith.constant 11 : index
    %586 = vector.load %arg3[%c0_63, %c11_64] : memref<1x128xf32, #tpu.memory_space<vmem>>, vector<1x78xf32>
    %587 = vector.broadcast %586 : vector<1x78xf32> to vector<8x78xf32>
    %588 = arith.mulf %582, %587 : vector<8x78xf32>
    %cst_65 = arith.constant dense<0.000000e+00> : vector<8xf32>
    %589 = vector.multi_reduction <add>, %588, %cst_65 [1] : vector<8x78xf32> to vector<8xf32>
    %590 = vector.shape_cast %589 : vector<8xf32> to vector<8x1xf32>
    %591 = arith.addf %4, %590 : vector<8x1xf32>
    %592 = arith.mulf %588, %582 : vector<8x78xf32>
    %cst_66 = arith.constant dense<0.000000e+00> : vector<8xf32>
    %593 = vector.multi_reduction <add>, %592, %cst_66 [1] : vector<8x78xf32> to vector<8xf32>
    %594 = vector.shape_cast %593 : vector<8xf32> to vector<8x1xf32>
    %595 = arith.addf %5, %594 : vector<8x1xf32>
    %c0_67 = arith.constant 0 : index
    %c0_68 = arith.constant 0 : index
    %c0_69 = arith.constant 0 : index
    %596 = vector.load %arg5[%c0_67, %c0_68, %c0_69] : memref<1x8x2xf32, #tpu.memory_space<vmem>>, vector<1x8x1xf32>
    %597 = vector.shape_cast %596 : vector<1x8x1xf32> to vector<8x1xf32>
    %598 = vector.shape_cast %591 : vector<8x1xf32> to vector<1x8x1xf32>
    tpu.vector_store %arg5[%c0_67, %c0_68, %c0_69], %598 {strides = array<i32>} : memref<1x8x2xf32, #tpu.memory_space<vmem>>, vector<1x8x1xf32>,
    %c0_70 = arith.constant 0 : index
    %c0_71 = arith.constant 0 : index
    %c1_72 = arith.constant 1 : index
    %599 = vector.load %arg5[%c0_70, %c0_71, %c1_72] : memref<1x8x2xf32, #tpu.memory_space<vmem>>, vector<1x8x1xf32>
    %600 = vector.shape_cast %599 : vector<1x8x1xf32> to vector<8x1xf32>
    %601 = vector.shape_cast %595 : vector<8x1xf32> to vector<1x8x1xf32>
    tpu.vector_store %arg5[%c0_70, %c0_71, %c1_72], %601 {strides = array<i32>} : memref<1x8x2xf32, #tpu.memory_space<vmem>>, vector<1x8x1xf32>,
    return
  }
  func.func @transform_0(%arg0: i32) -> (i32, i32, i32) {
    %c0_i32 = arith.constant 0 : i32
    %c0_i32_0 = arith.constant 0 : i32
    %c0_i32_1 = arith.constant 0 : i32
    return %arg0, %c0_i32, %c0_i32_0 : i32, i32, i32
  }
  func.func @transform_1(%arg0: i32) -> (i32, i32, i32, i32) {
    %c0_i32 = arith.constant 0 : i32
    %c0_i32_0 = arith.constant 0 : i32
    %c0_i32_1 = arith.constant 0 : i32
    %c0_i32_2 = arith.constant 0 : i32
    %c0_i32_3 = arith.constant 0 : i32
    return %c0_i32, %c0_i32_0, %c0_i32_1, %c0_i32_2 : i32, i32, i32, i32
  }
  func.func @transform_2(%arg0: i32) -> (i32, i32) {
    %c0_i32 = arith.constant 0 : i32
    %c0_i32_0 = arith.constant 0 : i32
    %c0_i32_1 = arith.constant 0 : i32
    return %c0_i32, %c0_i32_0 : i32, i32
  }
  func.func @transform_3(%arg0: i32) -> (i32, i32, i32) {
    %c0_i32 = arith.constant 0 : i32
    %c0_i32_0 = arith.constant 0 : i32
    %c0_i32_1 = arith.constant 0 : i32
    return %arg0, %c0_i32, %c0_i32_0 : i32, i32, i32
  }
  func.func @transform_4(%arg0: i32) -> (i32, i32, i32) {
    %c0_i32 = arith.constant 0 : i32
    %c0_i32_0 = arith.constant 0 : i32
    %c0_i32_1 = arith.constant 0 : i32
    return %arg0, %c0_i32, %c0_i32_0 : i32, i32, i32
  }
}

module attributes {stable_mosaic.version = 11 : i64} {
  func.func @_adder1x1_kernel(%arg0: i32, %arg1: i32, %arg2: memref<1x8x128xf32, #tpu.memory_space<vmem>>, %arg3: memref<1x1x16x8xf32, #tpu.memory_space<vmem>>, %arg4: memref<1x128xf32, #tpu.memory_space<vmem>>, %arg5: memref<1x16x128xf32, #tpu.memory_space<vmem>>, %arg6: memref<1x1x16x2xf32, #tpu.memory_space<vmem>>) attributes {dimension_semantics = [#tpu.dimension_semantics<parallel>, #tpu.dimension_semantics<parallel>], iteration_bounds = array<i64: 2, 1>, scalar_prefetch = 0 : i64, scratch_operands = 0 : i64, tpu.core_type = #tpu.core_type<tc>, window_params = [{transform_indices = @transform_0, window_bounds = array<i64: 1, 8, 128>}, {pipeline_mode = #tpu.pipeline_mode<synchronous>, transform_indices = @transform_1, window_bounds = array<i64: 1, 1, 16, 8>}, {transform_indices = @transform_2, window_bounds = array<i64: 1, 128>}, {transform_indices = @transform_3, window_bounds = array<i64: 1, 16, 128>}, {transform_indices = @transform_4, window_bounds = array<i64: 1, 1, 16, 2>}]} {
    %cst = arith.constant 0.000000e+00 : f32
    %0 = vector.broadcast %cst : f32 to vector<16x128xf32>
    %c0_i32 = arith.constant 0 : i32
    %c8_i32 = arith.constant 8 : i32
    %1 = arith.muli %c0_i32, %c8_i32 : i32
    %2 = tpu.assume_multiple %1, 8 : i32
    %c0 = arith.constant 0 : index
    %3 = arith.index_cast %2 : i32 to index
    %c0_0 = arith.constant 0 : index
    %4 = vector.load %arg2[%c0, %3, %c0_0] : memref<1x8x128xf32, #tpu.memory_space<vmem>>, vector<1x8x128xf32>
    %5 = vector.shape_cast %4 : vector<1x8x128xf32> to vector<8x128xf32>
    %6 = arith.index_cast %c0_i32 : i32 to index
    %c0_1 = arith.constant 0 : index
    %c0_2 = arith.constant 0 : index
    %c0_3 = arith.constant 0 : index
    %7 = vector.load %arg3[%6, %c0_1, %c0_2, %c0_3] : memref<1x1x16x8xf32, #tpu.memory_space<vmem>>, vector<1x1x16x8xf32>
    %8 = vector.shape_cast %7 : vector<1x1x16x8xf32> to vector<16x8xf32>
    %9 = vector.extract_strided_slice %5 {offsets = [0, 0], sizes = [1, 128], strides = [1, 1]} : vector<8x128xf32> to vector<1x128xf32>
    %10 = vector.extract_strided_slice %8 {offsets = [0, 0], sizes = [16, 1], strides = [1, 1]} : vector<16x8xf32> to vector<16x1xf32>
    %11 = vector.broadcast %9 : vector<1x128xf32> to vector<16x128xf32>
    %12 = vector.broadcast %10 : vector<16x1xf32> to vector<16x128xf32>
    %13 = arith.subf %11, %12 : vector<16x128xf32>
    %14 = math.absf %13 : vector<16x128xf32>
    %15 = arith.subf %0, %14 : vector<16x128xf32>
    %16 = vector.extract_strided_slice %5 {offsets = [1, 0], sizes = [1, 128], strides = [1, 1]} : vector<8x128xf32> to vector<1x128xf32>
    %17 = vector.extract_strided_slice %8 {offsets = [0, 1], sizes = [16, 1], strides = [1, 1]} : vector<16x8xf32> to vector<16x1xf32>
    %18 = vector.broadcast %16 : vector<1x128xf32> to vector<16x128xf32>
    %19 = vector.broadcast %17 : vector<16x1xf32> to vector<16x128xf32>
    %20 = arith.subf %18, %19 : vector<16x128xf32>
    %21 = math.absf %20 : vector<16x128xf32>
    %22 = arith.subf %15, %21 : vector<16x128xf32>
    %23 = vector.extract_strided_slice %5 {offsets = [2, 0], sizes = [1, 128], strides = [1, 1]} : vector<8x128xf32> to vector<1x128xf32>
    %24 = vector.extract_strided_slice %8 {offsets = [0, 2], sizes = [16, 1], strides = [1, 1]} : vector<16x8xf32> to vector<16x1xf32>
    %25 = vector.broadcast %23 : vector<1x128xf32> to vector<16x128xf32>
    %26 = vector.broadcast %24 : vector<16x1xf32> to vector<16x128xf32>
    %27 = arith.subf %25, %26 : vector<16x128xf32>
    %28 = math.absf %27 : vector<16x128xf32>
    %29 = arith.subf %22, %28 : vector<16x128xf32>
    %30 = vector.extract_strided_slice %5 {offsets = [3, 0], sizes = [1, 128], strides = [1, 1]} : vector<8x128xf32> to vector<1x128xf32>
    %31 = vector.extract_strided_slice %8 {offsets = [0, 3], sizes = [16, 1], strides = [1, 1]} : vector<16x8xf32> to vector<16x1xf32>
    %32 = vector.broadcast %30 : vector<1x128xf32> to vector<16x128xf32>
    %33 = vector.broadcast %31 : vector<16x1xf32> to vector<16x128xf32>
    %34 = arith.subf %32, %33 : vector<16x128xf32>
    %35 = math.absf %34 : vector<16x128xf32>
    %36 = arith.subf %29, %35 : vector<16x128xf32>
    %37 = vector.extract_strided_slice %5 {offsets = [4, 0], sizes = [1, 128], strides = [1, 1]} : vector<8x128xf32> to vector<1x128xf32>
    %38 = vector.extract_strided_slice %8 {offsets = [0, 4], sizes = [16, 1], strides = [1, 1]} : vector<16x8xf32> to vector<16x1xf32>
    %39 = vector.broadcast %37 : vector<1x128xf32> to vector<16x128xf32>
    %40 = vector.broadcast %38 : vector<16x1xf32> to vector<16x128xf32>
    %41 = arith.subf %39, %40 : vector<16x128xf32>
    %42 = math.absf %41 : vector<16x128xf32>
    %43 = arith.subf %36, %42 : vector<16x128xf32>
    %44 = vector.extract_strided_slice %5 {offsets = [5, 0], sizes = [1, 128], strides = [1, 1]} : vector<8x128xf32> to vector<1x128xf32>
    %45 = vector.extract_strided_slice %8 {offsets = [0, 5], sizes = [16, 1], strides = [1, 1]} : vector<16x8xf32> to vector<16x1xf32>
    %46 = vector.broadcast %44 : vector<1x128xf32> to vector<16x128xf32>
    %47 = vector.broadcast %45 : vector<16x1xf32> to vector<16x128xf32>
    %48 = arith.subf %46, %47 : vector<16x128xf32>
    %49 = math.absf %48 : vector<16x128xf32>
    %50 = arith.subf %43, %49 : vector<16x128xf32>
    %51 = vector.extract_strided_slice %5 {offsets = [6, 0], sizes = [1, 128], strides = [1, 1]} : vector<8x128xf32> to vector<1x128xf32>
    %52 = vector.extract_strided_slice %8 {offsets = [0, 6], sizes = [16, 1], strides = [1, 1]} : vector<16x8xf32> to vector<16x1xf32>
    %53 = vector.broadcast %51 : vector<1x128xf32> to vector<16x128xf32>
    %54 = vector.broadcast %52 : vector<16x1xf32> to vector<16x128xf32>
    %55 = arith.subf %53, %54 : vector<16x128xf32>
    %56 = math.absf %55 : vector<16x128xf32>
    %57 = arith.subf %50, %56 : vector<16x128xf32>
    %58 = vector.extract_strided_slice %5 {offsets = [7, 0], sizes = [1, 128], strides = [1, 1]} : vector<8x128xf32> to vector<1x128xf32>
    %59 = vector.extract_strided_slice %8 {offsets = [0, 7], sizes = [16, 1], strides = [1, 1]} : vector<16x8xf32> to vector<16x1xf32>
    %60 = vector.broadcast %58 : vector<1x128xf32> to vector<16x128xf32>
    %61 = vector.broadcast %59 : vector<16x1xf32> to vector<16x128xf32>
    %62 = arith.subf %60, %61 : vector<16x128xf32>
    %63 = math.absf %62 : vector<16x128xf32>
    %64 = arith.subf %57, %63 : vector<16x128xf32>
    %c1_i32 = arith.constant 1 : i32
    %c0_4 = arith.constant 0 : index
    %c0_5 = arith.constant 0 : index
    %c0_6 = arith.constant 0 : index
    %65 = vector.load %arg5[%c0_4, %c0_5, %c0_6] : memref<1x16x128xf32, #tpu.memory_space<vmem>>, vector<1x16x128xf32>
    %66 = vector.shape_cast %65 : vector<1x16x128xf32> to vector<16x128xf32>
    %67 = vector.shape_cast %64 : vector<16x128xf32> to vector<1x16x128xf32>
    tpu.vector_store %arg5[%c0_4, %c0_5, %c0_6], %67 {strides = array<i32>} : memref<1x16x128xf32, #tpu.memory_space<vmem>>, vector<1x16x128xf32>,
    %c0_7 = arith.constant 0 : index
    %c0_8 = arith.constant 0 : index
    %68 = vector.load %arg4[%c0_7, %c0_8] : memref<1x128xf32, #tpu.memory_space<vmem>>, vector<1x128xf32>
    %69 = vector.broadcast %68 : vector<1x128xf32> to vector<16x128xf32>
    %70 = arith.mulf %64, %69 : vector<16x128xf32>
    %cst_9 = arith.constant dense<0.000000e+00> : vector<16xf32>
    %71 = vector.multi_reduction <add>, %70, %cst_9 [1] : vector<16x128xf32> to vector<16xf32>
    %72 = vector.shape_cast %71 : vector<16xf32> to vector<16x1xf32>
    %c0_10 = arith.constant 0 : index
    %c0_11 = arith.constant 0 : index
    %c0_12 = arith.constant 0 : index
    %c0_13 = arith.constant 0 : index
    %73 = vector.load %arg6[%c0_10, %c0_11, %c0_12, %c0_13] : memref<1x1x16x2xf32, #tpu.memory_space<vmem>>, vector<1x1x16x1xf32>
    %74 = vector.shape_cast %73 : vector<1x1x16x1xf32> to vector<16x1xf32>
    %75 = vector.shape_cast %72 : vector<16x1xf32> to vector<1x1x16x1xf32>
    tpu.vector_store %arg6[%c0_10, %c0_11, %c0_12, %c0_13], %75 {strides = array<i32>} : memref<1x1x16x2xf32, #tpu.memory_space<vmem>>, vector<1x1x16x1xf32>,
    %76 = arith.mulf %70, %64 : vector<16x128xf32>
    %cst_14 = arith.constant dense<0.000000e+00> : vector<16xf32>
    %77 = vector.multi_reduction <add>, %76, %cst_14 [1] : vector<16x128xf32> to vector<16xf32>
    %78 = vector.shape_cast %77 : vector<16xf32> to vector<16x1xf32>
    %c0_15 = arith.constant 0 : index
    %c0_16 = arith.constant 0 : index
    %c0_17 = arith.constant 0 : index
    %c1 = arith.constant 1 : index
    %79 = vector.load %arg6[%c0_15, %c0_16, %c0_17, %c1] : memref<1x1x16x2xf32, #tpu.memory_space<vmem>>, vector<1x1x16x1xf32>
    %80 = vector.shape_cast %79 : vector<1x1x16x1xf32> to vector<16x1xf32>
    %81 = vector.shape_cast %78 : vector<16x1xf32> to vector<1x1x16x1xf32>
    tpu.vector_store %arg6[%c0_15, %c0_16, %c0_17, %c1], %81 {strides = array<i32>} : memref<1x1x16x2xf32, #tpu.memory_space<vmem>>, vector<1x1x16x1xf32>,
    return
  }
  func.func @transform_0(%arg0: i32, %arg1: i32) -> (i32, i32, i32) {
    %c0_i32 = arith.constant 0 : i32
    %c0_i32_0 = arith.constant 0 : i32
    return %arg0, %c0_i32, %arg1 : i32, i32, i32
  }
  func.func @transform_1(%arg0: i32, %arg1: i32) -> (i32, i32, i32, i32) {
    %c0_i32 = arith.constant 0 : i32
    %c0_i32_0 = arith.constant 0 : i32
    %c0_i32_1 = arith.constant 0 : i32
    %c0_i32_2 = arith.constant 0 : i32
    %c0_i32_3 = arith.constant 0 : i32
    return %c0_i32, %c0_i32_0, %c0_i32_1, %c0_i32_2 : i32, i32, i32, i32
  }
  func.func @transform_2(%arg0: i32, %arg1: i32) -> (i32, i32) {
    %c0_i32 = arith.constant 0 : i32
    %c0_i32_0 = arith.constant 0 : i32
    return %c0_i32, %arg1 : i32, i32
  }
  func.func @transform_3(%arg0: i32, %arg1: i32) -> (i32, i32, i32) {
    %c0_i32 = arith.constant 0 : i32
    %c0_i32_0 = arith.constant 0 : i32
    return %arg0, %c0_i32, %arg1 : i32, i32, i32
  }
  func.func @transform_4(%arg0: i32, %arg1: i32) -> (i32, i32, i32, i32) {
    %c0_i32 = arith.constant 0 : i32
    %c0_i32_0 = arith.constant 0 : i32
    %c0_i32_1 = arith.constant 0 : i32
    return %arg0, %arg1, %c0_i32, %c0_i32_0 : i32, i32, i32, i32
  }
}

module attributes {stable_mosaic.version = 11 : i64} {
  func.func @_bn_add_relu_kernel(%arg0: i32, %arg1: i32, %arg2: memref<1x16x128xf32, #tpu.memory_space<vmem>>, %arg3: memref<1x16x128xf32, #tpu.memory_space<vmem>>, %arg4: memref<16x1xf32, #tpu.memory_space<vmem>>, %arg5: memref<16x1xf32, #tpu.memory_space<vmem>>, %arg6: memref<1x16x128xf32, #tpu.memory_space<vmem>>) attributes {dimension_semantics = [#tpu.dimension_semantics<parallel>, #tpu.dimension_semantics<parallel>], iteration_bounds = array<i64: 2, 1>, scalar_prefetch = 0 : i64, scratch_operands = 0 : i64, tpu.core_type = #tpu.core_type<tc>, window_params = [{transform_indices = @transform_0, window_bounds = array<i64: 1, 16, 128>}, {transform_indices = @transform_1, window_bounds = array<i64: 1, 16, 128>}, {pipeline_mode = #tpu.pipeline_mode<synchronous>, transform_indices = @transform_2, window_bounds = array<i64: 16, 1>}, {pipeline_mode = #tpu.pipeline_mode<synchronous>, transform_indices = @transform_3, window_bounds = array<i64: 16, 1>}, {transform_indices = @transform_4, window_bounds = array<i64: 1, 16, 128>}]} {
    %c0 = arith.constant 0 : index
    %c0_0 = arith.constant 0 : index
    %c0_1 = arith.constant 0 : index
    %0 = vector.load %arg2[%c0, %c0_0, %c0_1] : memref<1x16x128xf32, #tpu.memory_space<vmem>>, vector<1x16x128xf32>
    %1 = vector.shape_cast %0 : vector<1x16x128xf32> to vector<16x128xf32>
    %c0_2 = arith.constant 0 : index
    %c0_3 = arith.constant 0 : index
    %2 = vector.load %arg4[%c0_2, %c0_3] : memref<16x1xf32, #tpu.memory_space<vmem>>, vector<16x1xf32>
    %3 = vector.broadcast %2 : vector<16x1xf32> to vector<16x128xf32>
    %4 = arith.mulf %1, %3 : vector<16x128xf32>
    %c0_4 = arith.constant 0 : index
    %c0_5 = arith.constant 0 : index
    %5 = vector.load %arg5[%c0_4, %c0_5] : memref<16x1xf32, #tpu.memory_space<vmem>>, vector<16x1xf32>
    %6 = vector.broadcast %5 : vector<16x1xf32> to vector<16x128xf32>
    %7 = arith.addf %4, %6 : vector<16x128xf32>
    %c0_6 = arith.constant 0 : index
    %c0_7 = arith.constant 0 : index
    %c0_8 = arith.constant 0 : index
    %8 = vector.load %arg3[%c0_6, %c0_7, %c0_8] : memref<1x16x128xf32, #tpu.memory_space<vmem>>, vector<1x16x128xf32>
    %9 = vector.shape_cast %8 : vector<1x16x128xf32> to vector<16x128xf32>
    %10 = arith.addf %7, %9 : vector<16x128xf32>
    %cst = arith.constant 0.000000e+00 : f32
    %11 = vector.broadcast %cst : f32 to vector<16x128xf32>
    %12 = arith.maximumf %10, %11 : vector<16x128xf32>
    %c0_9 = arith.constant 0 : index
    %c0_10 = arith.constant 0 : index
    %c0_11 = arith.constant 0 : index
    %13 = vector.load %arg6[%c0_9, %c0_10, %c0_11] : memref<1x16x128xf32, #tpu.memory_space<vmem>>, vector<1x16x128xf32>
    %14 = vector.shape_cast %13 : vector<1x16x128xf32> to vector<16x128xf32>
    %15 = vector.shape_cast %12 : vector<16x128xf32> to vector<1x16x128xf32>
    tpu.vector_store %arg6[%c0_9, %c0_10, %c0_11], %15 {strides = array<i32>} : memref<1x16x128xf32, #tpu.memory_space<vmem>>, vector<1x16x128xf32>,
    return
  }
  func.func @transform_0(%arg0: i32, %arg1: i32) -> (i32, i32, i32) {
    %c0_i32 = arith.constant 0 : i32
    %c0_i32_0 = arith.constant 0 : i32
    return %arg0, %c0_i32, %arg1 : i32, i32, i32
  }
  func.func @transform_1(%arg0: i32, %arg1: i32) -> (i32, i32, i32) {
    %c0_i32 = arith.constant 0 : i32
    %c0_i32_0 = arith.constant 0 : i32
    return %arg0, %c0_i32, %arg1 : i32, i32, i32
  }
  func.func @transform_2(%arg0: i32, %arg1: i32) -> (i32, i32) {
    %c0_i32 = arith.constant 0 : i32
    %c0_i32_0 = arith.constant 0 : i32
    %c0_i32_1 = arith.constant 0 : i32
    return %c0_i32, %c0_i32_0 : i32, i32
  }
  func.func @transform_3(%arg0: i32, %arg1: i32) -> (i32, i32) {
    %c0_i32 = arith.constant 0 : i32
    %c0_i32_0 = arith.constant 0 : i32
    %c0_i32_1 = arith.constant 0 : i32
    return %c0_i32, %c0_i32_0 : i32, i32
  }
  func.func @transform_4(%arg0: i32, %arg1: i32) -> (i32, i32, i32) {
    %c0_i32 = arith.constant 0 : i32
    %c0_i32_0 = arith.constant 0 : i32
    return %arg0, %c0_i32, %arg1 : i32, i32, i32
  }
}

</mosaic_0001>

<llo_original>
// kernel: bottleneck_forward.7
$region0: #{bottleneck_forward.7}
  #allocation0 [shape = 'u32[]', space=smem, size = 0x4, offset = 0x4, fixed_abs, tag = 'smem constant byte address 0x4 - core index']
  #allocation1 [shape = 'u32[72,128]{1,0:T(1,128)}', space=vmem, size = 0x9000, scoped, tag = 'internal scratch']
  %s0 = inlined_call_operand.vmem [shape: f32[2,8,128], index: 0, kind: input, shape index: {}]
  %s1 = inlined_call_operand.vmem [shape: f32[8,1], index: 1, kind: input, shape index: {}]
  %s2 = inlined_call_operand.vmem [shape: f32[8,1], index: 2, kind: input, shape index: {}]
  %s3 = inlined_call_operand.vmem [shape: f32[1,128], index: 3, kind: input, shape index: {}]
  %s4 = inlined_call_operand.vmem [shape: f32[2,8,128], index: 4, kind: output, shape index: {}]
  %s5 = sld [smem:[#allocation0]]
  $region49: #{bottleneck_forward.7} parent=0
    _
  %s7 = ssub.s32 1, %s5
  %s8 = scalar_select 0, %s7, %s5
  loop: start=0, step=1, limit=4
  $region2: #{bottleneck_forward.7} parent=0 // loop_pre_header
    _
  $region3: #{bottleneck_forward.7} parent=0 // loop_header
    %s10 = sphi 0, %s14
    %p11 = scmp.ge.s32.totalorder %s10, 4
    %s17 = sphi 0, %s29
    %s18 = sphi 0, %s25
    %s19 = sphi 0, %s17
    %s20 = sphi 0, %s18
    %s21 = sphi 0, %s19
    %s22 = sphi 0, %s20
    %s34 = sphi 0, %s36
    %s37 = sphi 0, %s34
    %s38 = sphi 0, %s37
    %s54 = sphi 0, %s38
    %s58 = sphi 0, %s58
    %s60 = sphi 0, %s58
    %s61 = sphi 0, %s60
    %s75 = sphi 0, %s61
    %s79 = sphi 0, %s79
    %s81 = sphi 0, %s79
    %s82 = sphi 0, %s81
    %s96 = sphi 0, %s82
    %s102 = sphi 0, %s104
    %s105 = sphi 0, %s102
    %s106 = sphi 0, %s105
    %s122 = sphi 0, %s106
    %s130 = sphi 0, %s132
    %s133 = sphi 0, %s130
    %s134 = sphi 0, %s133
    %s150 = sphi 0, %s134
  $region4: #{bottleneck_forward.7} parent=0 // loop_header_branch
    %13 = sbr.rel (%p11) target = $region8
  $region5: #{bottleneck_forward.7} parent=0 // loop_body
    %s15 = ssub.s32 %s10, 1
    %s16 = ssub.s32 %s10, 2
    %s23 = sadd.s32 1, %s18
    %p24 = scmp.ge.s32.totalorder %s23, 1
    %s25 = scalar_select %p24, 0, %s23
    %s26 = sadd.s32 1, %s17
    %s27 = scalar_select %p24, %s26, %s17
    %p28 = scmp.ge.s32.totalorder %s27, 2
    %s29 = scalar_select %p28, 0, %s27
    %s30 = ssub.s32 %s17, %s29
    %s31 = ssub.s32 %s18, %s25
    %s32 = sor.u32 %s30, %s31
    %p33 = scmp.eq.s32.totalorder %s32, 0
    %s35 = sadd.s32 %s34, 1
    %s36 = scalar_select %p33, %s34, %s35
    %p39 = pneg %p33
    %p40 = scmp.eq.s32.totalorder %s10, 1
    %p41 = por %p39, %p40
    %p42 = scmp.ne.s32.totalorder %s34, %s37
    %p43 = scmp.eq.s32.totalorder %s10, 0
    %p44 = por %p42, %p43
    %p45 = scmp.ne.s32.totalorder %s34, %s37
    %p46 = scmp.eq.s32.totalorder %s15, 1
    %p47 = por %p45, %p46
    %p48 = scmp.ne.s32.totalorder %s37, %s38
    %p49 = scmp.eq.s32.totalorder %s15, 0
    %p50 = por %p48, %p49
    %p51 = scmp.ne.s32.totalorder %s37, %s38
    %p52 = scmp.eq.s32.totalorder %s16, 1
    %p53 = por %p51, %p52
    %p55 = scmp.ne.s32.totalorder %s38, %s54
    %p56 = scmp.eq.s32.totalorder %s16, 0
    %p57 = por %p55, %p56
    %s59 = sadd.s32 %s58, 1
    %p62 = scmp.eq.s32.totalorder %s10, 1
    %p63 = scmp.ne.s32.totalorder %s58, %s60
    %p64 = scmp.eq.s32.totalorder %s10, 0
    %p65 = por %p63, %p64
    %p66 = scmp.ne.s32.totalorder %s58, %s60
    %p67 = scmp.eq.s32.totalorder %s15, 1
    %p68 = por %p66, %p67
    %p69 = scmp.ne.s32.totalorder %s60, %s61
    %p70 = scmp.eq.s32.totalorder %s15, 0
    %p71 = por %p69, %p70
    %p72 = scmp.ne.s32.totalorder %s60, %s61
    %p73 = scmp.eq.s32.totalorder %s16, 1
    %p74 = por %p72, %p73
    %p76 = scmp.ne.s32.totalorder %s61, %s75
    %p77 = scmp.eq.s32.totalorder %s16, 0
    %p78 = por %p76, %p77
    %s80 = sadd.s32 %s79, 1
    %p83 = scmp.eq.s32.totalorder %s10, 1
    %p84 = scmp.ne.s32.totalorder %s79, %s81
    %p85 = scmp.eq.s32.totalorder %s10, 0
    %p86 = por %p84, %p85
    %p87 = scmp.ne.s32.totalorder %s79, %s81
    %p88 = scmp.eq.s32.totalorder %s15, 1
    %p89 = por %p87, %p88
    %p90 = scmp.ne.s32.totalorder %s81, %s82
    %p91 = scmp.eq.s32.totalorder %s15, 0
    %p92 = por %p90, %p91
    %p93 = scmp.ne.s32.totalorder %s81, %s82
    %p94 = scmp.eq.s32.totalorder %s16, 1
    %p95 = por %p93, %p94
    %p97 = scmp.ne.s32.totalorder %s82, %s96
    %p98 = scmp.eq.s32.totalorder %s16, 0
    %p99 = por %p97, %p98
    %s100 = ssub.s32 %s18, %s25
    %p101 = scmp.eq.s32.totalorder %s100, 0
    %s103 = sadd.s32 %s102, 1
    %s104 = scalar_select %p101, %s102, %s103
    %p107 = pneg %p101
    %p108 = scmp.eq.s32.totalorder %s10, 1
    %p109 = por %p107, %p108
    %p110 = scmp.ne.s32.totalorder %s102, %s105
    %p111 = scmp.eq.s32.totalorder %s10, 0
    %p112 = por %p110, %p111
    %p113 = scmp.ne.s32.totalorder %s102, %s105
    %p114 = scmp.eq.s32.totalorder %s15, 1
    %p115 = por %p113, %p114
    %p116 = scmp.ne.s32.totalorder %s105, %s106
    %p117 = scmp.eq.s32.totalorder %s15, 0
    %p118 = por %p116, %p117
    %p119 = scmp.ne.s32.totalorder %s105, %s106
    %p120 = scmp.eq.s32.totalorder %s16, 1
    %p121 = por %p119, %p120
    %p123 = scmp.ne.s32.totalorder %s106, %s122
    %p124 = scmp.eq.s32.totalorder %s16, 0
    %p125 = por %p123, %p124
    %s126 = ssub.s32 %s17, %s29
    %s127 = ssub.s32 %s18, %s25
    %s128 = sor.u32 %s126, %s127
    %p129 = scmp.eq.s32.totalorder %s128, 0
    %s131 = sadd.s32 %s130, 1
    %s132 = scalar_select %p129, %s130, %s131
    %p135 = pneg %p129
    %p136 = scmp.eq.s32.totalorder %s10, 1
    %p137 = por %p135, %p136
    %p138 = scmp.ne.s32.totalorder %s130, %s133
    %p139 = scmp.eq.s32.totalorder %s10, 0
    %p140 = por %p138, %p139
    %p141 = scmp.ne.s32.totalorder %s130, %s133
    %p142 = scmp.eq.s32.totalorder %s15, 1
    %p143 = por %p141, %p142
    %p144 = scmp.ne.s32.totalorder %s133, %s134
    %p145 = scmp.eq.s32.totalorder %s15, 0
    %p146 = por %p144, %p145
    %p147 = scmp.ne.s32.totalorder %s133, %s134
    %p148 = scmp.eq.s32.totalorder %s16, 1
    %p149 = por %p147, %p148
    %p151 = scmp.ne.s32.totalorder %s134, %s150
    %p152 = scmp.eq.s32.totalorder %s16, 0
    %p153 = por %p151, %p152
    %p154 = scmp.le.s32.totalorder 1, %s10
    %p155 = scmp.lt.s32.totalorder %s10, 3
    %p156 = pnand %p154, %p155
    %p157 = pneg %p156
    // Predicated region
    $region9: #{bottleneck_forward.7} parent=5 // pred_check
      _
    $region10: #{bottleneck_forward.7} parent=5 // pred_check_branch
      %159 = sbr.rel (%p156) target = $region12
    $region11: #{bottleneck_forward.7} parent=5 // pred_region
      %s160 = ssub.s32 %s10, 1
      // Predicated region
      $region13: #{bottleneck_forward.7} parent=11 // pred_check
        %p161 = pneg %p71
      $region14: #{bottleneck_forward.7} parent=11 // pred_check_branch
        %163 = sbr.rel (%p161) target = $region16
      $region15: #{bottleneck_forward.7} parent=11 // pred_region
        _
      $region16: #{bottleneck_forward.7} parent=11 // pred_fallthru
        _
      // Predicated region
      $region17: #{bottleneck_forward.7} parent=11 // pred_check
        %p164 = pneg %p92
      $region18: #{bottleneck_forward.7} parent=11 // pred_check_branch
        %166 = sbr.rel (%p164) target = $region20
      $region19: #{bottleneck_forward.7} parent=11 // pred_region
        _
      $region20: #{bottleneck_forward.7} parent=11 // pred_fallthru
        _
      // Predicated region
      $region21: #{bottleneck_forward.7} parent=11 // pred_check
        %p167 = pneg %p118
      $region22: #{bottleneck_forward.7} parent=11 // pred_check_branch
        %169 = sbr.rel (%p167) target = $region24
      $region23: #{bottleneck_forward.7} parent=11 // pred_region
        %p170 = scmp.lt.s32.totalorder %s20, 0
        %s171 = scalar_select %p170, %s20, 0
        %s172 = scalar_lea.vmem %s3, %s171
      $region24: #{bottleneck_forward.7} parent=11 // pred_fallthru
        _
    $region12: #{bottleneck_forward.7} parent=5 // pred_fallthru
      _
    %p173 = scmp.lt.s32.totalorder %s10, 2
    // Predicated region
    $region25: #{bottleneck_forward.7} parent=5 // pred_check
      %p174 = pneg %p173
    $region26: #{bottleneck_forward.7} parent=5 // pred_check_branch
      %176 = sbr.rel (%p174) target = $region28
    $region27: #{bottleneck_forward.7} parent=5 // pred_region
      // Predicated region
      $region29: #{bottleneck_forward.7} parent=27 // pred_check
        %p177 = pneg %p44
      $region30: #{bottleneck_forward.7} parent=27 // pred_check_branch
        %179 = sbr.rel (%p177) target = $region32
      $region31: #{bottleneck_forward.7} parent=27 // pred_region
        %p180 = scmp.lt.s32.totalorder %s17, 1
        %s181 = scalar_select %p180, %s17, 1
        %p182 = scmp.lt.s32.totalorder %s18, 0
        %s183 = scalar_select %p182, %s18, 0
        %s184 = sadd.s32 %s183, %s181
        %s185 = smul.addr %s184, 8
        %s186 = scalar_lea.vmem %s0, %s185
      $region32: #{bottleneck_forward.7} parent=27 // pred_fallthru
        _
    $region28: #{bottleneck_forward.7} parent=5 // pred_fallthru
      _
    %p187 = scmp.le.s32.totalorder 1, %s10
    %p188 = scmp.lt.s32.totalorder %s10, 3
    %p189 = pnand %p187, %p188
    %p190 = pneg %p189
    // Predicated region
    $region33: #{bottleneck_forward.7} parent=5 // pred_check
      _
    $region34: #{bottleneck_forward.7} parent=5 // pred_check_branch
      %192 = sbr.rel (%p189) target = $region36
    $region35: #{bottleneck_forward.7} parent=5 // pred_region
      %s193 = ssub.s32 %s10, 1
      %p194 = scmp.lt.s32.totalorder %s19, 1
      %s195 = scalar_select %p194, %s19, 1
      %p196 = scmp.lt.s32.totalorder %s20, 0
      %s197 = scalar_select %p196, %s20, 0
      %s198 = sadd.s32 %s197, %s195
      %s199 = smul.addr %s198, 8
      %s200 = scalar_lea.vmem %s0, %s199
      %p201 = pneg %p50
      %p202 = pneg %p47
      %p203 = pneg %p71
      %p204 = pneg %p68
      %p205 = pneg %p92
      %p206 = pneg %p89
      %p207 = scmp.lt.s32.totalorder %s20, 0
      %s208 = scalar_select %p207, %s20, 0
      %s209 = scalar_lea.vmem %s3, %s208
      %p210 = pneg %p118
      %p211 = pneg %p115
      %p212 = pneg %p146
      %p213 = pneg %p143
      %p214 = scmp.lt.s32.totalorder %s19, 1
      %s215 = scalar_select %p214, %s19, 1
      %p216 = scmp.lt.s32.totalorder %s20, 0
      %s217 = scalar_select %p216, %s20, 0
      %s218 = sadd.s32 %s217, %s215
      %s219 = smul.addr %s218, 8
      %s220 = scalar_lea.vmem %s4, %s219
      %p221 = scmp.lt.s32.totalorder %s19, 1
      %s222 = scalar_select %p221, %s19, 1
      %p223 = scmp.lt.s32.totalorder %s20, 0
      %s224 = scalar_select %p223, %s20, 0
      %s225 = sadd.s32 %s224, %s222
      %s226 = smul.addr %s225, 8
      %s227 = scalar_lea.vmem %s0, %s226
      %p228 = scmp.lt.s32.totalorder %s20, 0
      %s229 = scalar_select %p228, %s20, 0
      %s230 = scalar_lea.vmem %s3, %s229
      %p231 = scmp.lt.s32.totalorder %s19, 1
      %s232 = scalar_select %p231, %s19, 1
      %p233 = scmp.lt.s32.totalorder %s20, 0
      %s234 = scalar_select %p233, %s20, 0
      %s235 = sadd.s32 %s234, %s232
      %s236 = smul.addr %s235, 8
      %s237 = scalar_lea.vmem %s4, %s236
      %v238 = vld [vmem:[%s227] sm:$0xff]
      %v239 = vld [vmem:[%s1] sm:$0xff]
      %241 = vset.pattern.permute.xlu0 0
      %242 = vperm.xlu0 %241, %v239
      %v243 = vpop.permute.xlu0 %242
      %v245 = vmul.f32 %v238, %v243
      %v246 = vld [vmem:[%s2] sm:$0xff]
      %248 = vset.pattern.permute.xlu0 0
      %249 = vperm.xlu0 %248, %v246
      %v250 = vpop.permute.xlu0 %249
      %v252 = vadd.f32 %v245, %v250
      %v253 = vmax.f32 %v252, 0.0
      %v254 = vld [vmem:[%s230] sm:$0x1]
      %v256 = vperm.slane %v254, 0
      %v258 = vmul.f32 %v253, %v256
      %259 = vst [vmem:[%s237] sm:$0xff] %v258
      %p260 = scmp.lt.s32.totalorder %s19, 1
      %s261 = scalar_select %p260, %s19, 1
      %p262 = scmp.lt.s32.totalorder %s20, 0
      %s263 = scalar_select %p262, %s20, 0
      %s264 = sadd.s32 %s263, %s261
      %s265 = smul.addr %s264, 8
      %s266 = scalar_lea.vmem %s4, %s265
      // Predicated region
      $region37: #{bottleneck_forward.7} parent=35 // pred_check
        %p267 = pneg %p143
      $region38: #{bottleneck_forward.7} parent=35 // pred_check_branch
        %269 = sbr.rel (%p267) target = $region40
      $region39: #{bottleneck_forward.7} parent=35 // pred_region
        _
      $region40: #{bottleneck_forward.7} parent=35 // pred_fallthru
        _
    $region36: #{bottleneck_forward.7} parent=5 // pred_fallthru
      _
    %p270 = scmp.le.s32.totalorder 2, %s10
    // Predicated region
    $region41: #{bottleneck_forward.7} parent=5 // pred_check
      %p271 = pneg %p270
    $region42: #{bottleneck_forward.7} parent=5 // pred_check_branch
      %273 = sbr.rel (%p271) target = $region44
    $region43: #{bottleneck_forward.7} parent=5 // pred_region
      %s274 = ssub.s32 %s10, 2
      // Predicated region
      $region45: #{bottleneck_forward.7} parent=43 // pred_check
        %p275 = pneg %p149
      $region46: #{bottleneck_forward.7} parent=43 // pred_check_branch
        %277 = sbr.rel (%p275) target = $region48
      $region47: #{bottleneck_forward.7} parent=43 // pred_region
        %p278 = scmp.lt.s32.totalorder %s21, 1
        %s279 = scalar_select %p278, %s21, 1
        %p280 = scmp.lt.s32.totalorder %s22, 0
        %s281 = scalar_select %p280, %s22, 0
        %s282 = sadd.s32 %s281, %s279
        %s283 = smul.addr %s282, 8
        %s284 = scalar_lea.vmem %s4, %s283
      $region48: #{bottleneck_forward.7} parent=43 // pred_fallthru
        _
    $region44: #{bottleneck_forward.7} parent=5 // pred_fallthru
      _
  $region6: #{bottleneck_forward.7} parent=0 // loop_footer
    %s14 = sadd.s32 1, %s10
  $region7: #{bottleneck_forward.7} parent=0 // loop_footer_branch
    %9 = sbr.rel target = $region3
  $region8: #{bottleneck_forward.7} parent=0 // loop_exit
    _

// kernel: bottleneck_forward.6
$region0: #{bottleneck_forward.6}
  #allocation0 [shape = 'u32[]', space=smem, size = 0x4, offset = 0x4, fixed_abs, tag = 'smem constant byte address 0x4 - core index']
  #allocation1 [shape = 'u32[72,128]{1,0:T(1,128)}', space=vmem, size = 0x9000, scoped, tag = 'internal scratch']
  %s0 = inlined_call_operand.vmem [shape: f32[2,16,128], index: 0, kind: input, shape index: {}]
  %s1 = inlined_call_operand.vmem [shape: f32[2,1,8,8], index: 1, kind: input, shape index: {}]
  %s2 = inlined_call_operand.vmem [shape: f32[1,128], index: 2, kind: input, shape index: {}]
  %s3 = inlined_call_operand.vmem [shape: f32[2,8,128], index: 3, kind: output, shape index: {0}]
  %s4 = inlined_call_operand.vmem [shape: f32[2,1,8,2], index: 4, kind: output, shape index: {1}]
  %5 = xla_tuple %s3, %s4
  %s6 = sld [smem:[#allocation0]]
  $region60: #{bottleneck_forward.6} parent=0
    _
  %s8 = ssub.s32 1, %s6
  %s9 = scalar_select 0, %s8, %s6
  loop: start=0, step=1, limit=4
  $region2: #{bottleneck_forward.6} parent=0 // loop_pre_header
    _
  $region3: #{bottleneck_forward.6} parent=0 // loop_header
    %s11 = sphi 0, %s15
    %p12 = scmp.ge.s32.totalorder %s11, 4
    %s18 = sphi 0, %s30
    %s19 = sphi 0, %s26
    %s20 = sphi 0, %s18
    %s21 = sphi 0, %s19
    %s22 = sphi 0, %s20
    %s23 = sphi 0, %s21
    %s35 = sphi 0, %s37
    %s38 = sphi 0, %s35
    %s39 = sphi 0, %s38
    %s55 = sphi 0, %s39
    %s59 = sphi 0, %s59
    %s61 = sphi 0, %s59
    %s62 = sphi 0, %s61
    %s76 = sphi 0, %s62
    %s82 = sphi 0, %s84
    %s85 = sphi 0, %s82
    %s86 = sphi 0, %s85
    %s102 = sphi 0, %s86
    %s110 = sphi 0, %s112
    %s113 = sphi 0, %s110
    %s114 = sphi 0, %s113
    %s130 = sphi 0, %s114
    %s138 = sphi 0, %s140
    %s141 = sphi 0, %s138
    %s142 = sphi 0, %s141
    %s158 = sphi 0, %s142
  $region4: #{bottleneck_forward.6} parent=0 // loop_header_branch
    %14 = sbr.rel (%p12) target = $region8
  $region5: #{bottleneck_forward.6} parent=0 // loop_body
    %s16 = ssub.s32 %s11, 1
    %s17 = ssub.s32 %s11, 2
    %s24 = sadd.s32 1, %s19
    %p25 = scmp.ge.s32.totalorder %s24, 1
    %s26 = scalar_select %p25, 0, %s24
    %s27 = sadd.s32 1, %s18
    %s28 = scalar_select %p25, %s27, %s18
    %p29 = scmp.ge.s32.totalorder %s28, 2
    %s30 = scalar_select %p29, 0, %s28
    %s31 = ssub.s32 %s18, %s30
    %s32 = ssub.s32 %s19, %s26
    %s33 = sor.u32 %s31, %s32
    %p34 = scmp.eq.s32.totalorder %s33, 0
    %s36 = sadd.s32 %s35, 1
    %s37 = scalar_select %p34, %s35, %s36
    %p40 = pneg %p34
    %p41 = scmp.eq.s32.totalorder %s11, 1
    %p42 = por %p40, %p41
    %p43 = scmp.ne.s32.totalorder %s35, %s38
    %p44 = scmp.eq.s32.totalorder %s11, 0
    %p45 = por %p43, %p44
    %p46 = scmp.ne.s32.totalorder %s35, %s38
    %p47 = scmp.eq.s32.totalorder %s16, 1
    %p48 = por %p46, %p47
    %p49 = scmp.ne.s32.totalorder %s38, %s39
    %p50 = scmp.eq.s32.totalorder %s16, 0
    %p51 = por %p49, %p50
    %p52 = scmp.ne.s32.totalorder %s38, %s39
    %p53 = scmp.eq.s32.totalorder %s17, 1
    %p54 = por %p52, %p53
    %p56 = scmp.ne.s32.totalorder %s39, %s55
    %p57 = scmp.eq.s32.totalorder %s17, 0
    %p58 = por %p56, %p57
    %s60 = sadd.s32 %s59, 1
    %p63 = scmp.eq.s32.totalorder %s11, 1
    %p64 = scmp.ne.s32.totalorder %s59, %s61
    %p65 = scmp.eq.s32.totalorder %s11, 0
    %p66 = por %p64, %p65
    %p67 = scmp.ne.s32.totalorder %s59, %s61
    %p68 = scmp.eq.s32.totalorder %s16, 1
    %p69 = por %p67, %p68
    %p70 = scmp.ne.s32.totalorder %s61, %s62
    %p71 = scmp.eq.s32.totalorder %s16, 0
    %p72 = por %p70, %p71
    %p73 = scmp.ne.s32.totalorder %s61, %s62
    %p74 = scmp.eq.s32.totalorder %s17, 1
    %p75 = por %p73, %p74
    %p77 = scmp.ne.s32.totalorder %s62, %s76
    %p78 = scmp.eq.s32.totalorder %s17, 0
    %p79 = por %p77, %p78
    %s80 = ssub.s32 %s19, %s26
    %p81 = scmp.eq.s32.totalorder %s80, 0
    %s83 = sadd.s32 %s82, 1
    %s84 = scalar_select %p81, %s82, %s83
    %p87 = pneg %p81
    %p88 = scmp.eq.s32.totalorder %s11, 1
    %p89 = por %p87, %p88
    %p90 = scmp.ne.s32.totalorder %s82, %s85
    %p91 = scmp.eq.s32.totalorder %s11, 0
    %p92 = por %p90, %p91
    %p93 = scmp.ne.s32.totalorder %s82, %s85
    %p94 = scmp.eq.s32.totalorder %s16, 1
    %p95 = por %p93, %p94
    %p96 = scmp.ne.s32.totalorder %s85, %s86
    %p97 = scmp.eq.s32.totalorder %s16, 0
    %p98 = por %p96, %p97
    %p99 = scmp.ne.s32.totalorder %s85, %s86
    %p100 = scmp.eq.s32.totalorder %s17, 1
    %p101 = por %p99, %p100
    %p103 = scmp.ne.s32.totalorder %s86, %s102
    %p104 = scmp.eq.s32.totalorder %s17, 0
    %p105 = por %p103, %p104
    %s106 = ssub.s32 %s18, %s30
    %s107 = ssub.s32 %s19, %s26
    %s108 = sor.u32 %s106, %s107
    %p109 = scmp.eq.s32.totalorder %s108, 0
    %s111 = sadd.s32 %s110, 1
    %s112 = scalar_select %p109, %s110, %s111
    %p115 = pneg %p109
    %p116 = scmp.eq.s32.totalorder %s11, 1
    %p117 = por %p115, %p116
    %p118 = scmp.ne.s32.totalorder %s110, %s113
    %p119 = scmp.eq.s32.totalorder %s11, 0
    %p120 = por %p118, %p119
    %p121 = scmp.ne.s32.totalorder %s110, %s113
    %p122 = scmp.eq.s32.totalorder %s16, 1
    %p123 = por %p121, %p122
    %p124 = scmp.ne.s32.totalorder %s113, %s114
    %p125 = scmp.eq.s32.totalorder %s16, 0
    %p126 = por %p124, %p125
    %p127 = scmp.ne.s32.totalorder %s113, %s114
    %p128 = scmp.eq.s32.totalorder %s17, 1
    %p129 = por %p127, %p128
    %p131 = scmp.ne.s32.totalorder %s114, %s130
    %p132 = scmp.eq.s32.totalorder %s17, 0
    %p133 = por %p131, %p132
    %s134 = ssub.s32 %s18, %s30
    %s135 = ssub.s32 %s19, %s26
    %s136 = sor.u32 %s134, %s135
    %p137 = scmp.eq.s32.totalorder %s136, 0
    %s139 = sadd.s32 %s138, 1
    %s140 = scalar_select %p137, %s138, %s139
    %p143 = pneg %p137
    %p144 = scmp.eq.s32.totalorder %s11, 1
    %p145 = por %p143, %p144
    %p146 = scmp.ne.s32.totalorder %s138, %s141
    %p147 = scmp.eq.s32.totalorder %s11, 0
    %p148 = por %p146, %p147
    %p149 = scmp.ne.s32.totalorder %s138, %s141
    %p150 = scmp.eq.s32.totalorder %s16, 1
    %p151 = por %p149, %p150
    %p152 = scmp.ne.s32.totalorder %s141, %s142
    %p153 = scmp.eq.s32.totalorder %s16, 0
    %p154 = por %p152, %p153
    %p155 = scmp.ne.s32.totalorder %s141, %s142
    %p156 = scmp.eq.s32.totalorder %s17, 1
    %p157 = por %p155, %p156
    %p159 = scmp.ne.s32.totalorder %s142, %s158
    %p160 = scmp.eq.s32.totalorder %s17, 0
    %p161 = por %p159, %p160
    %p162 = scmp.le.s32.totalorder 1, %s11
    %p163 = scmp.lt.s32.totalorder %s11, 3
    %p164 = pnand %p162, %p163
    %p165 = pneg %p164
    // Predicated region
    $region9: #{bottleneck_forward.6} parent=5 // pred_check
      _
    $region10: #{bottleneck_forward.6} parent=5 // pred_check_branch
      %167 = sbr.rel (%p164) target = $region12
    $region11: #{bottleneck_forward.6} parent=5 // pred_region
      %s168 = ssub.s32 %s11, 1
      // Predicated region
      $region13: #{bottleneck_forward.6} parent=11 // pred_check
        %p169 = pneg %p72
      $region14: #{bottleneck_forward.6} parent=11 // pred_check_branch
        %171 = sbr.rel (%p169) target = $region16
      $region15: #{bottleneck_forward.6} parent=11 // pred_region
        _
      $region16: #{bottleneck_forward.6} parent=11 // pred_fallthru
        _
      // Predicated region
      $region17: #{bottleneck_forward.6} parent=11 // pred_check
        %p172 = pneg %p98
      $region18: #{bottleneck_forward.6} parent=11 // pred_check_branch
        %174 = sbr.rel (%p172) target = $region20
      $region19: #{bottleneck_forward.6} parent=11 // pred_region
        %p175 = scmp.lt.s32.totalorder %s21, 0
        %s176 = scalar_select %p175, %s21, 0
        %s177 = scalar_lea.vmem %s2, %s176
      $region20: #{bottleneck_forward.6} parent=11 // pred_fallthru
        _
    $region12: #{bottleneck_forward.6} parent=5 // pred_fallthru
      _
    %p178 = scmp.lt.s32.totalorder %s11, 2
    // Predicated region
    $region21: #{bottleneck_forward.6} parent=5 // pred_check
      %p179 = pneg %p178
    $region22: #{bottleneck_forward.6} parent=5 // pred_check_branch
      %181 = sbr.rel (%p179) target = $region24
    $region23: #{bottleneck_forward.6} parent=5 // pred_region
      // Predicated region
      $region25: #{bottleneck_forward.6} parent=23 // pred_check
        %p182 = pneg %p45
      $region26: #{bottleneck_forward.6} parent=23 // pred_check_branch
        %184 = sbr.rel (%p182) target = $region28
      $region27: #{bottleneck_forward.6} parent=23 // pred_region
        %p185 = scmp.lt.s32.totalorder %s18, 1
        %s186 = scalar_select %p185, %s18, 1
        %p187 = scmp.lt.s32.totalorder %s19, 0
        %s188 = scalar_select %p187, %s19, 0
        %s189 = smul.addr %s186, 2
        %s190 = sadd.s32 %s188, %s189
        %s191 = smul.addr %s190, 8
        %s192 = scalar_lea.vmem %s0, %s191
      $region28: #{bottleneck_forward.6} parent=23 // pred_fallthru
        _
    $region24: #{bottleneck_forward.6} parent=5 // pred_fallthru
      _
    %p193 = scmp.le.s32.totalorder 1, %s11
    %p194 = scmp.lt.s32.totalorder %s11, 3
    %p195 = pnand %p193, %p194
    %p196 = pneg %p195
    // Predicated region
    $region29: #{bottleneck_forward.6} parent=5 // pred_check
      _
    $region30: #{bottleneck_forward.6} parent=5 // pred_check_branch
      %198 = sbr.rel (%p195) target = $region32
    $region31: #{bottleneck_forward.6} parent=5 // pred_region
      %s199 = ssub.s32 %s11, 1
      %p200 = scmp.lt.s32.totalorder %s20, 1
      %s201 = scalar_select %p200, %s20, 1
      %p202 = scmp.lt.s32.totalorder %s21, 0
      %s203 = scalar_select %p202, %s21, 0
      %s204 = smul.addr %s201, 2
      %s205 = sadd.s32 %s203, %s204
      %s206 = smul.addr %s205, 8
      %s207 = scalar_lea.vmem %s0, %s206
      %p208 = pneg %p51
      %p209 = pneg %p48
      %p210 = pneg %p72
      %p211 = pneg %p69
      %p212 = scmp.lt.s32.totalorder %s21, 0
      %s213 = scalar_select %p212, %s21, 0
      %s214 = scalar_lea.vmem %s2, %s213
      %p215 = pneg %p98
      %p216 = pneg %p95
      %p217 = pneg %p126
      %p218 = pneg %p123
      %p219 = scmp.lt.s32.totalorder %s20, 1
      %s220 = scalar_select %p219, %s20, 1
      %p221 = scmp.lt.s32.totalorder %s21, 0
      %s222 = scalar_select %p221, %s21, 0
      %s223 = sadd.s32 %s222, %s220
      %s224 = smul.addr %s223, 8
      %s225 = scalar_lea.vmem %s3, %s224
      %p226 = pneg %p154
      %p227 = pneg %p151
      %p228 = scmp.lt.s32.totalorder %s20, 1
      %s229 = scalar_select %p228, %s20, 1
      %p230 = scmp.lt.s32.totalorder %s21, 0
      %s231 = scalar_select %p230, %s21, 0
      %s232 = sadd.s32 %s231, %s229
      %s233 = smul.addr %s232, 8
      %s234 = scalar_lea.vmem %s4, %s233
      %p235 = scmp.lt.s32.totalorder %s20, 1
      %s236 = scalar_select %p235, %s20, 1
      %p237 = scmp.lt.s32.totalorder %s21, 0
      %s238 = scalar_select %p237, %s21, 0
      %s239 = smul.addr %s236, 2
      %s240 = sadd.s32 %s238, %s239
      %s241 = smul.addr %s240, 8
      %s242 = scalar_lea.vmem %s0, %s241
      %p243 = scmp.lt.s32.totalorder %s21, 0
      %s244 = scalar_select %p243, %s21, 0
      %s245 = scalar_lea.vmem %s2, %s244
      %p246 = scmp.lt.s32.totalorder %s20, 1
      %s247 = scalar_select %p246, %s20, 1
      %p248 = scmp.lt.s32.totalorder %s21, 0
      %s249 = scalar_select %p248, %s21, 0
      %s250 = sadd.s32 %s249, %s247
      %s251 = smul.addr %s250, 8
      %s252 = scalar_lea.vmem %s3, %s251
      %p253 = scmp.lt.s32.totalorder %s20, 1
      %s254 = scalar_select %p253, %s20, 1
      %p255 = scmp.lt.s32.totalorder %s21, 0
      %s256 = scalar_select %p255, %s21, 0
      %s257 = sadd.s32 %s256, %s254
      %s258 = smul.addr %s257, 8
      %s259 = scalar_lea.vmem %s4, %s258
      loop: start=0, step=1, limit=2
      $region33: #{bottleneck_forward.6} parent=31 // loop_pre_header
        _
      $region34: #{bottleneck_forward.6} parent=31 // loop_header
        %s261 = sphi 0, %s265
        %p262 = scmp.ge.s32.totalorder %s261, 2
        %v266 = vphi 0.0, %v336
      $region35: #{bottleneck_forward.6} parent=31 // loop_header_branch
        %264 = sbr.rel (%p262) target = $region39
      $region36: #{bottleneck_forward.6} parent=31 // loop_body
        %s267 = smul.u32 %s261, 8
        %s268 = scalar_lea.vmem %s242, %s267
        %v269 = vld [vmem:[%s268] sm:$0xff]
        %s270 = scalar_lea.vmem %s1, %s267
        %v271 = vld [vmem:[%s270] sm:$0xff]
        %v272 = vperm.slane %v269, 0
        %274 = vset.pattern.permute.xlu0 0
        %275 = vperm.xlu0 %274, %v271
        %v276 = vpop.permute.xlu0 %275
        %v278 = vsub.f32 %v272, %v276
        %v279 = vand.u32 2147483647, %v278
        %v280 = vsub.f32 %v266, %v279
        %v281 = vperm.slane %v269, 1
        %282 = vset.pattern.permute.xlu0 1
        %283 = vperm.xlu0 %282, %v271
        %v284 = vpop.permute.xlu0 %283
        %v286 = vsub.f32 %v281, %v284
        %v287 = vand.u32 2147483647, %v286
        %v288 = vsub.f32 %v280, %v287
        %v289 = vperm.slane %v269, 2
        %290 = vset.pattern.permute.xlu0 2
        %291 = vperm.xlu0 %290, %v271
        %v292 = vpop.permute.xlu0 %291
        %v294 = vsub.f32 %v289, %v292
        %v295 = vand.u32 2147483647, %v294
        %v296 = vsub.f32 %v288, %v295
        %v297 = vperm.slane %v269, 3
        %298 = vset.pattern.permute.xlu0 3
        %299 = vperm.xlu0 %298, %v271
        %v300 = vpop.permute.xlu0 %299
        %v302 = vsub.f32 %v297, %v300
        %v303 = vand.u32 2147483647, %v302
        %v304 = vsub.f32 %v296, %v303
        %v305 = vperm.slane %v269, 4
        %306 = vset.pattern.permute.xlu0 4
        %307 = vperm.xlu0 %306, %v271
        %v308 = vpop.permute.xlu0 %307
        %v310 = vsub.f32 %v305, %v308
        %v311 = vand.u32 2147483647, %v310
        %v312 = vsub.f32 %v304, %v311
        %v313 = vperm.slane %v269, 5
        %314 = vset.pattern.permute.xlu0 5
        %315 = vperm.xlu0 %314, %v271
        %v316 = vpop.permute.xlu0 %315
        %v318 = vsub.f32 %v313, %v316
        %v319 = vand.u32 2147483647, %v318
        %v320 = vsub.f32 %v312, %v319
        %v321 = vperm.slane %v269, 6
        %322 = vset.pattern.permute.xlu0 6
        %323 = vperm.xlu0 %322, %v271
        %v324 = vpop.permute.xlu0 %323
        %v326 = vsub.f32 %v321, %v324
        %v327 = vand.u32 2147483647, %v326
        %v328 = vsub.f32 %v320, %v327
        %v329 = vperm.slane %v269, 7
        %330 = vset.pattern.permute.xlu0 7
        %331 = vperm.xlu0 %330, %v271
        %v332 = vpop.permute.xlu0 %331
        %v334 = vsub.f32 %v329, %v332
        %v335 = vand.u32 2147483647, %v334
        %v336 = vsub.f32 %v328, %v335
      $region37: #{bottleneck_forward.6} parent=31 // loop_footer
        %s265 = sadd.s32 1, %s261
      $region38: #{bottleneck_forward.6} parent=31 // loop_footer_branch
        %260 = sbr.rel target = $region34
      $region39: #{bottleneck_forward.6} parent=31 // loop_exit
        _
      %337 = vst [vmem:[%s252] sm:$0xff] %v266
      %v338 = vld [vmem:[%s245] sm:$0x1]
      %v340 = vperm.slane %v338, 0
      %v342 = vmul.f32 %v266, %v340
      %343 = vadd.xlane.f32.xlu0 %v342
      %v344 = vpop.xlane.xlu0 %343
      %vm345 = vcmask 7168
      %346 = vst.msk [vmem:[%s259] sm:$0xff] %vm345, %v344
      %v347 = vmul.f32 %v342, %v266
      %348 = vadd.xlane.f32.xlu0 %v347
      %v349 = vpop.xlane.xlu0 %348
      %vm350 = vcmask 15368
      %351 = vst.msk [vmem:[%s259] sm:$0xff] %vm350, %v349
      %p352 = scmp.lt.s32.totalorder %s20, 1
      %s353 = scalar_select %p352, %s20, 1
      %p354 = scmp.lt.s32.totalorder %s21, 0
      %s355 = scalar_select %p354, %s21, 0
      %s356 = sadd.s32 %s355, %s353
      %s357 = smul.addr %s356, 8
      %s358 = scalar_lea.vmem %s3, %s357
      %p359 = scmp.lt.s32.totalorder %s20, 1
      %s360 = scalar_select %p359, %s20, 1
      %p361 = scmp.lt.s32.totalorder %s21, 0
      %s362 = scalar_select %p361, %s21, 0
      %s363 = sadd.s32 %s362, %s360
      %s364 = smul.addr %s363, 8
      %s365 = scalar_lea.vmem %s4, %s364
      // Predicated region
      $region40: #{bottleneck_forward.6} parent=31 // pred_check
        %p366 = pneg %p123
      $region41: #{bottleneck_forward.6} parent=31 // pred_check_branch
        %368 = sbr.rel (%p366) target = $region43
      $region42: #{bottleneck_forward.6} parent=31 // pred_region
        _
      $region43: #{bottleneck_forward.6} parent=31 // pred_fallthru
        _
      // Predicated region
      $region44: #{bottleneck_forward.6} parent=31 // pred_check
        %p369 = pneg %p151
      $region45: #{bottleneck_forward.6} parent=31 // pred_check_branch
        %371 = sbr.rel (%p369) target = $region47
      $region46: #{bottleneck_forward.6} parent=31 // pred_region
        _
      $region47: #{bottleneck_forward.6} parent=31 // pred_fallthru
        _
    $region32: #{bottleneck_forward.6} parent=5 // pred_fallthru
      _
    %p372 = scmp.le.s32.totalorder 2, %s11
    // Predicated region
    $region48: #{bottleneck_forward.6} parent=5 // pred_check
      %p373 = pneg %p372
    $region49: #{bottleneck_forward.6} parent=5 // pred_check_branch
      %375 = sbr.rel (%p373) target = $region51
    $region50: #{bottleneck_forward.6} parent=5 // pred_region
      %s376 = ssub.s32 %s11, 2
      // Predicated region
      $region52: #{bottleneck_forward.6} parent=50 // pred_check
        %p377 = pneg %p129
      $region53: #{bottleneck_forward.6} parent=50 // pred_check_branch
        %379 = sbr.rel (%p377) target = $region55
      $region54: #{bottleneck_forward.6} parent=50 // pred_region
        %p380 = scmp.lt.s32.totalorder %s22, 1
        %s381 = scalar_select %p380, %s22, 1
        %p382 = scmp.lt.s32.totalorder %s23, 0
        %s383 = scalar_select %p382, %s23, 0
        %s384 = sadd.s32 %s383, %s381
        %s385 = smul.addr %s384, 8
        %s386 = scalar_lea.vmem %s3, %s385
      $region55: #{bottleneck_forward.6} parent=50 // pred_fallthru
        _
      // Predicated region
      $region56: #{bottleneck_forward.6} parent=50 // pred_check
        %p387 = pneg %p157
      $region57: #{bottleneck_forward.6} parent=50 // pred_check_branch
        %389 = sbr.rel (%p387) target = $region59
      $region58: #{bottleneck_forward.6} parent=50 // pred_region
        %p390 = scmp.lt.s32.totalorder %s22, 1
        %s391 = scalar_select %p390, %s22, 1
        %p392 = scmp.lt.s32.totalorder %s23, 0
        %s393 = scalar_select %p392, %s23, 0
        %s394 = sadd.s32 %s393, %s391
        %s395 = smul.addr %s394, 8
        %s396 = scalar_lea.vmem %s4, %s395
      $region59: #{bottleneck_forward.6} parent=50 // pred_fallthru
        _
    $region51: #{bottleneck_forward.6} parent=5 // pred_fallthru
      _
  $region6: #{bottleneck_forward.6} parent=0 // loop_footer
    %s15 = sadd.s32 1, %s11
  $region7: #{bottleneck_forward.6} parent=0 // loop_footer_branch
    %10 = sbr.rel target = $region3
  $region8: #{bottleneck_forward.6} parent=0 // loop_exit
    _

// kernel: bottleneck_forward.10
$region0: #{bottleneck_forward.10}
  #allocation0 [shape = 'u32[]', space=smem, size = 0x4, offset = 0x4, fixed_abs, tag = 'smem constant byte address 0x4 - core index']
  #allocation1 [shape = 'u32[72,128]{1,0:T(1,128)}', space=vmem, size = 0x9000, scoped, tag = 'internal scratch']
  %s0 = inlined_call_operand.vmem [shape: f32[2,8,128], index: 0, kind: input, shape index: {}]
  %s1 = inlined_call_operand.vmem [shape: f32[1,1,16,8], index: 1, kind: input, shape index: {}]
  %s2 = inlined_call_operand.vmem [shape: f32[1,128], index: 2, kind: input, shape index: {}]
  %s3 = inlined_call_operand.vmem [shape: f32[2,16,128], index: 3, kind: output, shape index: {0}]
  %s4 = inlined_call_operand.vmem [shape: f32[2,1,16,2], index: 4, kind: output, shape index: {1}]
  %5 = xla_tuple %s3, %s4
  %s6 = sld [smem:[#allocation0]]
  $region53: #{bottleneck_forward.10} parent=0
    _
  %s8 = ssub.s32 1, %s6
  %s9 = scalar_select 0, %s8, %s6
  loop: start=0, step=1, limit=4
  $region2: #{bottleneck_forward.10} parent=0 // loop_pre_header
    _
  $region3: #{bottleneck_forward.10} parent=0 // loop_header
    %s11 = sphi 0, %s15
    %p12 = scmp.ge.s32.totalorder %s11, 4
    %s18 = sphi 0, %s30
    %s19 = sphi 0, %s26
    %s20 = sphi 0, %s18
    %s21 = sphi 0, %s19
    %s22 = sphi 0, %s20
    %s23 = sphi 0, %s21
    %s35 = sphi 0, %s37
    %s38 = sphi 0, %s35
    %s39 = sphi 0, %s38
    %s55 = sphi 0, %s39
    %s59 = sphi 0, %s59
    %s61 = sphi 0, %s59
    %s62 = sphi 0, %s61
    %s76 = sphi 0, %s62
    %s82 = sphi 0, %s84
    %s85 = sphi 0, %s82
    %s86 = sphi 0, %s85
    %s102 = sphi 0, %s86
    %s110 = sphi 0, %s112
    %s113 = sphi 0, %s110
    %s114 = sphi 0, %s113
    %s130 = sphi 0, %s114
    %s138 = sphi 0, %s140
    %s141 = sphi 0, %s138
    %s142 = sphi 0, %s141
    %s158 = sphi 0, %s142
  $region4: #{bottleneck_forward.10} parent=0 // loop_header_branch
    %14 = sbr.rel (%p12) target = $region8
  $region5: #{bottleneck_forward.10} parent=0 // loop_body
    %s16 = ssub.s32 %s11, 1
    %s17 = ssub.s32 %s11, 2
    %s24 = sadd.s32 1, %s19
    %p25 = scmp.ge.s32.totalorder %s24, 1
    %s26 = scalar_select %p25, 0, %s24
    %s27 = sadd.s32 1, %s18
    %s28 = scalar_select %p25, %s27, %s18
    %p29 = scmp.ge.s32.totalorder %s28, 2
    %s30 = scalar_select %p29, 0, %s28
    %s31 = ssub.s32 %s18, %s30
    %s32 = ssub.s32 %s19, %s26
    %s33 = sor.u32 %s31, %s32
    %p34 = scmp.eq.s32.totalorder %s33, 0
    %s36 = sadd.s32 %s35, 1
    %s37 = scalar_select %p34, %s35, %s36
    %p40 = pneg %p34
    %p41 = scmp.eq.s32.totalorder %s11, 1
    %p42 = por %p40, %p41
    %p43 = scmp.ne.s32.totalorder %s35, %s38
    %p44 = scmp.eq.s32.totalorder %s11, 0
    %p45 = por %p43, %p44
    %p46 = scmp.ne.s32.totalorder %s35, %s38
    %p47 = scmp.eq.s32.totalorder %s16, 1
    %p48 = por %p46, %p47
    %p49 = scmp.ne.s32.totalorder %s38, %s39
    %p50 = scmp.eq.s32.totalorder %s16, 0
    %p51 = por %p49, %p50
    %p52 = scmp.ne.s32.totalorder %s38, %s39
    %p53 = scmp.eq.s32.totalorder %s17, 1
    %p54 = por %p52, %p53
    %p56 = scmp.ne.s32.totalorder %s39, %s55
    %p57 = scmp.eq.s32.totalorder %s17, 0
    %p58 = por %p56, %p57
    %s60 = sadd.s32 %s59, 1
    %p63 = scmp.eq.s32.totalorder %s11, 1
    %p64 = scmp.ne.s32.totalorder %s59, %s61
    %p65 = scmp.eq.s32.totalorder %s11, 0
    %p66 = por %p64, %p65
    %p67 = scmp.ne.s32.totalorder %s59, %s61
    %p68 = scmp.eq.s32.totalorder %s16, 1
    %p69 = por %p67, %p68
    %p70 = scmp.ne.s32.totalorder %s61, %s62
    %p71 = scmp.eq.s32.totalorder %s16, 0
    %p72 = por %p70, %p71
    %p73 = scmp.ne.s32.totalorder %s61, %s62
    %p74 = scmp.eq.s32.totalorder %s17, 1
    %p75 = por %p73, %p74
    %p77 = scmp.ne.s32.totalorder %s62, %s76
    %p78 = scmp.eq.s32.totalorder %s17, 0
    %p79 = por %p77, %p78
    %s80 = ssub.s32 %s19, %s26
    %p81 = scmp.eq.s32.totalorder %s80, 0
    %s83 = sadd.s32 %s82, 1
    %s84 = scalar_select %p81, %s82, %s83
    %p87 = pneg %p81
    %p88 = scmp.eq.s32.totalorder %s11, 1
    %p89 = por %p87, %p88
    %p90 = scmp.ne.s32.totalorder %s82, %s85
    %p91 = scmp.eq.s32.totalorder %s11, 0
    %p92 = por %p90, %p91
    %p93 = scmp.ne.s32.totalorder %s82, %s85
    %p94 = scmp.eq.s32.totalorder %s16, 1
    %p95 = por %p93, %p94
    %p96 = scmp.ne.s32.totalorder %s85, %s86
    %p97 = scmp.eq.s32.totalorder %s16, 0
    %p98 = por %p96, %p97
    %p99 = scmp.ne.s32.totalorder %s85, %s86
    %p100 = scmp.eq.s32.totalorder %s17, 1
    %p101 = por %p99, %p100
    %p103 = scmp.ne.s32.totalorder %s86, %s102
    %p104 = scmp.eq.s32.totalorder %s17, 0
    %p105 = por %p103, %p104
    %s106 = ssub.s32 %s18, %s30
    %s107 = ssub.s32 %s19, %s26
    %s108 = sor.u32 %s106, %s107
    %p109 = scmp.eq.s32.totalorder %s108, 0
    %s111 = sadd.s32 %s110, 1
    %s112 = scalar_select %p109, %s110, %s111
    %p115 = pneg %p109
    %p116 = scmp.eq.s32.totalorder %s11, 1
    %p117 = por %p115, %p116
    %p118 = scmp.ne.s32.totalorder %s110, %s113
    %p119 = scmp.eq.s32.totalorder %s11, 0
    %p120 = por %p118, %p119
    %p121 = scmp.ne.s32.totalorder %s110, %s113
    %p122 = scmp.eq.s32.totalorder %s16, 1
    %p123 = por %p121, %p122
    %p124 = scmp.ne.s32.totalorder %s113, %s114
    %p125 = scmp.eq.s32.totalorder %s16, 0
    %p126 = por %p124, %p125
    %p127 = scmp.ne.s32.totalorder %s113, %s114
    %p128 = scmp.eq.s32.totalorder %s17, 1
    %p129 = por %p127, %p128
    %p131 = scmp.ne.s32.totalorder %s114, %s130
    %p132 = scmp.eq.s32.totalorder %s17, 0
    %p133 = por %p131, %p132
    %s134 = ssub.s32 %s18, %s30
    %s135 = ssub.s32 %s19, %s26
    %s136 = sor.u32 %s134, %s135
    %p137 = scmp.eq.s32.totalorder %s136, 0
    %s139 = sadd.s32 %s138, 1
    %s140 = scalar_select %p137, %s138, %s139
    %p143 = pneg %p137
    %p144 = scmp.eq.s32.totalorder %s11, 1
    %p145 = por %p143, %p144
    %p146 = scmp.ne.s32.totalorder %s138, %s141
    %p147 = scmp.eq.s32.totalorder %s11, 0
    %p148 = por %p146, %p147
    %p149 = scmp.ne.s32.totalorder %s138, %s141
    %p150 = scmp.eq.s32.totalorder %s16, 1
    %p151 = por %p149, %p150
    %p152 = scmp.ne.s32.totalorder %s141, %s142
    %p153 = scmp.eq.s32.totalorder %s16, 0
    %p154 = por %p152, %p153
    %p155 = scmp.ne.s32.totalorder %s141, %s142
    %p156 = scmp.eq.s32.totalorder %s17, 1
    %p157 = por %p155, %p156
    %p159 = scmp.ne.s32.totalorder %s142, %s158
    %p160 = scmp.eq.s32.totalorder %s17, 0
    %p161 = por %p159, %p160
    %p162 = scmp.le.s32.totalorder 1, %s11
    %p163 = scmp.lt.s32.totalorder %s11, 3
    %p164 = pnand %p162, %p163
    %p165 = pneg %p164
    // Predicated region
    $region9: #{bottleneck_forward.10} parent=5 // pred_check
      _
    $region10: #{bottleneck_forward.10} parent=5 // pred_check_branch
      %167 = sbr.rel (%p164) target = $region12
    $region11: #{bottleneck_forward.10} parent=5 // pred_region
      %s168 = ssub.s32 %s11, 1
      // Predicated region
      $region13: #{bottleneck_forward.10} parent=11 // pred_check
        %p169 = pneg %p72
      $region14: #{bottleneck_forward.10} parent=11 // pred_check_branch
        %171 = sbr.rel (%p169) target = $region16
      $region15: #{bottleneck_forward.10} parent=11 // pred_region
        _
      $region16: #{bottleneck_forward.10} parent=11 // pred_fallthru
        _
      // Predicated region
      $region17: #{bottleneck_forward.10} parent=11 // pred_check
        %p172 = pneg %p98
      $region18: #{bottleneck_forward.10} parent=11 // pred_check_branch
        %174 = sbr.rel (%p172) target = $region20
      $region19: #{bottleneck_forward.10} parent=11 // pred_region
        %p175 = scmp.lt.s32.totalorder %s21, 0
        %s176 = scalar_select %p175, %s21, 0
        %s177 = scalar_lea.vmem %s2, %s176
      $region20: #{bottleneck_forward.10} parent=11 // pred_fallthru
        _
    $region12: #{bottleneck_forward.10} parent=5 // pred_fallthru
      _
    %p178 = scmp.lt.s32.totalorder %s11, 2
    // Predicated region
    $region21: #{bottleneck_forward.10} parent=5 // pred_check
      %p179 = pneg %p178
    $region22: #{bottleneck_forward.10} parent=5 // pred_check_branch
      %181 = sbr.rel (%p179) target = $region24
    $region23: #{bottleneck_forward.10} parent=5 // pred_region
      // Predicated region
      $region25: #{bottleneck_forward.10} parent=23 // pred_check
        %p182 = pneg %p45
      $region26: #{bottleneck_forward.10} parent=23 // pred_check_branch
        %184 = sbr.rel (%p182) target = $region28
      $region27: #{bottleneck_forward.10} parent=23 // pred_region
        %p185 = scmp.lt.s32.totalorder %s18, 1
        %s186 = scalar_select %p185, %s18, 1
        %p187 = scmp.lt.s32.totalorder %s19, 0
        %s188 = scalar_select %p187, %s19, 0
        %s189 = sadd.s32 %s188, %s186
        %s190 = smul.addr %s189, 8
        %s191 = scalar_lea.vmem %s0, %s190
      $region28: #{bottleneck_forward.10} parent=23 // pred_fallthru
        _
    $region24: #{bottleneck_forward.10} parent=5 // pred_fallthru
      _
    %p192 = scmp.le.s32.totalorder 1, %s11
    %p193 = scmp.lt.s32.totalorder %s11, 3
    %p194 = pnand %p192, %p193
    %p195 = pneg %p194
    // Predicated region
    $region29: #{bottleneck_forward.10} parent=5 // pred_check
      _
    $region30: #{bottleneck_forward.10} parent=5 // pred_check_branch
      %197 = sbr.rel (%p194) target = $region32
    $region31: #{bottleneck_forward.10} parent=5 // pred_region
      %s198 = ssub.s32 %s11, 1
      %p199 = scmp.lt.s32.totalorder %s20, 1
      %s200 = scalar_select %p199, %s20, 1
      %p201 = scmp.lt.s32.totalorder %s21, 0
      %s202 = scalar_select %p201, %s21, 0
      %s203 = sadd.s32 %s202, %s200
      %s204 = smul.addr %s203, 8
      %s205 = scalar_lea.vmem %s0, %s204
      %p206 = pneg %p51
      %p207 = pneg %p48
      %p208 = pneg %p72
      %p209 = pneg %p69
      %p210 = scmp.lt.s32.totalorder %s21, 0
      %s211 = scalar_select %p210, %s21, 0
      %s212 = scalar_lea.vmem %s2, %s211
      %p213 = pneg %p98
      %p214 = pneg %p95
      %p215 = pneg %p126
      %p216 = pneg %p123
      %p217 = scmp.lt.s32.totalorder %s20, 1
      %s218 = scalar_select %p217, %s20, 1
      %p219 = scmp.lt.s32.totalorder %s21, 0
      %s220 = scalar_select %p219, %s21, 0
      %s221 = smul.addr %s218, 2
      %s222 = sadd.s32 %s220, %s221
      %s223 = smul.addr %s222, 8
      %s224 = scalar_lea.vmem %s3, %s223
      %p225 = pneg %p154
      %p226 = pneg %p151
      %p227 = scmp.lt.s32.totalorder %s20, 1
      %s228 = scalar_select %p227, %s20, 1
      %p229 = scmp.lt.s32.totalorder %s21, 0
      %s230 = scalar_select %p229, %s21, 0
      %s231 = smul.addr %s230, 2
      %s232 = smul.addr %s228, 2
      %s233 = sadd.s32 %s231, %s232
      %s234 = smul.addr %s233, 8
      %s235 = scalar_lea.vmem %s4, %s234
      %p236 = scmp.lt.s32.totalorder %s20, 1
      %s237 = scalar_select %p236, %s20, 1
      %p238 = scmp.lt.s32.totalorder %s21, 0
      %s239 = scalar_select %p238, %s21, 0
      %s240 = sadd.s32 %s239, %s237
      %s241 = smul.addr %s240, 8
      %s242 = scalar_lea.vmem %s0, %s241
      %p243 = scmp.lt.s32.totalorder %s21, 0
      %s244 = scalar_select %p243, %s21, 0
      %s245 = scalar_lea.vmem %s2, %s244
      %p246 = scmp.lt.s32.totalorder %s20, 1
      %s247 = scalar_select %p246, %s20, 1
      %p248 = scmp.lt.s32.totalorder %s21, 0
      %s249 = scalar_select %p248, %s21, 0
      %s250 = smul.addr %s247, 2
      %s251 = sadd.s32 %s249, %s250
      %s252 = smul.addr %s251, 8
      %s253 = scalar_lea.vmem %s3, %s252
      %p254 = scmp.lt.s32.totalorder %s20, 1
      %s255 = scalar_select %p254, %s20, 1
      %p256 = scmp.lt.s32.totalorder %s21, 0
      %s257 = scalar_select %p256, %s21, 0
      %s258 = smul.addr %s257, 2
      %s259 = smul.addr %s255, 2
      %s260 = sadd.s32 %s258, %s259
      %s261 = smul.addr %s260, 8
      %s262 = scalar_lea.vmem %s4, %s261
      %v263 = vld [vmem:[%s242] sm:$0xff]
      %v264 = vld [vmem:[%s1] sm:$0xff]
      %v265 = vld [vmem:[%s1 + $0x8] sm:$0xff]
      %v266 = vperm.slane %v263, 0
      %268 = vset.pattern.permute.xlu0 0
      %269 = vperm.xlu0 %268, %v264
      %v270 = vpop.permute.xlu0 %269
      %273 = vset.pattern.permute.xlu0 0
      %274 = vperm.xlu0 %273, %v265
      %v275 = vpop.permute.xlu0 %274
      %v277 = vsub.f32 %v266, %v270
      %v278 = vsub.f32 %v266, %v275
      %v279 = vand.u32 2147483647, %v277
      %v280 = vand.u32 2147483647, %v278
      %v281 = vsub.f32 0.0, %v279
      %v282 = vsub.f32 0.0, %v280
      %v283 = vperm.slane %v263, 1
      %284 = vset.pattern.permute.xlu0 1
      %285 = vperm.xlu0 %284, %v264
      %v286 = vpop.permute.xlu0 %285
      %288 = vset.pattern.permute.xlu0 1
      %289 = vperm.xlu0 %288, %v265
      %v290 = vpop.permute.xlu0 %289
      %v292 = vsub.f32 %v283, %v286
      %v293 = vsub.f32 %v283, %v290
      %v294 = vand.u32 2147483647, %v292
      %v295 = vand.u32 2147483647, %v293
      %v296 = vsub.f32 %v281, %v294
      %v297 = vsub.f32 %v282, %v295
      %v298 = vperm.slane %v263, 2
      %299 = vset.pattern.permute.xlu0 2
      %300 = vperm.xlu0 %299, %v264
      %v301 = vpop.permute.xlu0 %300
      %303 = vset.pattern.permute.xlu0 2
      %304 = vperm.xlu0 %303, %v265
      %v305 = vpop.permute.xlu0 %304
      %v307 = vsub.f32 %v298, %v301
      %v308 = vsub.f32 %v298, %v305
      %v309 = vand.u32 2147483647, %v307
      %v310 = vand.u32 2147483647, %v308
      %v311 = vsub.f32 %v296, %v309
      %v312 = vsub.f32 %v297, %v310
      %v313 = vperm.slane %v263, 3
      %314 = vset.pattern.permute.xlu0 3
      %315 = vperm.xlu0 %314, %v264
      %v316 = vpop.permute.xlu0 %315
      %318 = vset.pattern.permute.xlu0 3
      %319 = vperm.xlu0 %318, %v265
      %v320 = vpop.permute.xlu0 %319
      %v322 = vsub.f32 %v313, %v316
      %v323 = vsub.f32 %v313, %v320
      %v324 = vand.u32 2147483647, %v322
      %v325 = vand.u32 2147483647, %v323
      %v326 = vsub.f32 %v311, %v324
      %v327 = vsub.f32 %v312, %v325
      %v328 = vperm.slane %v263, 4
      %329 = vset.pattern.permute.xlu0 4
      %330 = vperm.xlu0 %329, %v264
      %v331 = vpop.permute.xlu0 %330
      %333 = vset.pattern.permute.xlu0 4
      %334 = vperm.xlu0 %333, %v265
      %v335 = vpop.permute.xlu0 %334
      %v337 = vsub.f32 %v328, %v331
      %v338 = vsub.f32 %v328, %v335
      %v339 = vand.u32 2147483647, %v337
      %v340 = vand.u32 2147483647, %v338
      %v341 = vsub.f32 %v326, %v339
      %v342 = vsub.f32 %v327, %v340
      %v343 = vperm.slane %v263, 5
      %344 = vset.pattern.permute.xlu0 5
      %345 = vperm.xlu0 %344, %v264
      %v346 = vpop.permute.xlu0 %345
      %348 = vset.pattern.permute.xlu0 5
      %349 = vperm.xlu0 %348, %v265
      %v350 = vpop.permute.xlu0 %349
      %v352 = vsub.f32 %v343, %v346
      %v353 = vsub.f32 %v343, %v350
      %v354 = vand.u32 2147483647, %v352
      %v355 = vand.u32 2147483647, %v353
      %v356 = vsub.f32 %v341, %v354
      %v357 = vsub.f32 %v342, %v355
      %v358 = vperm.slane %v263, 6
      %359 = vset.pattern.permute.xlu0 6
      %360 = vperm.xlu0 %359, %v264
      %v361 = vpop.permute.xlu0 %360
      %363 = vset.pattern.permute.xlu0 6
      %364 = vperm.xlu0 %363, %v265
      %v365 = vpop.permute.xlu0 %364
      %v367 = vsub.f32 %v358, %v361
      %v368 = vsub.f32 %v358, %v365
      %v369 = vand.u32 2147483647, %v367
      %v370 = vand.u32 2147483647, %v368
      %v371 = vsub.f32 %v356, %v369
      %v372 = vsub.f32 %v357, %v370
      %v373 = vperm.slane %v263, 7
      %374 = vset.pattern.permute.xlu0 7
      %375 = vperm.xlu0 %374, %v264
      %v376 = vpop.permute.xlu0 %375
      %378 = vset.pattern.permute.xlu0 7
      %379 = vperm.xlu0 %378, %v265
      %v380 = vpop.permute.xlu0 %379
      %v382 = vsub.f32 %v373, %v376
      %v383 = vsub.f32 %v373, %v380
      %v384 = vand.u32 2147483647, %v382
      %v385 = vand.u32 2147483647, %v383
      %v386 = vsub.f32 %v371, %v384
      %v387 = vsub.f32 %v372, %v385
      %388 = vst [vmem:[%s253] sm:$0xff] %v386
      %389 = vst [vmem:[%s253 + $0x8] sm:$0xff] %v387
      %v390 = vld [vmem:[%s245] sm:$0x1]
      %v392 = vperm.slane %v390, 0
      %v394 = vmul.f32 %v386, %v392
      %v395 = vmul.f32 %v387, %v392
      %396 = vadd.xlane.f32.xlu0 %v394
      %v397 = vpop.xlane.xlu0 %396
      %398 = vadd.xlane.f32.xlu0 %v395
      %v399 = vpop.xlane.xlu0 %398
      %vm400 = vcmask 7168
      %401 = vst.msk [vmem:[%s262] sm:$0xff] %vm400, %v397
      %402 = vst.msk [vmem:[%s262 + $0x8] sm:$0xff] %vm400, %v399
      %v403 = vmul.f32 %v394, %v386
      %v404 = vmul.f32 %v395, %v387
      %405 = vadd.xlane.f32.xlu0 %v403
      %v406 = vpop.xlane.xlu0 %405
      %407 = vadd.xlane.f32.xlu0 %v404
      %v408 = vpop.xlane.xlu0 %407
      %vm409 = vcmask 15368
      %410 = vst.msk [vmem:[%s262] sm:$0xff] %vm409, %v406
      %411 = vst.msk [vmem:[%s262 + $0x8] sm:$0xff] %vm409, %v408
      %p412 = scmp.lt.s32.totalorder %s20, 1
      %s413 = scalar_select %p412, %s20, 1
      %p414 = scmp.lt.s32.totalorder %s21, 0
      %s415 = scalar_select %p414, %s21, 0
      %s416 = smul.addr %s413, 2
      %s417 = sadd.s32 %s415, %s416
      %s418 = smul.addr %s417, 8
      %s419 = scalar_lea.vmem %s3, %s418
      %p420 = scmp.lt.s32.totalorder %s20, 1
      %s421 = scalar_select %p420, %s20, 1
      %p422 = scmp.lt.s32.totalorder %s21, 0
      %s423 = scalar_select %p422, %s21, 0
      %s424 = smul.addr %s423, 2
      %s425 = smul.addr %s421, 2
      %s426 = sadd.s32 %s424, %s425
      %s427 = smul.addr %s426, 8
      %s428 = scalar_lea.vmem %s4, %s427
      // Predicated region
      $region33: #{bottleneck_forward.10} parent=31 // pred_check
        %p429 = pneg %p123
      $region34: #{bottleneck_forward.10} parent=31 // pred_check_branch
        %431 = sbr.rel (%p429) target = $region36
      $region35: #{bottleneck_forward.10} parent=31 // pred_region
        _
      $region36: #{bottleneck_forward.10} parent=31 // pred_fallthru
        _
      // Predicated region
      $region37: #{bottleneck_forward.10} parent=31 // pred_check
        %p432 = pneg %p151
      $region38: #{bottleneck_forward.10} parent=31 // pred_check_branch
        %434 = sbr.rel (%p432) target = $region40
      $region39: #{bottleneck_forward.10} parent=31 // pred_region
        _
      $region40: #{bottleneck_forward.10} parent=31 // pred_fallthru
        _
    $region32: #{bottleneck_forward.10} parent=5 // pred_fallthru
      _
    %p435 = scmp.le.s32.totalorder 2, %s11
    // Predicated region
    $region41: #{bottleneck_forward.10} parent=5 // pred_check
      %p436 = pneg %p435
    $region42: #{bottleneck_forward.10} parent=5 // pred_check_branch
      %438 = sbr.rel (%p436) target = $region44
    $region43: #{bottleneck_forward.10} parent=5 // pred_region
      %s439 = ssub.s32 %s11, 2
      // Predicated region
      $region45: #{bottleneck_forward.10} parent=43 // pred_check
        %p440 = pneg %p129
      $region46: #{bottleneck_forward.10} parent=43 // pred_check_branch
        %442 = sbr.rel (%p440) target = $region48
      $region47: #{bottleneck_forward.10} parent=43 // pred_region
        %p443 = scmp.lt.s32.totalorder %s22, 1
        %s444 = scalar_select %p443, %s22, 1
        %p445 = scmp.lt.s32.totalorder %s23, 0
        %s446 = scalar_select %p445, %s23, 0
        %s447 = smul.addr %s444, 2
        %s448 = sadd.s32 %s446, %s447
        %s449 = smul.addr %s448, 8
        %s450 = scalar_lea.vmem %s3, %s449
      $region48: #{bottleneck_forward.10} parent=43 // pred_fallthru
        _
      // Predicated region
      $region49: #{bottleneck_forward.10} parent=43 // pred_check
        %p451 = pneg %p157
      $region50: #{bottleneck_forward.10} parent=43 // pred_check_branch
        %453 = sbr.rel (%p451) target = $region52
      $region51: #{bottleneck_forward.10} parent=43 // pred_region
        %p454 = scmp.lt.s32.totalorder %s22, 1
        %s455 = scalar_select %p454, %s22, 1
        %p456 = scmp.lt.s32.totalorder %s23, 0
        %s457 = scalar_select %p456, %s23, 0
        %s458 = smul.addr %s457, 2
        %s459 = smul.addr %s455, 2
        %s460 = sadd.s32 %s458, %s459
        %s461 = smul.addr %s460, 8
        %s462 = scalar_lea.vmem %s4, %s461
      $region52: #{bottleneck_forward.10} parent=43 // pred_fallthru
        _
    $region44: #{bottleneck_forward.10} parent=5 // pred_fallthru
      _
  $region6: #{bottleneck_forward.10} parent=0 // loop_footer
    %s15 = sadd.s32 1, %s11
  $region7: #{bottleneck_forward.10} parent=0 // loop_footer_branch
    %10 = sbr.rel target = $region3
  $region8: #{bottleneck_forward.10} parent=0 // loop_exit
    _

// kernel: bottleneck_forward.8
$region0: #{bottleneck_forward.8}
  #allocation0 [shape = 'u32[]', space=smem, size = 0x4, offset = 0x4, fixed_abs, tag = 'smem constant byte address 0x4 - core index']
  #allocation1 [shape = 'u32[72,128]{1,0:T(1,128)}', space=vmem, size = 0x9000, scoped, tag = 'internal scratch']
  %s0 = inlined_call_operand.vmem [shape: f32[2,8,128], index: 0, kind: input, shape index: {}]
  %s1 = inlined_call_operand.vmem [shape: f32[1,9,8,8], index: 1, kind: input, shape index: {}]
  %s2 = inlined_call_operand.vmem [shape: f32[1,128], index: 2, kind: input, shape index: {}]
  %s3 = inlined_call_operand.vmem [shape: f32[2,8,128], index: 3, kind: output, shape index: {0}]
  %s4 = inlined_call_operand.vmem [shape: f32[2,8,2], index: 4, kind: output, shape index: {1}]
  %5 = xla_tuple %s3, %s4
  %s6 = sld [smem:[#allocation0]]
  $region53: #{bottleneck_forward.8} parent=0
    _
  %s8 = ssub.s32 1, %s6
  %s9 = scalar_select 0, %s8, %s6
  loop: start=0, step=1, limit=4
  $region2: #{bottleneck_forward.8} parent=0 // loop_pre_header
    _
  $region3: #{bottleneck_forward.8} parent=0 // loop_header
    %s11 = sphi 0, %s15
    %p12 = scmp.ge.s32.totalorder %s11, 4
    %s21 = sphi 0, %s23
    %s24 = sphi 0, %s21
    %s25 = sphi 0, %s24
    %s41 = sphi 0, %s25
    %s45 = sphi 0, %s45
    %s47 = sphi 0, %s45
    %s48 = sphi 0, %s47
    %s62 = sphi 0, %s48
    %s66 = sphi 0, %s66
    %s68 = sphi 0, %s66
    %s69 = sphi 0, %s68
    %s83 = sphi 0, %s69
    %s89 = sphi 0, %s91
    %s92 = sphi 0, %s89
    %s93 = sphi 0, %s92
    %s109 = sphi 0, %s93
    %s115 = sphi 0, %s117
    %s118 = sphi 0, %s115
    %s119 = sphi 0, %s118
    %s135 = sphi 0, %s119
  $region4: #{bottleneck_forward.8} parent=0 // loop_header_branch
    %14 = sbr.rel (%p12) target = $region8
  $region5: #{bottleneck_forward.8} parent=0 // loop_body
    %s16 = ssub.s32 %s11, 1
    %s17 = ssub.s32 %s11, 2
    %s18 = sadd.s32 %s11, 1
    %s19 = ssub.s32 %s11, %s18
    %p20 = scmp.eq.s32.totalorder %s19, 0
    %s22 = sadd.s32 %s21, 1
    %s23 = scalar_select %p20, %s21, %s22
    %p26 = pneg %p20
    %p27 = scmp.eq.s32.totalorder %s11, 1
    %p28 = por %p26, %p27
    %p29 = scmp.ne.s32.totalorder %s21, %s24
    %p30 = scmp.eq.s32.totalorder %s11, 0
    %p31 = por %p29, %p30
    %p32 = scmp.ne.s32.totalorder %s21, %s24
    %p33 = scmp.eq.s32.totalorder %s16, 1
    %p34 = por %p32, %p33
    %p35 = scmp.ne.s32.totalorder %s24, %s25
    %p36 = scmp.eq.s32.totalorder %s16, 0
    %p37 = por %p35, %p36
    %p38 = scmp.ne.s32.totalorder %s24, %s25
    %p39 = scmp.eq.s32.totalorder %s17, 1
    %p40 = por %p38, %p39
    %p42 = scmp.ne.s32.totalorder %s25, %s41
    %p43 = scmp.eq.s32.totalorder %s17, 0
    %p44 = por %p42, %p43
    %s46 = sadd.s32 %s45, 1
    %p49 = scmp.eq.s32.totalorder %s11, 1
    %p50 = scmp.ne.s32.totalorder %s45, %s47
    %p51 = scmp.eq.s32.totalorder %s11, 0
    %p52 = por %p50, %p51
    %p53 = scmp.ne.s32.totalorder %s45, %s47
    %p54 = scmp.eq.s32.totalorder %s16, 1
    %p55 = por %p53, %p54
    %p56 = scmp.ne.s32.totalorder %s47, %s48
    %p57 = scmp.eq.s32.totalorder %s16, 0
    %p58 = por %p56, %p57
    %p59 = scmp.ne.s32.totalorder %s47, %s48
    %p60 = scmp.eq.s32.totalorder %s17, 1
    %p61 = por %p59, %p60
    %p63 = scmp.ne.s32.totalorder %s48, %s62
    %p64 = scmp.eq.s32.totalorder %s17, 0
    %p65 = por %p63, %p64
    %s67 = sadd.s32 %s66, 1
    %p70 = scmp.eq.s32.totalorder %s11, 1
    %p71 = scmp.ne.s32.totalorder %s66, %s68
    %p72 = scmp.eq.s32.totalorder %s11, 0
    %p73 = por %p71, %p72
    %p74 = scmp.ne.s32.totalorder %s66, %s68
    %p75 = scmp.eq.s32.totalorder %s16, 1
    %p76 = por %p74, %p75
    %p77 = scmp.ne.s32.totalorder %s68, %s69
    %p78 = scmp.eq.s32.totalorder %s16, 0
    %p79 = por %p77, %p78
    %p80 = scmp.ne.s32.totalorder %s68, %s69
    %p81 = scmp.eq.s32.totalorder %s17, 1
    %p82 = por %p80, %p81
    %p84 = scmp.ne.s32.totalorder %s69, %s83
    %p85 = scmp.eq.s32.totalorder %s17, 0
    %p86 = por %p84, %p85
    %s87 = ssub.s32 %s11, %s18
    %p88 = scmp.eq.s32.totalorder %s87, 0
    %s90 = sadd.s32 %s89, 1
    %s91 = scalar_select %p88, %s89, %s90
    %p94 = pneg %p88
    %p95 = scmp.eq.s32.totalorder %s11, 1
    %p96 = por %p94, %p95
    %p97 = scmp.ne.s32.totalorder %s89, %s92
    %p98 = scmp.eq.s32.totalorder %s11, 0
    %p99 = por %p97, %p98
    %p100 = scmp.ne.s32.totalorder %s89, %s92
    %p101 = scmp.eq.s32.totalorder %s16, 1
    %p102 = por %p100, %p101
    %p103 = scmp.ne.s32.totalorder %s92, %s93
    %p104 = scmp.eq.s32.totalorder %s16, 0
    %p105 = por %p103, %p104
    %p106 = scmp.ne.s32.totalorder %s92, %s93
    %p107 = scmp.eq.s32.totalorder %s17, 1
    %p108 = por %p106, %p107
    %p110 = scmp.ne.s32.totalorder %s93, %s109
    %p111 = scmp.eq.s32.totalorder %s17, 0
    %p112 = por %p110, %p111
    %s113 = ssub.s32 %s11, %s18
    %p114 = scmp.eq.s32.totalorder %s113, 0
    %s116 = sadd.s32 %s115, 1
    %s117 = scalar_select %p114, %s115, %s116
    %p120 = pneg %p114
    %p121 = scmp.eq.s32.totalorder %s11, 1
    %p122 = por %p120, %p121
    %p123 = scmp.ne.s32.totalorder %s115, %s118
    %p124 = scmp.eq.s32.totalorder %s11, 0
    %p125 = por %p123, %p124
    %p126 = scmp.ne.s32.totalorder %s115, %s118
    %p127 = scmp.eq.s32.totalorder %s16, 1
    %p128 = por %p126, %p127
    %p129 = scmp.ne.s32.totalorder %s118, %s119
    %p130 = scmp.eq.s32.totalorder %s16, 0
    %p131 = por %p129, %p130
    %p132 = scmp.ne.s32.totalorder %s118, %s119
    %p133 = scmp.eq.s32.totalorder %s17, 1
    %p134 = por %p132, %p133
    %p136 = scmp.ne.s32.totalorder %s119, %s135
    %p137 = scmp.eq.s32.totalorder %s17, 0
    %p138 = por %p136, %p137
    %p139 = scmp.le.s32.totalorder 1, %s11
    %p140 = scmp.lt.s32.totalorder %s11, 3
    %p141 = pnand %p139, %p140
    %p142 = pneg %p141
    // Predicated region
    $region9: #{bottleneck_forward.8} parent=5 // pred_check
      _
    $region10: #{bottleneck_forward.8} parent=5 // pred_check_branch
      %144 = sbr.rel (%p141) target = $region12
    $region11: #{bottleneck_forward.8} parent=5 // pred_region
      %s145 = ssub.s32 %s11, 1
      // Predicated region
      $region13: #{bottleneck_forward.8} parent=11 // pred_check
        %p146 = pneg %p58
      $region14: #{bottleneck_forward.8} parent=11 // pred_check_branch
        %148 = sbr.rel (%p146) target = $region16
      $region15: #{bottleneck_forward.8} parent=11 // pred_region
        _
      $region16: #{bottleneck_forward.8} parent=11 // pred_fallthru
        _
      // Predicated region
      $region17: #{bottleneck_forward.8} parent=11 // pred_check
        %p149 = pneg %p79
      $region18: #{bottleneck_forward.8} parent=11 // pred_check_branch
        %151 = sbr.rel (%p149) target = $region20
      $region19: #{bottleneck_forward.8} parent=11 // pred_region
        _
      $region20: #{bottleneck_forward.8} parent=11 // pred_fallthru
        _
    $region12: #{bottleneck_forward.8} parent=5 // pred_fallthru
      _
    %p152 = scmp.lt.s32.totalorder %s11, 2
    // Predicated region
    $region21: #{bottleneck_forward.8} parent=5 // pred_check
      %p153 = pneg %p152
    $region22: #{bottleneck_forward.8} parent=5 // pred_check_branch
      %155 = sbr.rel (%p153) target = $region24
    $region23: #{bottleneck_forward.8} parent=5 // pred_region
      // Predicated region
      $region25: #{bottleneck_forward.8} parent=23 // pred_check
        %p156 = pneg %p31
      $region26: #{bottleneck_forward.8} parent=23 // pred_check_branch
        %158 = sbr.rel (%p156) target = $region28
      $region27: #{bottleneck_forward.8} parent=23 // pred_region
        %p159 = scmp.lt.s32.totalorder %s11, 1
        %s160 = scalar_select %p159, %s11, 1
        %s161 = smul.addr %s160, 8
        %s162 = scalar_lea.vmem %s0, %s161
      $region28: #{bottleneck_forward.8} parent=23 // pred_fallthru
        _
    $region24: #{bottleneck_forward.8} parent=5 // pred_fallthru
      _
    %p163 = scmp.le.s32.totalorder 1, %s11
    %p164 = scmp.lt.s32.totalorder %s11, 3
    %p165 = pnand %p163, %p164
    %p166 = pneg %p165
    // Predicated region
    $region29: #{bottleneck_forward.8} parent=5 // pred_check
      _
    $region30: #{bottleneck_forward.8} parent=5 // pred_check_branch
      %168 = sbr.rel (%p165) target = $region32
    $region31: #{bottleneck_forward.8} parent=5 // pred_region
      %s169 = ssub.s32 %s11, 1
      %p170 = scmp.lt.s32.totalorder %s16, 1
      %s171 = scalar_select %p170, %s16, 1
      %s172 = smul.addr %s171, 8
      %s173 = scalar_lea.vmem %s0, %s172
      %p174 = pneg %p37
      %p175 = pneg %p34
      %p176 = pneg %p58
      %p177 = pneg %p55
      %p178 = pneg %p79
      %p179 = pneg %p76
      %p180 = pneg %p105
      %p181 = pneg %p102
      %p182 = scmp.lt.s32.totalorder %s16, 1
      %s183 = scalar_select %p182, %s16, 1
      %s184 = smul.addr %s183, 8
      %s185 = scalar_lea.vmem %s3, %s184
      %p186 = pneg %p131
      %p187 = pneg %p128
      %p188 = scmp.lt.s32.totalorder %s16, 1
      %s189 = scalar_select %p188, %s16, 1
      %s190 = smul.addr %s189, 8
      %s191 = scalar_lea.vmem %s4, %s190
      %p192 = scmp.lt.s32.totalorder %s16, 1
      %s193 = scalar_select %p192, %s16, 1
      %s194 = smul.addr %s193, 8
      %s195 = scalar_lea.vmem %s0, %s194
      %p196 = scmp.lt.s32.totalorder %s16, 1
      %s197 = scalar_select %p196, %s16, 1
      %s198 = smul.addr %s197, 8
      %s199 = scalar_lea.vmem %s3, %s198
      %p200 = scmp.lt.s32.totalorder %s16, 1
      %s201 = scalar_select %p200, %s16, 1
      %s202 = smul.addr %s201, 8
      %s203 = scalar_lea.vmem %s4, %s202
      %204 = vst [vmem:[%s199] sm:$0xff] 0.0
      %v205 = vld [vmem:[%s195] sm:$0xff]
      %v206 = vld [vmem:[%s1] sm:$0xff]
      %v207 = vperm.slane %v205, 0
      %209 = vset.pattern.permute.xlu0 0
      %210 = vperm.xlu0 %209, %v206
      %v211 = vpop.permute.xlu0 %210
      %v213 = vsub.f32 %v207, %v211
      %v214 = vand.u32 2147483647, %v213
      %v215 = vsub.f32 0.0, %v214
      %v216 = vperm.slane %v205, 1
      %217 = vset.pattern.permute.xlu0 1
      %218 = vperm.xlu0 %217, %v206
      %v219 = vpop.permute.xlu0 %218
      %v221 = vsub.f32 %v216, %v219
      %v222 = vand.u32 2147483647, %v221
      %v223 = vsub.f32 %v215, %v222
      %v224 = vperm.slane %v205, 2
      %225 = vset.pattern.permute.xlu0 2
      %226 = vperm.xlu0 %225, %v206
      %v227 = vpop.permute.xlu0 %226
      %v229 = vsub.f32 %v224, %v227
      %v230 = vand.u32 2147483647, %v229
      %v231 = vsub.f32 %v223, %v230
      %v232 = vperm.slane %v205, 3
      %233 = vset.pattern.permute.xlu0 3
      %234 = vperm.xlu0 %233, %v206
      %v235 = vpop.permute.xlu0 %234
      %v237 = vsub.f32 %v232, %v235
      %v238 = vand.u32 2147483647, %v237
      %v239 = vsub.f32 %v231, %v238
      %v240 = vperm.slane %v205, 4
      %241 = vset.pattern.permute.xlu0 4
      %242 = vperm.xlu0 %241, %v206
      %v243 = vpop.permute.xlu0 %242
      %v245 = vsub.f32 %v240, %v243
      %v246 = vand.u32 2147483647, %v245
      %v247 = vsub.f32 %v239, %v246
      %v248 = vperm.slane %v205, 5
      %249 = vset.pattern.permute.xlu0 5
      %250 = vperm.xlu0 %249, %v206
      %v251 = vpop.permute.xlu0 %250
      %v253 = vsub.f32 %v248, %v251
      %v254 = vand.u32 2147483647, %v253
      %v255 = vsub.f32 %v247, %v254
      %v256 = vperm.slane %v205, 6
      %257 = vset.pattern.permute.xlu0 6
      %258 = vperm.xlu0 %257, %v206
      %v259 = vpop.permute.xlu0 %258
      %v261 = vsub.f32 %v256, %v259
      %v262 = vand.u32 2147483647, %v261
      %v263 = vsub.f32 %v255, %v262
      %v264 = vperm.slane %v205, 7
      %265 = vset.pattern.permute.xlu0 7
      %266 = vperm.xlu0 %265, %v206
      %v267 = vpop.permute.xlu0 %266
      %v269 = vsub.f32 %v264, %v267
      %v270 = vand.u32 2147483647, %v269
      %v271 = vsub.f32 %v263, %v270
      %s272 = scalar_lea.vmem %s1, 8
      %v273 = vld [vmem:[%s272] sm:$0xff]
      %275 = vset.pattern.permute.xlu0 0
      %276 = vperm.xlu0 %275, %v273
      %v277 = vpop.permute.xlu0 %276
      %v279 = vsub.f32 %v207, %v277
      %v280 = vand.u32 2147483647, %v279
      %282 = vrot.lane.b32.xlu0 %v280, 127
      %v283 = vpop.permute.xlu0 %282
      %v285 = vsub.f32 %v271, %v283
      %286 = vset.pattern.permute.xlu0 1
      %287 = vperm.xlu0 %286, %v273
      %v288 = vpop.permute.xlu0 %287
      %v290 = vsub.f32 %v216, %v288
      %v291 = vand.u32 2147483647, %v290
      %293 = vrot.lane.b32.xlu0 %v291, 127
      %v294 = vpop.permute.xlu0 %293
      %v296 = vsub.f32 %v285, %v294
      %297 = vset.pattern.permute.xlu0 2
      %298 = vperm.xlu0 %297, %v273
      %v299 = vpop.permute.xlu0 %298
      %v301 = vsub.f32 %v224, %v299
      %v302 = vand.u32 2147483647, %v301
      %304 = vrot.lane.b32.xlu0 %v302, 127
      %v305 = vpop.permute.xlu0 %304
      %v307 = vsub.f32 %v296, %v305
      %308 = vset.pattern.permute.xlu0 3
      %309 = vperm.xlu0 %308, %v273
      %v310 = vpop.permute.xlu0 %309
      %v312 = vsub.f32 %v232, %v310
      %v313 = vand.u32 2147483647, %v312
      %315 = vrot.lane.b32.xlu0 %v313, 127
      %v316 = vpop.permute.xlu0 %315
      %v318 = vsub.f32 %v307, %v316
      %319 = vset.pattern.permute.xlu0 4
      %320 = vperm.xlu0 %319, %v273
      %v321 = vpop.permute.xlu0 %320
      %v323 = vsub.f32 %v240, %v321
      %v324 = vand.u32 2147483647, %v323
      %326 = vrot.lane.b32.xlu0 %v324, 127
      %v327 = vpop.permute.xlu0 %326
      %v329 = vsub.f32 %v318, %v327
      %330 = vset.pattern.permute.xlu0 5
      %331 = vperm.xlu0 %330, %v273
      %v332 = vpop.permute.xlu0 %331
      %v334 = vsub.f32 %v248, %v332
      %v335 = vand.u32 2147483647, %v334
      %337 = vrot.lane.b32.xlu0 %v335, 127
      %v338 = vpop.permute.xlu0 %337
      %v340 = vsub.f32 %v329, %v338
      %341 = vset.pattern.permute.xlu0 6
      %342 = vperm.xlu0 %341, %v273
      %v343 = vpop.permute.xlu0 %342
      %v345 = vsub.f32 %v256, %v343
      %v346 = vand.u32 2147483647, %v345
      %348 = vrot.lane.b32.xlu0 %v346, 127
      %v349 = vpop.permute.xlu0 %348
      %v351 = vsub.f32 %v340, %v349
      %352 = vset.pattern.permute.xlu0 7
      %353 = vperm.xlu0 %352, %v273
      %v354 = vpop.permute.xlu0 %353
      %v356 = vsub.f32 %v264, %v354
      %v357 = vand.u32 2147483647, %v356
      %359 = vrot.lane.b32.xlu0 %v357, 127
      %v360 = vpop.permute.xlu0 %359
      %v362 = vsub.f32 %v351, %v360
      %s363 = scalar_lea.vmem %s1, 16
      %v364 = vld [vmem:[%s363] sm:$0xff]
      %366 = vset.pattern.permute.xlu0 0
      %367 = vperm.xlu0 %366, %v364
      %v368 = vpop.permute.xlu0 %367
      %v370 = vsub.f32 %v207, %v368
      %v371 = vand.u32 2147483647, %v370
      %373 = vrot.lane.b32.xlu0 %v371, 126
      %v374 = vpop.permute.xlu0 %373
      %v376 = vsub.f32 %v362, %v374
      %377 = vset.pattern.permute.xlu0 1
      %378 = vperm.xlu0 %377, %v364
      %v379 = vpop.permute.xlu0 %378
      %v381 = vsub.f32 %v216, %v379
      %v382 = vand.u32 2147483647, %v381
      %384 = vrot.lane.b32.xlu0 %v382, 126
      %v385 = vpop.permute.xlu0 %384
      %v387 = vsub.f32 %v376, %v385
      %388 = vset.pattern.permute.xlu0 2
      %389 = vperm.xlu0 %388, %v364
      %v390 = vpop.permute.xlu0 %389
      %v392 = vsub.f32 %v224, %v390
      %v393 = vand.u32 2147483647, %v392
      %395 = vrot.lane.b32.xlu0 %v393, 126
      %v396 = vpop.permute.xlu0 %395
      %v398 = vsub.f32 %v387, %v396
      %399 = vset.pattern.permute.xlu0 3
      %400 = vperm.xlu0 %399, %v364
      %v401 = vpop.permute.xlu0 %400
      %v403 = vsub.f32 %v232, %v401
      %v404 = vand.u32 2147483647, %v403
      %406 = vrot.lane.b32.xlu0 %v404, 126
      %v407 = vpop.permute.xlu0 %406
      %v409 = vsub.f32 %v398, %v407
      %410 = vset.pattern.permute.xlu0 4
      %411 = vperm.xlu0 %410, %v364
      %v412 = vpop.permute.xlu0 %411
      %v414 = vsub.f32 %v240, %v412
      %v415 = vand.u32 2147483647, %v414
      %417 = vrot.lane.b32.xlu0 %v415, 126
      %v418 = vpop.permute.xlu0 %417
      %v420 = vsub.f32 %v409, %v418
      %421 = vset.pattern.permute.xlu0 5
      %422 = vperm.xlu0 %421, %v364
      %v423 = vpop.permute.xlu0 %422
      %v425 = vsub.f32 %v248, %v423
      %v426 = vand.u32 2147483647, %v425
      %428 = vrot.lane.b32.xlu0 %v426, 126
      %v429 = vpop.permute.xlu0 %428
      %v431 = vsub.f32 %v420, %v429
      %432 = vset.pattern.permute.xlu0 6
      %433 = vperm.xlu0 %432, %v364
      %v434 = vpop.permute.xlu0 %433
      %v436 = vsub.f32 %v256, %v434
      %v437 = vand.u32 2147483647, %v436
      %439 = vrot.lane.b32.xlu0 %v437, 126
      %v440 = vpop.permute.xlu0 %439
      %v442 = vsub.f32 %v431, %v440
      %443 = vset.pattern.permute.xlu0 7
      %444 = vperm.xlu0 %443, %v364
      %v445 = vpop.permute.xlu0 %444
      %v447 = vsub.f32 %v264, %v445
      %v448 = vand.u32 2147483647, %v447
      %450 = vrot.lane.b32.xlu0 %v448, 126
      %v451 = vpop.permute.xlu0 %450
      %v453 = vsub.f32 %v442, %v451
      %s454 = scalar_lea.vmem %s1, 24
      %v455 = vld [vmem:[%s454] sm:$0xff]
      %457 = vset.pattern.permute.xlu0 0
      %458 = vperm.xlu0 %457, %v455
      %v459 = vpop.permute.xlu0 %458
      %v461 = vsub.f32 %v207, %v459
      %v462 = vand.u32 2147483647, %v461
      %464 = vrot.lane.b32.xlu0 %v462, 118
      %v465 = vpop.permute.xlu0 %464
      %v467 = vsub.f32 %v453, %v465
      %468 = vset.pattern.permute.xlu0 1
      %469 = vperm.xlu0 %468, %v455
      %v470 = vpop.permute.xlu0 %469
      %v472 = vsub.f32 %v216, %v470
      %v473 = vand.u32 2147483647, %v472
      %475 = vrot.lane.b32.xlu0 %v473, 118
      %v476 = vpop.permute.xlu0 %475
      %v478 = vsub.f32 %v467, %v476
      %479 = vset.pattern.permute.xlu0 2
      %480 = vperm.xlu0 %479, %v455
      %v481 = vpop.permute.xlu0 %480
      %v483 = vsub.f32 %v224, %v481
      %v484 = vand.u32 2147483647, %v483
      %486 = vrot.lane.b32.xlu0 %v484, 118
      %v487 = vpop.permute.xlu0 %486
      %v489 = vsub.f32 %v478, %v487
      %490 = vset.pattern.permute.xlu0 3
      %491 = vperm.xlu0 %490, %v455
      %v492 = vpop.permute.xlu0 %491
      %v494 = vsub.f32 %v232, %v492
      %v495 = vand.u32 2147483647, %v494
      %497 = vrot.lane.b32.xlu0 %v495, 118
      %v498 = vpop.permute.xlu0 %497
      %v500 = vsub.f32 %v489, %v498
      %501 = vset.pattern.permute.xlu0 4
      %502 = vperm.xlu0 %501, %v455
      %v503 = vpop.permute.xlu0 %502
      %v505 = vsub.f32 %v240, %v503
      %v506 = vand.u32 2147483647, %v505
      %508 = vrot.lane.b32.xlu0 %v506, 118
      %v509 = vpop.permute.xlu0 %508
      %v511 = vsub.f32 %v500, %v509
      %512 = vset.pattern.permute.xlu0 5
      %513 = vperm.xlu0 %512, %v455
      %v514 = vpop.permute.xlu0 %513
      %v516 = vsub.f32 %v248, %v514
      %v517 = vand.u32 2147483647, %v516
      %519 = vrot.lane.b32.xlu0 %v517, 118
      %v520 = vpop.permute.xlu0 %519
      %v522 = vsub.f32 %v511, %v520
      %523 = vset.pattern.permute.xlu0 6
      %524 = vperm.xlu0 %523, %v455
      %v525 = vpop.permute.xlu0 %524
      %v527 = vsub.f32 %v256, %v525
      %v528 = vand.u32 2147483647, %v527
      %530 = vrot.lane.b32.xlu0 %v528, 118
      %v531 = vpop.permute.xlu0 %530
      %v533 = vsub.f32 %v522, %v531
      %534 = vset.pattern.permute.xlu0 7
      %535 = vperm.xlu0 %534, %v455
      %v536 = vpop.permute.xlu0 %535
      %v538 = vsub.f32 %v264, %v536
      %v539 = vand.u32 2147483647, %v538
      %541 = vrot.lane.b32.xlu0 %v539, 118
      %v542 = vpop.permute.xlu0 %541
      %v544 = vsub.f32 %v533, %v542
      %s545 = scalar_lea.vmem %s1, 32
      %v546 = vld [vmem:[%s545] sm:$0xff]
      %548 = vset.pattern.permute.xlu0 0
      %549 = vperm.xlu0 %548, %v546
      %v550 = vpop.permute.xlu0 %549
      %v552 = vsub.f32 %v207, %v550
      %v553 = vand.u32 2147483647, %v552
      %555 = vrot.lane.b32.xlu0 %v553, 117
      %v556 = vpop.permute.xlu0 %555
      %v558 = vsub.f32 %v544, %v556
      %559 = vset.pattern.permute.xlu0 1
      %560 = vperm.xlu0 %559, %v546
      %v561 = vpop.permute.xlu0 %560
      %v563 = vsub.f32 %v216, %v561
      %v564 = vand.u32 2147483647, %v563
      %566 = vrot.lane.b32.xlu0 %v564, 117
      %v567 = vpop.permute.xlu0 %566
      %v569 = vsub.f32 %v558, %v567
      %570 = vset.pattern.permute.xlu0 2
      %571 = vperm.xlu0 %570, %v546
      %v572 = vpop.permute.xlu0 %571
      %v574 = vsub.f32 %v224, %v572
      %v575 = vand.u32 2147483647, %v574
      %577 = vrot.lane.b32.xlu0 %v575, 117
      %v578 = vpop.permute.xlu0 %577
      %v580 = vsub.f32 %v569, %v578
      %581 = vset.pattern.permute.xlu0 3
      %582 = vperm.xlu0 %581, %v546
      %v583 = vpop.permute.xlu0 %582
      %v585 = vsub.f32 %v232, %v583
      %v586 = vand.u32 2147483647, %v585
      %588 = vrot.lane.b32.xlu0 %v586, 117
      %v589 = vpop.permute.xlu0 %588
      %v591 = vsub.f32 %v580, %v589
      %592 = vset.pattern.permute.xlu0 4
      %593 = vperm.xlu0 %592, %v546
      %v594 = vpop.permute.xlu0 %593
      %v596 = vsub.f32 %v240, %v594
      %v597 = vand.u32 2147483647, %v596
      %599 = vrot.lane.b32.xlu0 %v597, 117
      %v600 = vpop.permute.xlu0 %599
      %v602 = vsub.f32 %v591, %v600
      %603 = vset.pattern.permute.xlu0 5
      %604 = vperm.xlu0 %603, %v546
      %v605 = vpop.permute.xlu0 %604
      %v607 = vsub.f32 %v248, %v605
      %v608 = vand.u32 2147483647, %v607
      %610 = vrot.lane.b32.xlu0 %v608, 117
      %v611 = vpop.permute.xlu0 %610
      %v613 = vsub.f32 %v602, %v611
      %614 = vset.pattern.permute.xlu0 6
      %615 = vperm.xlu0 %614, %v546
      %v616 = vpop.permute.xlu0 %615
      %v618 = vsub.f32 %v256, %v616
      %v619 = vand.u32 2147483647, %v618
      %621 = vrot.lane.b32.xlu0 %v619, 117
      %v622 = vpop.permute.xlu0 %621
      %v624 = vsub.f32 %v613, %v622
      %625 = vset.pattern.permute.xlu0 7
      %626 = vperm.xlu0 %625, %v546
      %v627 = vpop.permute.xlu0 %626
      %v629 = vsub.f32 %v264, %v627
      %v630 = vand.u32 2147483647, %v629
      %632 = vrot.lane.b32.xlu0 %v630, 117
      %v633 = vpop.permute.xlu0 %632
      %v635 = vsub.f32 %v624, %v633
      %s636 = scalar_lea.vmem %s1, 40
      %v637 = vld [vmem:[%s636] sm:$0xff]
      %639 = vset.pattern.permute.xlu0 0
      %640 = vperm.xlu0 %639, %v637
      %v641 = vpop.permute.xlu0 %640
      %v643 = vsub.f32 %v207, %v641
      %v644 = vand.u32 2147483647, %v643
      %646 = vrot.lane.b32.xlu0 %v644, 116
      %v647 = vpop.permute.xlu0 %646
      %v649 = vsub.f32 %v635, %v647
      %650 = vset.pattern.permute.xlu0 1
      %651 = vperm.xlu0 %650, %v637
      %v652 = vpop.permute.xlu0 %651
      %v654 = vsub.f32 %v216, %v652
      %v655 = vand.u32 2147483647, %v654
      %657 = vrot.lane.b32.xlu0 %v655, 116
      %v658 = vpop.permute.xlu0 %657
      %v660 = vsub.f32 %v649, %v658
      %661 = vset.pattern.permute.xlu0 2
      %662 = vperm.xlu0 %661, %v637
      %v663 = vpop.permute.xlu0 %662
      %v665 = vsub.f32 %v224, %v663
      %v666 = vand.u32 2147483647, %v665
      %668 = vrot.lane.b32.xlu0 %v666, 116
      %v669 = vpop.permute.xlu0 %668
      %v671 = vsub.f32 %v660, %v669
      %672 = vset.pattern.permute.xlu0 3
      %673 = vperm.xlu0 %672, %v637
      %v674 = vpop.permute.xlu0 %673
      %v676 = vsub.f32 %v232, %v674
      %v677 = vand.u32 2147483647, %v676
      %679 = vrot.lane.b32.xlu0 %v677, 116
      %v680 = vpop.permute.xlu0 %679
      %v682 = vsub.f32 %v671, %v680
      %683 = vset.pattern.permute.xlu0 4
      %684 = vperm.xlu0 %683, %v637
      %v685 = vpop.permute.xlu0 %684
      %v687 = vsub.f32 %v240, %v685
      %v688 = vand.u32 2147483647, %v687
      %690 = vrot.lane.b32.xlu0 %v688, 116
      %v691 = vpop.permute.xlu0 %690
      %v693 = vsub.f32 %v682, %v691
      %694 = vset.pattern.permute.xlu0 5
      %695 = vperm.xlu0 %694, %v637
      %v696 = vpop.permute.xlu0 %695
      %v698 = vsub.f32 %v248, %v696
      %v699 = vand.u32 2147483647, %v698
      %701 = vrot.lane.b32.xlu0 %v699, 116
      %v702 = vpop.permute.xlu0 %701
      %v704 = vsub.f32 %v693, %v702
      %705 = vset.pattern.permute.xlu0 6
      %706 = vperm.xlu0 %705, %v637
      %v707 = vpop.permute.xlu0 %706
      %v709 = vsub.f32 %v256, %v707
      %v710 = vand.u32 2147483647, %v709
      %712 = vrot.lane.b32.xlu0 %v710, 116
      %v713 = vpop.permute.xlu0 %712
      %v715 = vsub.f32 %v704, %v713
      %716 = vset.pattern.permute.xlu0 7
      %717 = vperm.xlu0 %716, %v637
      %v718 = vpop.permute.xlu0 %717
      %v720 = vsub.f32 %v264, %v718
      %v721 = vand.u32 2147483647, %v720
      %723 = vrot.lane.b32.xlu0 %v721, 116
      %v724 = vpop.permute.xlu0 %723
      %v726 = vsub.f32 %v715, %v724
      %s727 = scalar_lea.vmem %s1, 48
      %v728 = vld [vmem:[%s727] sm:$0xff]
      %730 = vset.pattern.permute.xlu0 0
      %731 = vperm.xlu0 %730, %v728
      %v732 = vpop.permute.xlu0 %731
      %v734 = vsub.f32 %v207, %v732
      %v735 = vand.u32 2147483647, %v734
      %737 = vrot.lane.b32.xlu0 %v735, 108
      %v738 = vpop.permute.xlu0 %737
      %v740 = vsub.f32 %v726, %v738
      %741 = vset.pattern.permute.xlu0 1
      %742 = vperm.xlu0 %741, %v728
      %v743 = vpop.permute.xlu0 %742
      %v745 = vsub.f32 %v216, %v743
      %v746 = vand.u32 2147483647, %v745
      %748 = vrot.lane.b32.xlu0 %v746, 108
      %v749 = vpop.permute.xlu0 %748
      %v751 = vsub.f32 %v740, %v749
      %752 = vset.pattern.permute.xlu0 2
      %753 = vperm.xlu0 %752, %v728
      %v754 = vpop.permute.xlu0 %753
      %v756 = vsub.f32 %v224, %v754
      %v757 = vand.u32 2147483647, %v756
      %759 = vrot.lane.b32.xlu0 %v757, 108
      %v760 = vpop.permute.xlu0 %759
      %v762 = vsub.f32 %v751, %v760
      %763 = vset.pattern.permute.xlu0 3
      %764 = vperm.xlu0 %763, %v728
      %v765 = vpop.permute.xlu0 %764
      %v767 = vsub.f32 %v232, %v765
      %v768 = vand.u32 2147483647, %v767
      %770 = vrot.lane.b32.xlu0 %v768, 108
      %v771 = vpop.permute.xlu0 %770
      %v773 = vsub.f32 %v762, %v771
      %774 = vset.pattern.permute.xlu0 4
      %775 = vperm.xlu0 %774, %v728
      %v776 = vpop.permute.xlu0 %775
      %v778 = vsub.f32 %v240, %v776
      %v779 = vand.u32 2147483647, %v778
      %781 = vrot.lane.b32.xlu0 %v779, 108
      %v782 = vpop.permute.xlu0 %781
      %v784 = vsub.f32 %v773, %v782
      %785 = vset.pattern.permute.xlu0 5
      %786 = vperm.xlu0 %785, %v728
      %v787 = vpop.permute.xlu0 %786
      %v789 = vsub.f32 %v248, %v787
      %v790 = vand.u32 2147483647, %v789
      %792 = vrot.lane.b32.xlu0 %v790, 108
      %v793 = vpop.permute.xlu0 %792
      %v795 = vsub.f32 %v784, %v793
      %796 = vset.pattern.permute.xlu0 6
      %797 = vperm.xlu0 %796, %v728
      %v798 = vpop.permute.xlu0 %797
      %v800 = vsub.f32 %v256, %v798
      %v801 = vand.u32 2147483647, %v800
      %803 = vrot.lane.b32.xlu0 %v801, 108
      %v804 = vpop.permute.xlu0 %803
      %v806 = vsub.f32 %v795, %v804
      %807 = vset.pattern.permute.xlu0 7
      %808 = vperm.xlu0 %807, %v728
      %v809 = vpop.permute.xlu0 %808
      %v811 = vsub.f32 %v264, %v809
      %v812 = vand.u32 2147483647, %v811
      %814 = vrot.lane.b32.xlu0 %v812, 108
      %v815 = vpop.permute.xlu0 %814
      %v817 = vsub.f32 %v806, %v815
      %s818 = scalar_lea.vmem %s1, 56
      %v819 = vld [vmem:[%s818] sm:$0xff]
      %821 = vset.pattern.permute.xlu0 0
      %822 = vperm.xlu0 %821, %v819
      %v823 = vpop.permute.xlu0 %822
      %v825 = vsub.f32 %v207, %v823
      %v826 = vand.u32 2147483647, %v825
      %828 = vrot.lane.b32.xlu0 %v826, 107
      %v829 = vpop.permute.xlu0 %828
      %v831 = vsub.f32 %v817, %v829
      %832 = vset.pattern.permute.xlu0 1
      %833 = vperm.xlu0 %832, %v819
      %v834 = vpop.permute.xlu0 %833
      %v836 = vsub.f32 %v216, %v834
      %v837 = vand.u32 2147483647, %v836
      %839 = vrot.lane.b32.xlu0 %v837, 107
      %v840 = vpop.permute.xlu0 %839
      %v842 = vsub.f32 %v831, %v840
      %843 = vset.pattern.permute.xlu0 2
      %844 = vperm.xlu0 %843, %v819
      %v845 = vpop.permute.xlu0 %844
      %v847 = vsub.f32 %v224, %v845
      %v848 = vand.u32 2147483647, %v847
      %850 = vrot.lane.b32.xlu0 %v848, 107
      %v851 = vpop.permute.xlu0 %850
      %v853 = vsub.f32 %v842, %v851
      %854 = vset.pattern.permute.xlu0 3
      %855 = vperm.xlu0 %854, %v819
      %v856 = vpop.permute.xlu0 %855
      %v858 = vsub.f32 %v232, %v856
      %v859 = vand.u32 2147483647, %v858
      %861 = vrot.lane.b32.xlu0 %v859, 107
      %v862 = vpop.permute.xlu0 %861
      %v864 = vsub.f32 %v853, %v862
      %865 = vset.pattern.permute.xlu0 4
      %866 = vperm.xlu0 %865, %v819
      %v867 = vpop.permute.xlu0 %866
      %v869 = vsub.f32 %v240, %v867
      %v870 = vand.u32 2147483647, %v869
      %872 = vrot.lane.b32.xlu0 %v870, 107
      %v873 = vpop.permute.xlu0 %872
      %v875 = vsub.f32 %v864, %v873
      %876 = vset.pattern.permute.xlu0 5
      %877 = vperm.xlu0 %876, %v819
      %v878 = vpop.permute.xlu0 %877
      %v880 = vsub.f32 %v248, %v878
      %v881 = vand.u32 2147483647, %v880
      %883 = vrot.lane.b32.xlu0 %v881, 107
      %v884 = vpop.permute.xlu0 %883
      %v886 = vsub.f32 %v875, %v884
      %887 = vset.pattern.permute.xlu0 6
      %888 = vperm.xlu0 %887, %v819
      %v889 = vpop.permute.xlu0 %888
      %v891 = vsub.f32 %v256, %v889
      %v892 = vand.u32 2147483647, %v891
      %894 = vrot.lane.b32.xlu0 %v892, 107
      %v895 = vpop.permute.xlu0 %894
      %v897 = vsub.f32 %v886, %v895
      %898 = vset.pattern.permute.xlu0 7
      %899 = vperm.xlu0 %898, %v819
      %v900 = vpop.permute.xlu0 %899
      %v902 = vsub.f32 %v264, %v900
      %v903 = vand.u32 2147483647, %v902
      %905 = vrot.lane.b32.xlu0 %v903, 107
      %v906 = vpop.permute.xlu0 %905
      %v908 = vsub.f32 %v897, %v906
      %s909 = scalar_lea.vmem %s1, 64
      %v910 = vld [vmem:[%s909] sm:$0xff]
      %912 = vset.pattern.permute.xlu0 0
      %913 = vperm.xlu0 %912, %v910
      %v914 = vpop.permute.xlu0 %913
      %v916 = vsub.f32 %v207, %v914
      %v917 = vand.u32 2147483647, %v916
      %919 = vrot.lane.b32.xlu0 %v917, 106
      %v920 = vpop.permute.xlu0 %919
      %v922 = vsub.f32 %v908, %v920
      %923 = vset.pattern.permute.xlu0 1
      %924 = vperm.xlu0 %923, %v910
      %v925 = vpop.permute.xlu0 %924
      %v927 = vsub.f32 %v216, %v925
      %v928 = vand.u32 2147483647, %v927
      %930 = vrot.lane.b32.xlu0 %v928, 106
      %v931 = vpop.permute.xlu0 %930
      %v933 = vsub.f32 %v922, %v931
      %934 = vset.pattern.permute.xlu0 2
      %935 = vperm.xlu0 %934, %v910
      %v936 = vpop.permute.xlu0 %935
      %v938 = vsub.f32 %v224, %v936
      %v939 = vand.u32 2147483647, %v938
      %941 = vrot.lane.b32.xlu0 %v939, 106
      %v942 = vpop.permute.xlu0 %941
      %v944 = vsub.f32 %v933, %v942
      %945 = vset.pattern.permute.xlu0 3
      %946 = vperm.xlu0 %945, %v910
      %v947 = vpop.permute.xlu0 %946
      %v949 = vsub.f32 %v232, %v947
      %v950 = vand.u32 2147483647, %v949
      %952 = vrot.lane.b32.xlu0 %v950, 106
      %v953 = vpop.permute.xlu0 %952
      %v955 = vsub.f32 %v944, %v953
      %956 = vset.pattern.permute.xlu0 4
      %957 = vperm.xlu0 %956, %v910
      %v958 = vpop.permute.xlu0 %957
      %v960 = vsub.f32 %v240, %v958
      %v961 = vand.u32 2147483647, %v960
      %963 = vrot.lane.b32.xlu0 %v961, 106
      %v964 = vpop.permute.xlu0 %963
      %v966 = vsub.f32 %v955, %v964
      %967 = vset.pattern.permute.xlu0 5
      %968 = vperm.xlu0 %967, %v910
      %v969 = vpop.permute.xlu0 %968
      %v971 = vsub.f32 %v248, %v969
      %v972 = vand.u32 2147483647, %v971
      %974 = vrot.lane.b32.xlu0 %v972, 106
      %v975 = vpop.permute.xlu0 %974
      %v977 = vsub.f32 %v966, %v975
      %978 = vset.pattern.permute.xlu0 6
      %979 = vperm.xlu0 %978, %v910
      %v980 = vpop.permute.xlu0 %979
      %v982 = vsub.f32 %v256, %v980
      %v983 = vand.u32 2147483647, %v982
      %985 = vrot.lane.b32.xlu0 %v983, 106
      %v986 = vpop.permute.xlu0 %985
      %v988 = vsub.f32 %v977, %v986
      %989 = vset.pattern.permute.xlu0 7
      %990 = vperm.xlu0 %989, %v910
      %v991 = vpop.permute.xlu0 %990
      %v993 = vsub.f32 %v264, %v991
      %v994 = vand.u32 2147483647, %v993
      %996 = vrot.lane.b32.xlu0 %v994, 106
      %v997 = vpop.permute.xlu0 %996
      %v999 = vsub.f32 %v988, %v997
      %1001 = vrot.lane.b32.xlu0 %v999, 11
      %v1002 = vpop.permute.xlu0 %1001
      %vm1004 = vcmask 728152
      %1005 = vst.msk [vmem:[%s199] sm:$0xff] %vm1004, %v1002
      %v1006 = vld [vmem:[%s2] sm:$0x1]
      %v1008 = vperm.slane %v1006, 0
      %1009 = vrot.lane.b32.xlu0 %v1008, 117
      %v1010 = vpop.permute.xlu0 %1009
      %v1012 = vmul.f32 %v999, %v1010
      %vm1013 = vcmask 637952
      %v1014 = vsel %vm1013, %v1012, 0.0
      %1015 = vadd.xlane.f32.xlu0 %v1014
      %v1016 = vpop.xlane.xlu0 %1015
      %v1017 = vadd.f32 %v1016, 0.0
      %v1018 = vmul.f32 %v1012, %v999
      %v1019 = vsel %vm1013, %v1018, 0.0
      %1020 = vadd.xlane.f32.xlu0 %v1019
      %v1021 = vpop.xlane.xlu0 %1020
      %v1022 = vadd.f32 %v1021, 0.0
      %vm1023 = vcmask 7168
      %1024 = vst.msk [vmem:[%s203] sm:$0xff] %vm1023, %v1017
      %vm1025 = vcmask 15368
      %1026 = vst.msk [vmem:[%s203] sm:$0xff] %vm1025, %v1022
      %p1027 = scmp.lt.s32.totalorder %s16, 1
      %s1028 = scalar_select %p1027, %s16, 1
      %s1029 = smul.addr %s1028, 8
      %s1030 = scalar_lea.vmem %s3, %s1029
      %p1031 = scmp.lt.s32.totalorder %s16, 1
      %s1032 = scalar_select %p1031, %s16, 1
      %s1033 = smul.addr %s1032, 8
      %s1034 = scalar_lea.vmem %s4, %s1033
      // Predicated region
      $region33: #{bottleneck_forward.8} parent=31 // pred_check
        %p1035 = pneg %p102
      $region34: #{bottleneck_forward.8} parent=31 // pred_check_branch
        %1037 = sbr.rel (%p1035) target = $region36
      $region35: #{bottleneck_forward.8} parent=31 // pred_region
        _
      $region36: #{bottleneck_forward.8} parent=31 // pred_fallthru
        _
      // Predicated region
      $region37: #{bottleneck_forward.8} parent=31 // pred_check
        %p1038 = pneg %p128
      $region38: #{bottleneck_forward.8} parent=31 // pred_check_branch
        %1040 = sbr.rel (%p1038) target = $region40
      $region39: #{bottleneck_forward.8} parent=31 // pred_region
        _
      $region40: #{bottleneck_forward.8} parent=31 // pred_fallthru
        _
    $region32: #{bottleneck_forward.8} parent=5 // pred_fallthru
      _
    %p1041 = scmp.le.s32.totalorder 2, %s11
    // Predicated region
    $region41: #{bottleneck_forward.8} parent=5 // pred_check
      %p1042 = pneg %p1041
    $region42: #{bottleneck_forward.8} parent=5 // pred_check_branch
      %1044 = sbr.rel (%p1042) target = $region44
    $region43: #{bottleneck_forward.8} parent=5 // pred_region
      %s1045 = ssub.s32 %s11, 2
      // Predicated region
      $region45: #{bottleneck_forward.8} parent=43 // pred_check
        %p1046 = pneg %p108
      $region46: #{bottleneck_forward.8} parent=43 // pred_check_branch
        %1048 = sbr.rel (%p1046) target = $region48
      $region47: #{bottleneck_forward.8} parent=43 // pred_region
        %p1049 = scmp.lt.s32.totalorder %s17, 1
        %s1050 = scalar_select %p1049, %s17, 1
        %s1051 = smul.addr %s1050, 8
        %s1052 = scalar_lea.vmem %s3, %s1051
      $region48: #{bottleneck_forward.8} parent=43 // pred_fallthru
        _
      // Predicated region
      $region49: #{bottleneck_forward.8} parent=43 // pred_check
        %p1053 = pneg %p134
      $region50: #{bottleneck_forward.8} parent=43 // pred_check_branch
        %1055 = sbr.rel (%p1053) target = $region52
      $region51: #{bottleneck_forward.8} parent=43 // pred_region
        %p1056 = scmp.lt.s32.totalorder %s17, 1
        %s1057 = scalar_select %p1056, %s17, 1
        %s1058 = smul.addr %s1057, 8
        %s1059 = scalar_lea.vmem %s4, %s1058
      $region52: #{bottleneck_forward.8} parent=43 // pred_fallthru
        _
    $region44: #{bottleneck_forward.8} parent=5 // pred_fallthru
      _
  $region6: #{bottleneck_forward.8} parent=0 // loop_footer
    %s15 = sadd.s32 1, %s11
  $region7: #{bottleneck_forward.8} parent=0 // loop_footer_branch
    %10 = sbr.rel target = $region3
  $region8: #{bottleneck_forward.8} parent=0 // loop_exit
    _

// kernel: bottleneck_forward.11
$region0: #{bottleneck_forward.11}
  #allocation0 [shape = 'u32[]', space=smem, size = 0x4, offset = 0x4, fixed_abs, tag = 'smem constant byte address 0x4 - core index']
  #allocation1 [shape = 'u32[72,128]{1,0:T(1,128)}', space=vmem, size = 0x9000, scoped, tag = 'internal scratch']
  %s0 = inlined_call_operand.vmem [shape: f32[2,16,128], index: 0, kind: input, shape index: {}]
  %s1 = inlined_call_operand.vmem [shape: f32[2,16,128], index: 1, kind: input, shape index: {}]
  %s2 = inlined_call_operand.vmem [shape: f32[16,1], index: 2, kind: input, shape index: {}]
  %s3 = inlined_call_operand.vmem [shape: f32[16,1], index: 3, kind: input, shape index: {}]
  %s4 = inlined_call_operand.vmem [shape: f32[2,16,128], index: 4, kind: output, shape index: {}]
  %s5 = sld [smem:[#allocation0]]
  $region49: #{bottleneck_forward.11} parent=0
    _
  %s7 = ssub.s32 1, %s5
  %s8 = scalar_select 0, %s7, %s5
  loop: start=0, step=1, limit=4
  $region2: #{bottleneck_forward.11} parent=0 // loop_pre_header
    _
  $region3: #{bottleneck_forward.11} parent=0 // loop_header
    %s10 = sphi 0, %s14
    %p11 = scmp.ge.s32.totalorder %s10, 4
    %s17 = sphi 0, %s29
    %s18 = sphi 0, %s25
    %s19 = sphi 0, %s17
    %s20 = sphi 0, %s18
    %s21 = sphi 0, %s19
    %s22 = sphi 0, %s20
    %s34 = sphi 0, %s36
    %s37 = sphi 0, %s34
    %s38 = sphi 0, %s37
    %s54 = sphi 0, %s38
    %s62 = sphi 0, %s64
    %s65 = sphi 0, %s62
    %s66 = sphi 0, %s65
    %s82 = sphi 0, %s66
    %s86 = sphi 0, %s86
    %s88 = sphi 0, %s86
    %s89 = sphi 0, %s88
    %s103 = sphi 0, %s89
    %s107 = sphi 0, %s107
    %s109 = sphi 0, %s107
    %s110 = sphi 0, %s109
    %s124 = sphi 0, %s110
    %s132 = sphi 0, %s134
    %s135 = sphi 0, %s132
    %s136 = sphi 0, %s135
    %s152 = sphi 0, %s136
  $region4: #{bottleneck_forward.11} parent=0 // loop_header_branch
    %13 = sbr.rel (%p11) target = $region8
  $region5: #{bottleneck_forward.11} parent=0 // loop_body
    %s15 = ssub.s32 %s10, 1
    %s16 = ssub.s32 %s10, 2
    %s23 = sadd.s32 1, %s18
    %p24 = scmp.ge.s32.totalorder %s23, 1
    %s25 = scalar_select %p24, 0, %s23
    %s26 = sadd.s32 1, %s17
    %s27 = scalar_select %p24, %s26, %s17
    %p28 = scmp.ge.s32.totalorder %s27, 2
    %s29 = scalar_select %p28, 0, %s27
    %s30 = ssub.s32 %s17, %s29
    %s31 = ssub.s32 %s18, %s25
    %s32 = sor.u32 %s30, %s31
    %p33 = scmp.eq.s32.totalorder %s32, 0
    %s35 = sadd.s32 %s34, 1
    %s36 = scalar_select %p33, %s34, %s35
    %p39 = pneg %p33
    %p40 = scmp.eq.s32.totalorder %s10, 1
    %p41 = por %p39, %p40
    %p42 = scmp.ne.s32.totalorder %s34, %s37
    %p43 = scmp.eq.s32.totalorder %s10, 0
    %p44 = por %p42, %p43
    %p45 = scmp.ne.s32.totalorder %s34, %s37
    %p46 = scmp.eq.s32.totalorder %s15, 1
    %p47 = por %p45, %p46
    %p48 = scmp.ne.s32.totalorder %s37, %s38
    %p49 = scmp.eq.s32.totalorder %s15, 0
    %p50 = por %p48, %p49
    %p51 = scmp.ne.s32.totalorder %s37, %s38
    %p52 = scmp.eq.s32.totalorder %s16, 1
    %p53 = por %p51, %p52
    %p55 = scmp.ne.s32.totalorder %s38, %s54
    %p56 = scmp.eq.s32.totalorder %s16, 0
    %p57 = por %p55, %p56
    %s58 = ssub.s32 %s17, %s29
    %s59 = ssub.s32 %s18, %s25
    %s60 = sor.u32 %s58, %s59
    %p61 = scmp.eq.s32.totalorder %s60, 0
    %s63 = sadd.s32 %s62, 1
    %s64 = scalar_select %p61, %s62, %s63
    %p67 = pneg %p61
    %p68 = scmp.eq.s32.totalorder %s10, 1
    %p69 = por %p67, %p68
    %p70 = scmp.ne.s32.totalorder %s62, %s65
    %p71 = scmp.eq.s32.totalorder %s10, 0
    %p72 = por %p70, %p71
    %p73 = scmp.ne.s32.totalorder %s62, %s65
    %p74 = scmp.eq.s32.totalorder %s15, 1
    %p75 = por %p73, %p74
    %p76 = scmp.ne.s32.totalorder %s65, %s66
    %p77 = scmp.eq.s32.totalorder %s15, 0
    %p78 = por %p76, %p77
    %p79 = scmp.ne.s32.totalorder %s65, %s66
    %p80 = scmp.eq.s32.totalorder %s16, 1
    %p81 = por %p79, %p80
    %p83 = scmp.ne.s32.totalorder %s66, %s82
    %p84 = scmp.eq.s32.totalorder %s16, 0
    %p85 = por %p83, %p84
    %s87 = sadd.s32 %s86, 1
    %p90 = scmp.eq.s32.totalorder %s10, 1
    %p91 = scmp.ne.s32.totalorder %s86, %s88
    %p92 = scmp.eq.s32.totalorder %s10, 0
    %p93 = por %p91, %p92
    %p94 = scmp.ne.s32.totalorder %s86, %s88
    %p95 = scmp.eq.s32.totalorder %s15, 1
    %p96 = por %p94, %p95
    %p97 = scmp.ne.s32.totalorder %s88, %s89
    %p98 = scmp.eq.s32.totalorder %s15, 0
    %p99 = por %p97, %p98
    %p100 = scmp.ne.s32.totalorder %s88, %s89
    %p101 = scmp.eq.s32.totalorder %s16, 1
    %p102 = por %p100, %p101
    %p104 = scmp.ne.s32.totalorder %s89, %s103
    %p105 = scmp.eq.s32.totalorder %s16, 0
    %p106 = por %p104, %p105
    %s108 = sadd.s32 %s107, 1
    %p111 = scmp.eq.s32.totalorder %s10, 1
    %p112 = scmp.ne.s32.totalorder %s107, %s109
    %p113 = scmp.eq.s32.totalorder %s10, 0
    %p114 = por %p112, %p113
    %p115 = scmp.ne.s32.totalorder %s107, %s109
    %p116 = scmp.eq.s32.totalorder %s15, 1
    %p117 = por %p115, %p116
    %p118 = scmp.ne.s32.totalorder %s109, %s110
    %p119 = scmp.eq.s32.totalorder %s15, 0
    %p120 = por %p118, %p119
    %p121 = scmp.ne.s32.totalorder %s109, %s110
    %p122 = scmp.eq.s32.totalorder %s16, 1
    %p123 = por %p121, %p122
    %p125 = scmp.ne.s32.totalorder %s110, %s124
    %p126 = scmp.eq.s32.totalorder %s16, 0
    %p127 = por %p125, %p126
    %s128 = ssub.s32 %s17, %s29
    %s129 = ssub.s32 %s18, %s25
    %s130 = sor.u32 %s128, %s129
    %p131 = scmp.eq.s32.totalorder %s130, 0
    %s133 = sadd.s32 %s132, 1
    %s134 = scalar_select %p131, %s132, %s133
    %p137 = pneg %p131
    %p138 = scmp.eq.s32.totalorder %s10, 1
    %p139 = por %p137, %p138
    %p140 = scmp.ne.s32.totalorder %s132, %s135
    %p141 = scmp.eq.s32.totalorder %s10, 0
    %p142 = por %p140, %p141
    %p143 = scmp.ne.s32.totalorder %s132, %s135
    %p144 = scmp.eq.s32.totalorder %s15, 1
    %p145 = por %p143, %p144
    %p146 = scmp.ne.s32.totalorder %s135, %s136
    %p147 = scmp.eq.s32.totalorder %s15, 0
    %p148 = por %p146, %p147
    %p149 = scmp.ne.s32.totalorder %s135, %s136
    %p150 = scmp.eq.s32.totalorder %s16, 1
    %p151 = por %p149, %p150
    %p153 = scmp.ne.s32.totalorder %s136, %s152
    %p154 = scmp.eq.s32.totalorder %s16, 0
    %p155 = por %p153, %p154
    %p156 = scmp.le.s32.totalorder 1, %s10
    %p157 = scmp.lt.s32.totalorder %s10, 3
    %p158 = pnand %p156, %p157
    %p159 = pneg %p158
    // Predicated region
    $region9: #{bottleneck_forward.11} parent=5 // pred_check
      _
    $region10: #{bottleneck_forward.11} parent=5 // pred_check_branch
      %161 = sbr.rel (%p158) target = $region12
    $region11: #{bottleneck_forward.11} parent=5 // pred_region
      %s162 = ssub.s32 %s10, 1
      // Predicated region
      $region13: #{bottleneck_forward.11} parent=11 // pred_check
        %p163 = pneg %p99
      $region14: #{bottleneck_forward.11} parent=11 // pred_check_branch
        %165 = sbr.rel (%p163) target = $region16
      $region15: #{bottleneck_forward.11} parent=11 // pred_region
        _
      $region16: #{bottleneck_forward.11} parent=11 // pred_fallthru
        _
      // Predicated region
      $region17: #{bottleneck_forward.11} parent=11 // pred_check
        %p166 = pneg %p120
      $region18: #{bottleneck_forward.11} parent=11 // pred_check_branch
        %168 = sbr.rel (%p166) target = $region20
      $region19: #{bottleneck_forward.11} parent=11 // pred_region
        _
      $region20: #{bottleneck_forward.11} parent=11 // pred_fallthru
        _
    $region12: #{bottleneck_forward.11} parent=5 // pred_fallthru
      _
    %p169 = scmp.lt.s32.totalorder %s10, 2
    // Predicated region
    $region21: #{bottleneck_forward.11} parent=5 // pred_check
      %p170 = pneg %p169
    $region22: #{bottleneck_forward.11} parent=5 // pred_check_branch
      %172 = sbr.rel (%p170) target = $region24
    $region23: #{bottleneck_forward.11} parent=5 // pred_region
      // Predicated region
      $region25: #{bottleneck_forward.11} parent=23 // pred_check
        %p173 = pneg %p44
      $region26: #{bottleneck_forward.11} parent=23 // pred_check_branch
        %175 = sbr.rel (%p173) target = $region28
      $region27: #{bottleneck_forward.11} parent=23 // pred_region
        %p176 = scmp.lt.s32.totalorder %s17, 1
        %s177 = scalar_select %p176, %s17, 1
        %p178 = scmp.lt.s32.totalorder %s18, 0
        %s179 = scalar_select %p178, %s18, 0
        %s180 = smul.addr %s177, 2
        %s181 = sadd.s32 %s179, %s180
        %s182 = smul.addr %s181, 8
        %s183 = scalar_lea.vmem %s0, %s182
      $region28: #{bottleneck_forward.11} parent=23 // pred_fallthru
        _
      // Predicated region
      $region29: #{bottleneck_forward.11} parent=23 // pred_check
        %p184 = pneg %p72
      $region30: #{bottleneck_forward.11} parent=23 // pred_check_branch
        %186 = sbr.rel (%p184) target = $region32
      $region31: #{bottleneck_forward.11} parent=23 // pred_region
        %p187 = scmp.lt.s32.totalorder %s17, 1
        %s188 = scalar_select %p187, %s17, 1
        %p189 = scmp.lt.s32.totalorder %s18, 0
        %s190 = scalar_select %p189, %s18, 0
        %s191 = smul.addr %s188, 2
        %s192 = sadd.s32 %s190, %s191
        %s193 = smul.addr %s192, 8
        %s194 = scalar_lea.vmem %s1, %s193
      $region32: #{bottleneck_forward.11} parent=23 // pred_fallthru
        _
    $region24: #{bottleneck_forward.11} parent=5 // pred_fallthru
      _
    %p195 = scmp.le.s32.totalorder 1, %s10
    %p196 = scmp.lt.s32.totalorder %s10, 3
    %p197 = pnand %p195, %p196
    %p198 = pneg %p197
    // Predicated region
    $region33: #{bottleneck_forward.11} parent=5 // pred_check
      _
    $region34: #{bottleneck_forward.11} parent=5 // pred_check_branch
      %200 = sbr.rel (%p197) target = $region36
    $region35: #{bottleneck_forward.11} parent=5 // pred_region
      %s201 = ssub.s32 %s10, 1
      %p202 = scmp.lt.s32.totalorder %s19, 1
      %s203 = scalar_select %p202, %s19, 1
      %p204 = scmp.lt.s32.totalorder %s20, 0
      %s205 = scalar_select %p204, %s20, 0
      %s206 = smul.addr %s203, 2
      %s207 = sadd.s32 %s205, %s206
      %s208 = smul.addr %s207, 8
      %s209 = scalar_lea.vmem %s0, %s208
      %p210 = pneg %p50
      %p211 = pneg %p47
      %p212 = scmp.lt.s32.totalorder %s19, 1
      %s213 = scalar_select %p212, %s19, 1
      %p214 = scmp.lt.s32.totalorder %s20, 0
      %s215 = scalar_select %p214, %s20, 0
      %s216 = smul.addr %s213, 2
      %s217 = sadd.s32 %s215, %s216
      %s218 = smul.addr %s217, 8
      %s219 = scalar_lea.vmem %s1, %s218
      %p220 = pneg %p78
      %p221 = pneg %p75
      %p222 = pneg %p99
      %p223 = pneg %p96
      %p224 = pneg %p120
      %p225 = pneg %p117
      %p226 = pneg %p148
      %p227 = pneg %p145
      %p228 = scmp.lt.s32.totalorder %s19, 1
      %s229 = scalar_select %p228, %s19, 1
      %p230 = scmp.lt.s32.totalorder %s20, 0
      %s231 = scalar_select %p230, %s20, 0
      %s232 = smul.addr %s229, 2
      %s233 = sadd.s32 %s231, %s232
      %s234 = smul.addr %s233, 8
      %s235 = scalar_lea.vmem %s4, %s234
      %p236 = scmp.lt.s32.totalorder %s19, 1
      %s237 = scalar_select %p236, %s19, 1
      %p238 = scmp.lt.s32.totalorder %s20, 0
      %s239 = scalar_select %p238, %s20, 0
      %s240 = smul.addr %s237, 2
      %s241 = sadd.s32 %s239, %s240
      %s242 = smul.addr %s241, 8
      %s243 = scalar_lea.vmem %s0, %s242
      %p244 = scmp.lt.s32.totalorder %s19, 1
      %s245 = scalar_select %p244, %s19, 1
      %p246 = scmp.lt.s32.totalorder %s20, 0
      %s247 = scalar_select %p246, %s20, 0
      %s248 = smul.addr %s245, 2
      %s249 = sadd.s32 %s247, %s248
      %s250 = smul.addr %s249, 8
      %s251 = scalar_lea.vmem %s1, %s250
      %p252 = scmp.lt.s32.totalorder %s19, 1
      %s253 = scalar_select %p252, %s19, 1
      %p254 = scmp.lt.s32.totalorder %s20, 0
      %s255 = scalar_select %p254, %s20, 0
      %s256 = smul.addr %s253, 2
      %s257 = sadd.s32 %s255, %s256
      %s258 = smul.addr %s257, 8
      %s259 = scalar_lea.vmem %s4, %s258
      %v260 = vld [vmem:[%s243] sm:$0xff]
      %v261 = vld [vmem:[%s243 + $0x8] sm:$0xff]
      %v262 = vld [vmem:[%s2] sm:$0xff]
      %v263 = vld [vmem:[%s2 + $0x8] sm:$0xff]
      %265 = vset.pattern.permute.xlu0 0
      %266 = vperm.xlu0 %265, %v262
      %v267 = vpop.permute.xlu0 %266
      %270 = vset.pattern.permute.xlu0 0
      %271 = vperm.xlu0 %270, %v263
      %v272 = vpop.permute.xlu0 %271
      %v274 = vmul.f32 %v260, %v267
      %v275 = vmul.f32 %v261, %v272
      %v276 = vld [vmem:[%s3] sm:$0xff]
      %v277 = vld [vmem:[%s3 + $0x8] sm:$0xff]
      %279 = vset.pattern.permute.xlu0 0
      %280 = vperm.xlu0 %279, %v276
      %v281 = vpop.permute.xlu0 %280
      %284 = vset.pattern.permute.xlu0 0
      %285 = vperm.xlu0 %284, %v277
      %v286 = vpop.permute.xlu0 %285
      %v288 = vadd.f32 %v274, %v281
      %v289 = vadd.f32 %v275, %v286
      %v290 = vld [vmem:[%s251] sm:$0xff]
      %v291 = vld [vmem:[%s251 + $0x8] sm:$0xff]
      %v292 = vadd.f32 %v288, %v290
      %v293 = vadd.f32 %v289, %v291
      %v294 = vmax.f32 %v292, 0.0
      %v295 = vmax.f32 %v293, 0.0
      %296 = vst [vmem:[%s259] sm:$0xff] %v294
      %297 = vst [vmem:[%s259 + $0x8] sm:$0xff] %v295
      %p298 = scmp.lt.s32.totalorder %s19, 1
      %s299 = scalar_select %p298, %s19, 1
      %p300 = scmp.lt.s32.totalorder %s20, 0
      %s301 = scalar_select %p300, %s20, 0
      %s302 = smul.addr %s299, 2
      %s303 = sadd.s32 %s301, %s302
      %s304 = smul.addr %s303, 8
      %s305 = scalar_lea.vmem %s4, %s304
      // Predicated region
      $region37: #{bottleneck_forward.11} parent=35 // pred_check
        %p306 = pneg %p145
      $region38: #{bottleneck_forward.11} parent=35 // pred_check_branch
        %308 = sbr.rel (%p306) target = $region40
      $region39: #{bottleneck_forward.11} parent=35 // pred_region
        _
      $region40: #{bottleneck_forward.11} parent=35 // pred_fallthru
        _
    $region36: #{bottleneck_forward.11} parent=5 // pred_fallthru
      _
    %p309 = scmp.le.s32.totalorder 2, %s10
    // Predicated region
    $region41: #{bottleneck_forward.11} parent=5 // pred_check
      %p310 = pneg %p309
    $region42: #{bottleneck_forward.11} parent=5 // pred_check_branch
      %312 = sbr.rel (%p310) target = $region44
    $region43: #{bottleneck_forward.11} parent=5 // pred_region
      %s313 = ssub.s32 %s10, 2
      // Predicated region
      $region45: #{bottleneck_forward.11} parent=43 // pred_check
        %p314 = pneg %p151
      $region46: #{bottleneck_forward.11} parent=43 // pred_check_branch
        %316 = sbr.rel (%p314) target = $region48
      $region47: #{bottleneck_forward.11} parent=43 // pred_region
        %p317 = scmp.lt.s32.totalorder %s21, 1
        %s318 = scalar_select %p317, %s21, 1
        %p319 = scmp.lt.s32.totalorder %s22, 0
        %s320 = scalar_select %p319, %s22, 0
        %s321 = smul.addr %s318, 2
        %s322 = sadd.s32 %s320, %s321
        %s323 = smul.addr %s322, 8
        %s324 = scalar_lea.vmem %s4, %s323
      $region48: #{bottleneck_forward.11} parent=43 // pred_fallthru
        _
    $region44: #{bottleneck_forward.11} parent=5 // pred_fallthru
      _
  $region6: #{bottleneck_forward.11} parent=0 // loop_footer
    %s14 = sadd.s32 1, %s10
  $region7: #{bottleneck_forward.11} parent=0 // loop_footer_branch
    %9 = sbr.rel target = $region3
  $region8: #{bottleneck_forward.11} parent=0 // loop_exit
    _

</llo_original>
